<compile_context>
chip_gen: v7x
topology: tpu7x:2x2x1
jax: 0.10.0
libtpu: 0.0.40
codegen_flags: <defaults>
</compile_context>

<pallas_src>
import functools
import math

import jax
import jax.numpy as jnp
from jax.experimental import pallas as pl
from jax.experimental.pallas import tpu as pltpu


_MASK_VALUE = -1e30  # finite "−inf" for masked (padded) kv columns


def _round_up(x, m):
    return ((x + m - 1) // m) * m


def _vmem_limit_bytes():
    """Per-device VMEM budget: ~75% of physical (48 MiB v7x, 96 MiB v5e/v6e)."""
    try:
        cap = int(pltpu.get_tpu_info().vmem_capacity_bytes)
    except Exception:
        cap = 64 * 1024 * 1024
    return min((cap * 3) // 4, 100 * 1024 * 1024)


def _flash_core_attn_kernel(*refs, scale, num_heads, head_dim, has_bias,
                            kv_len, kv_padded):
    """One (batch, q-block, kv-block) grid step; all H heads per step.

    Refs (with bias):    q, k, v, bias, out, m_sc, l_sc, acc_sc
    Refs (without bias): q, k, v,       out, m_sc, l_sc, acc_sc

    Block shapes seen by the kernel:
      q_ref    : (1, tq, H*Dh)   native dtype
      k_ref    : (1, tk, H*Dh)   native dtype
      v_ref    : (1, tk, H*Dh)   native dtype
      bias_ref : (1, H, tq, tk)  (only when has_bias)
      o_ref    : (1, tq, H*Dh)   lane-dense output block
      m_sc     : (H, tq, 1)      f32 running row max
      l_sc     : (H, tq, 1)      f32 running row sum
      acc_sc   : (tq, H*Dh)      f32 lane-dense output accumulator
    """
    if has_bias:
        q_ref, k_ref, v_ref, bias_ref, o_ref, m_sc, l_sc, acc_sc = refs
    else:
        q_ref, k_ref, v_ref, o_ref, m_sc, l_sc, acc_sc = refs
        bias_ref = None

    H, Dh = num_heads, head_dim
    tq = q_ref.shape[1]
    tk = k_ref.shape[1]
    kv_idx = pl.program_id(2)

    @pl.when(kv_idx == 0)
    def _init():
        m_sc[...] = jnp.full(m_sc.shape, -jnp.inf, dtype=jnp.float32)
        l_sc[...] = jnp.zeros(l_sc.shape, dtype=jnp.float32)
        acc_sc[...] = jnp.zeros(acc_sc.shape, dtype=jnp.float32)

    # Mask for padded kv columns (only generated when S was padded up to Sk).
    if kv_padded:
        col = jax.lax.broadcasted_iota(jnp.int32, (tq, tk), 1) + kv_idx * tk
        kv_mask = col < kv_len
    else:
        kv_mask = None

    # Per-head loop (static unroll; per-head state is flushed to VMEM scratch
    # each iteration so live vreg ranges stay bounded).
    for h in range(H):
        lo = h * Dh
        # Static ref slices: only the (tq/tk, Dh) slabs are loaded.
        # Scale folded into q (tq*Dh VPU mults instead of tq*tk on the scores).
        q_h = q_ref[0, :, lo:lo + Dh] * scale          # (tq, Dh) native dtype
        k_h = k_ref[0, :, lo:lo + Dh]                  # (tk, Dh)
        v_h = v_ref[0, :, lo:lo + Dh]                  # (tk, Dh)

        # scores: last-dim contraction on both operands (MXU-native, no k.T
        # materialization), f32 accumulation.
        s = jax.lax.dot_general(
            q_h, k_h,
            dimension_numbers=(((1,), (1,)), ((), ())),
            preferred_element_type=jnp.float32)        # (tq, tk) f32
        if has_bias:
            s = s + bias_ref[0, h].astype(jnp.float32)
        if kv_mask is not None:
            s = jnp.where(kv_mask, s, _MASK_VALUE)

        # Online softmax update (f32).
        m_prev = m_sc[h]                                       # (tq, 1)
        m_new = jnp.maximum(m_prev, jnp.max(s, axis=-1, keepdims=True))
        alpha = jnp.exp(m_prev - m_new)                        # (tq, 1)
        p = jnp.exp(s - m_new)                                 # (tq, tk)
        l_sc[h] = alpha * l_sc[h] + jnp.sum(p, axis=-1, keepdims=True)

        pv = jnp.dot(p.astype(v_h.dtype), v_h,
                     preferred_element_type=jnp.float32)       # (tq, Dh) f32
        acc_sc[:, lo:lo + Dh] = alpha * acc_sc[:, lo:lo + Dh] + pv
        m_sc[h] = m_new

    @pl.when(kv_idx == pl.num_programs(2) - 1)
    def _finalize():
        if Dh % 128 == 0:
            # Per-head lane-aligned full-width stores (no concat needed).
            for h in range(H):
                lo = h * Dh
                inv = 1.0 / l_sc[h]
                o_ref[0, :, lo:lo + Dh] = (
                    acc_sc[:, lo:lo + Dh] * inv).astype(o_ref.dtype)
        else:
            # Cast each head to the output dtype BEFORE concatenating, then one
            # lane-dense store of width H*Dh.
            outs = []
            for h in range(H):
                lo = h * Dh
                inv = 1.0 / l_sc[h]
                outs.append((acc_sc[:, lo:lo + Dh] * inv).astype(o_ref.dtype))
            o_ref[0] = jnp.concatenate(outs, axis=-1)


def core_attention_full(q, k, v, attn_bias=None, *, num_heads,
                        block_q=256, block_kv=512):
    """CoreAttention.full_attention forward.

    q, k, v   : (B, S, H, Dh)   (PyTorch layout; H == num_heads)
    attn_bias : (B, H, S, S) or None
    returns   : (B, S, H*Dh)    == x.view(batch_size, s_len, -1)
    """
    B, S, H, Dh = q.shape
    assert H == num_heads
    HD = H * Dh
    scale = float(math.sqrt(Dh))          # module multiplies q by sqrt(head_dim)
    has_bias = attn_bias is not None

    # Carry the bias in the compute dtype (halves bias HBM traffic in bf16 runs).
    if has_bias and jnp.dtype(attn_bias.dtype).itemsize > jnp.dtype(q.dtype).itemsize:
        attn_bias = attn_bias.astype(q.dtype)

    # ---- tile selection ------------------------------------------------------
    item = jnp.dtype(q.dtype).itemsize
    q_mult = 8 if item >= 4 else (16 if item == 2 else 32)   # sublane packing
    tq = max(q_mult, (block_q // q_mult) * q_mult)
    tq = min(tq, _round_up(S, q_mult))

    if S < 128:
        tk = S                                   # full-extent kv block (legal)
    else:
        tk = max(128, (block_kv // 128) * 128)   # lane-dense kv tiles
        tk = min(tk, _round_up(S, 128))

    # ---- per-device VMEM budget (v7x 64 MiB vs v5e/v6e 128 MiB) --------------
    vmem_limit = _vmem_limit_bytes()
    bias_item = jnp.dtype(attn_bias.dtype).itemsize if has_bias else 0

    def _step_bytes(tq_, tk_):
        blk = 2 * tq_ * HD * item + 2 * tk_ * HD * item        # q,out + k,v
        if has_bias:
            blk += H * tq_ * tk_ * bias_item
        scratch = 2 * H * tq_ * 128 * 4 + tq_ * max(HD, 128) * 4
        return 2 * blk + scratch                               # double-buffered

    budget = (6 * vmem_limit) // 10
    if S >= 128:
        while _step_bytes(tq, tk) > budget and tk > 128:
            tk -= 128
    while _step_bytes(tq, tk) > budget and tq > 2 * q_mult:
        tq -= q_mult

    Sq = _round_up(S, tq)                 # padded q length
    Sk = _round_up(S, tk)                 # padded kv length
    kv_padded = (Sk != S)

    # ---- layout: free reshapes + (rare) zero-padding, no transposes ----------
    q2 = q.reshape(B, S, HD)
    k2 = k.reshape(B, S, HD)
    v2 = v.reshape(B, S, HD)
    if Sq > S:
        q2 = jnp.pad(q2, ((0, 0), (0, Sq - S), (0, 0)))
    if Sk > S:
        k2 = jnp.pad(k2, ((0, 0), (0, Sk - S), (0, 0)))
        v2 = jnp.pad(v2, ((0, 0), (0, Sk - S), (0, 0)))
    bias = attn_bias
    if has_bias and (Sq > S or Sk > S):
        bias = jnp.pad(bias, ((0, 0), (0, 0), (0, Sq - S), (0, Sk - S)))

    grid = (B, Sq // tq, Sk // tk)        # reduction (kv) axis last

    q_spec = pl.BlockSpec((1, tq, HD), lambda b, qi, ki: (b, qi, 0))
    kv_spec = pl.BlockSpec((1, tk, HD), lambda b, qi, ki: (b, ki, 0))
    out_spec = pl.BlockSpec((1, tq, HD), lambda b, qi, ki: (b, qi, 0))

    in_specs = [q_spec, kv_spec, kv_spec]
    inputs = [q2, k2, v2]
    if has_bias:
        in_specs.append(
            pl.BlockSpec((1, H, tq, tk), lambda b, qi, ki: (b, 0, qi, ki)))
        inputs.append(bias)

    scratch_shapes = [
        pltpu.VMEM((H, tq, 1), jnp.float32),     # running max
        pltpu.VMEM((H, tq, 1), jnp.float32),     # running sum
        pltpu.VMEM((tq, HD), jnp.float32),       # lane-dense output accumulator
    ]

    cost = pl.CostEstimate(
        flops=int(4 * B * H * Sq * Sk * Dh),                  # qk^T + pv
        transcendentals=int(B * H * Sq * Sk),                 # exp
        bytes_accessed=int((2 * B * Sq * HD + 2 * B * Sk * HD) * item
                           + (B * H * Sq * Sk * bias_item if has_bias else 0)),
    )

    kernel = functools.partial(
        _flash_core_attn_kernel,
        scale=scale, num_heads=H, head_dim=Dh, has_bias=has_bias,
        kv_len=S, kv_padded=kv_padded)

    out = pl.pallas_call(
        kernel,
        out_shape=jax.ShapeDtypeStruct((B, Sq, HD), q.dtype),
        grid_spec=pltpu.PrefetchScalarGridSpec(
            num_scalar_prefetch=0,
            grid=grid,
            in_specs=in_specs,
            out_specs=out_spec,
            scratch_shapes=scratch_shapes,
        ),
        compiler_params=pltpu.CompilerParams(
            dimension_semantics=("parallel", "parallel", "arbitrary"),
            vmem_limit_bytes=vmem_limit,
        ),
        cost_estimate=cost,
    )(*inputs)

    if Sq > S:
        out = out[:, :S, :]
    return out                                   # (B, S, H*Dh)


def _reference_full_attention(q, k, v, attn_bias, num_heads):
    B, S, H, Dh = q.shape
    scale = math.sqrt(Dh)
    qh = jnp.transpose(q, (0, 2, 1, 3)).astype(jnp.float32) * scale
    kh = jnp.transpose(k, (0, 2, 1, 3)).astype(jnp.float32)
    vh = jnp.transpose(v, (0, 2, 1, 3)).astype(jnp.float32)
    s = jnp.einsum("bhqd,bhkd->bhqk", qh, kh)
    if attn_bias is not None:
        s = s + attn_bias.astype(jnp.float32)
    p = jax.nn.softmax(s, axis=-1)
    o = jnp.einsum("bhqk,bhkd->bhqd", p, vh)
    o = jnp.transpose(o, (0, 2, 1, 3))
    return o.reshape(B, S, H * Dh).astype(q.dtype)


if __name__ == "__main__":
    # Shapes consistent with the module: hidden=32, heads=4 -> head_dim=8.
    B, HID, NH = 2, 32, 4
    DH = HID // NH
    TOL = 2e-3

    def make(S, with_bias, kbase):
        kq, kk, kv_, kb = jax.random.split(kbase, 4)
        qq = jax.random.normal(kq, (B, S, NH, DH), dtype=jnp.float32)
        kk_ = jax.random.normal(kk, (B, S, NH, DH), dtype=jnp.float32)
        vv = jax.random.normal(kv_, (B, S, NH, DH), dtype=jnp.float32)
        bb = (0.1 * jax.random.normal(kb, (B, NH, S, S), dtype=jnp.float32)
              if with_bias else None)
        return qq, kk_, vv, bb

    keys = jax.random.split(jax.random.PRNGKey(0), 3)

    # 1) Bias path, multi-block online softmax: S=256 -> tq=128, tk=128,
    #    grid (2, 2, 2), no padding.
    q, k, v, bias = make(256, True, keys[0])
    out = jax.block_until_ready(core_attention_full(
        q, k, v, bias, num_heads=NH, block_q=128, block_kv=128))
    ref = _reference_full_attention(q, k, v, bias, NH)
    assert out.shape == (B, 256, HID), out.shape
    assert jnp.allclose(out, ref, atol=TOL, rtol=TOL), "bias path mismatch"

    # 2) No-bias path (no zero-bias materialization), multi kv blocks.
    q, k, v, _ = make(256, False, keys[1])
    out = jax.block_until_ready(core_attention_full(
        q, k, v, None, num_heads=NH, block_q=64, block_kv=128))
    ref = _reference_full_attention(q, k, v, None, NH)
    assert out.shape == (B, 256, HID), out.shape
    assert jnp.allclose(out, ref, atol=TOL, rtol=TOL), "no-bias path mismatch"

    # 3) Ragged S=160: q padded to 192 (rows discarded), kv padded to 256 with
    #    in-kernel column masking -- exercises the padding/masking path.
    q, k, v, bias = make(160, True, keys[2])
    out = jax.block_until_ready(core_attention_full(
        q, k, v, bias, num_heads=NH, block_q=64, block_kv=128))
    ref = _reference_full_attention(q, k, v, bias, NH)
    assert out.shape == (B, 160, HID), out.shape
    assert jnp.allclose(out, ref, atol=TOL, rtol=TOL), "padded/masked path mismatch"

    print("KERNEL_OK")
</pallas_src>

<mosaic_0001>
module attributes {stable_mosaic.version = 11 : i64} {
  func.func @_flash_core_attn_kernel(%arg0: i32, %arg1: i32, %arg2: i32, %arg3: memref<1x128x32xf32, #tpu.memory_space<vmem>>, %arg4: memref<1x128x32xf32, #tpu.memory_space<vmem>>, %arg5: memref<1x128x32xf32, #tpu.memory_space<vmem>>, %arg6: memref<1x4x128x128xf32, #tpu.memory_space<vmem>>, %arg7: memref<1x128x32xf32, #tpu.memory_space<vmem>>, %arg8: memref<4x128x1xf32, #tpu.memory_space<vmem>>, %arg9: memref<4x128x1xf32, #tpu.memory_space<vmem>>, %arg10: memref<128x32xf32, #tpu.memory_space<vmem>>) attributes {dimension_semantics = [#tpu.dimension_semantics<parallel>, #tpu.dimension_semantics<parallel>, #tpu.dimension_semantics<arbitrary>], iteration_bounds = array<i64: 2, 2, 2>, scalar_prefetch = 0 : i64, scratch_operands = 3 : i64, tpu.core_type = #tpu.core_type<tc>, window_params = [{transform_indices = @transform_0, window_bounds = array<i64: 1, 128, 32>}, {transform_indices = @transform_1, window_bounds = array<i64: 1, 128, 32>}, {transform_indices = @transform_2, window_bounds = array<i64: 1, 128, 32>}, {transform_indices = @transform_3, window_bounds = array<i64: 1, 4, 128, 128>}, {transform_indices = @transform_4, window_bounds = array<i64: 1, 128, 32>}]} {
    %c0_i32 = arith.constant 0 : i32
    %0 = arith.cmpi eq, %arg2, %c0_i32 : i32
    %1 = arith.extui %0 : i1 to i32
    %c0_i32_0 = arith.constant 0 : i32
    %2 = arith.cmpi ne, %1, %c0_i32_0 : i32
    scf.if %2 {
      %cst_130 = arith.constant 0xFF800000 : f32
      %166 = vector.broadcast %cst_130 : f32 to vector<4x128x1xf32>
      %c0_131 = arith.constant 0 : index
      %c0_132 = arith.constant 0 : index
      %c0_133 = arith.constant 0 : index
      %167 = vector.load %arg8[%c0_131, %c0_132, %c0_133] : memref<4x128x1xf32, #tpu.memory_space<vmem>>, vector<4x128x1xf32>
      tpu.vector_store %arg8[%c0_131, %c0_132, %c0_133], %166 {strides = array<i32>} : memref<4x128x1xf32, #tpu.memory_space<vmem>>, vector<4x128x1xf32>,
      %cst_134 = arith.constant 0.000000e+00 : f32
      %168 = vector.broadcast %cst_134 : f32 to vector<4x128x1xf32>
      %c0_135 = arith.constant 0 : index
      %c0_136 = arith.constant 0 : index
      %c0_137 = arith.constant 0 : index
      %169 = vector.load %arg9[%c0_135, %c0_136, %c0_137] : memref<4x128x1xf32, #tpu.memory_space<vmem>>, vector<4x128x1xf32>
      tpu.vector_store %arg9[%c0_135, %c0_136, %c0_137], %168 {strides = array<i32>} : memref<4x128x1xf32, #tpu.memory_space<vmem>>, vector<4x128x1xf32>,
      %cst_138 = arith.constant 0.000000e+00 : f32
      %170 = vector.broadcast %cst_138 : f32 to vector<128x32xf32>
      %c0_139 = arith.constant 0 : index
      %c0_140 = arith.constant 0 : index
      %171 = vector.load %arg10[%c0_139, %c0_140] : memref<128x32xf32, #tpu.memory_space<vmem>>, vector<128x32xf32>
      tpu.vector_store %arg10[%c0_139, %c0_140], %170 {strides = array<i32>} : memref<128x32xf32, #tpu.memory_space<vmem>>, vector<128x32xf32>,
    } else {
    }
    %c0 = arith.constant 0 : index
    %c0_1 = arith.constant 0 : index
    %c0_2 = arith.constant 0 : index
    %3 = vector.load %arg3[%c0, %c0_1, %c0_2] : memref<1x128x32xf32, #tpu.memory_space<vmem>>, vector<1x128x8xf32>
    %4 = vector.shape_cast %3 : vector<1x128x8xf32> to vector<128x8xf32>
    %cst = arith.constant 2.82842708 : f32
    %5 = vector.broadcast %cst : f32 to vector<128x8xf32>
    %6 = arith.mulf %4, %5 : vector<128x8xf32>
    %c0_3 = arith.constant 0 : index
    %c0_4 = arith.constant 0 : index
    %c0_5 = arith.constant 0 : index
    %7 = vector.load %arg4[%c0_3, %c0_4, %c0_5] : memref<1x128x32xf32, #tpu.memory_space<vmem>>, vector<1x128x8xf32>
    %8 = vector.shape_cast %7 : vector<1x128x8xf32> to vector<128x8xf32>
    %c0_6 = arith.constant 0 : index
    %c0_7 = arith.constant 0 : index
    %c0_8 = arith.constant 0 : index
    %9 = vector.load %arg5[%c0_6, %c0_7, %c0_8] : memref<1x128x32xf32, #tpu.memory_space<vmem>>, vector<1x128x8xf32>
    %10 = vector.shape_cast %9 : vector<1x128x8xf32> to vector<128x8xf32>
    %cst_9 = arith.constant dense<0.000000e+00> : vector<128x128xf32>
    %11 = tpu.matmul %6, %8, %cst_9 {dimension_numbers = #tpu.dot_dimension_numbers<[1], [1], [0], [0], [0, 0, 1, 0], [], []>} : vector<128x8xf32>, vector<128x8xf32>, vector<128x128xf32> -> vector<128x128xf32>
    %c0_10 = arith.constant 0 : index
    %c0_11 = arith.constant 0 : index
    %c0_12 = arith.constant 0 : index
    %c0_13 = arith.constant 0 : index
    %12 = vector.load %arg6[%c0_10, %c0_11, %c0_12, %c0_13] : memref<1x4x128x128xf32, #tpu.memory_space<vmem>>, vector<1x1x128x128xf32>
    %13 = vector.shape_cast %12 : vector<1x1x128x128xf32> to vector<128x128xf32>
    %14 = arith.addf %11, %13 : vector<128x128xf32>
    %c0_14 = arith.constant 0 : index
    %c0_15 = arith.constant 0 : index
    %c0_16 = arith.constant 0 : index
    %15 = vector.load %arg8[%c0_14, %c0_15, %c0_16] : memref<4x128x1xf32, #tpu.memory_space<vmem>>, vector<1x128x1xf32>
    %16 = vector.shape_cast %15 : vector<1x128x1xf32> to vector<128x1xf32>
    %cst_17 = arith.constant dense<0xFF800000> : vector<128xf32>
    %17 = vector.multi_reduction <maximumf>, %14, %cst_17 [1] : vector<128x128xf32> to vector<128xf32>
    %18 = vector.shape_cast %17 : vector<128xf32> to vector<128x1xf32>
    %19 = arith.maximumf %16, %18 : vector<128x1xf32>
    %20 = arith.subf %16, %19 : vector<128x1xf32>
    %21 = math.exp %20 : vector<128x1xf32>
    %22 = vector.broadcast %19 : vector<128x1xf32> to vector<128x128xf32>
    %23 = arith.subf %14, %22 : vector<128x128xf32>
    %24 = math.exp %23 : vector<128x128xf32>
    %c0_18 = arith.constant 0 : index
    %c0_19 = arith.constant 0 : index
    %c0_20 = arith.constant 0 : index
    %25 = vector.load %arg9[%c0_18, %c0_19, %c0_20] : memref<4x128x1xf32, #tpu.memory_space<vmem>>, vector<1x128x1xf32>
    %26 = vector.shape_cast %25 : vector<1x128x1xf32> to vector<128x1xf32>
    %27 = arith.mulf %21, %26 : vector<128x1xf32>
    %cst_21 = arith.constant dense<0.000000e+00> : vector<128xf32>
    %28 = vector.multi_reduction <add>, %24, %cst_21 [1] : vector<128x128xf32> to vector<128xf32>
    %29 = vector.shape_cast %28 : vector<128xf32> to vector<128x1xf32>
    %30 = arith.addf %27, %29 : vector<128x1xf32>
    %c0_22 = arith.constant 0 : index
    %c0_23 = arith.constant 0 : index
    %c0_24 = arith.constant 0 : index
    %31 = vector.load %arg9[%c0_22, %c0_23, %c0_24] : memref<4x128x1xf32, #tpu.memory_space<vmem>>, vector<1x128x1xf32>
    %32 = vector.shape_cast %31 : vector<1x128x1xf32> to vector<128x1xf32>
    %33 = vector.shape_cast %30 : vector<128x1xf32> to vector<1x128x1xf32>
    tpu.vector_store %arg9[%c0_22, %c0_23, %c0_24], %33 {strides = array<i32>} : memref<4x128x1xf32, #tpu.memory_space<vmem>>, vector<1x128x1xf32>,
    %cst_25 = arith.constant dense<0.000000e+00> : vector<128x8xf32>
    %34 = tpu.matmul %24, %10, %cst_25 {dimension_numbers = #tpu.dot_dimension_numbers<[1], [0], [0], [1], [0, 0, 1, 1], [], []>} : vector<128x128xf32>, vector<128x8xf32>, vector<128x8xf32> -> vector<128x8xf32>
    %c0_26 = arith.constant 0 : index
    %c0_27 = arith.constant 0 : index
    %35 = vector.load %arg10[%c0_26, %c0_27] : memref<128x32xf32, #tpu.memory_space<vmem>>, vector<128x8xf32>
    %36 = vector.broadcast %21 : vector<128x1xf32> to vector<128x8xf32>
    %37 = arith.mulf %36, %35 : vector<128x8xf32>
    %38 = arith.addf %37, %34 : vector<128x8xf32>
    %c0_28 = arith.constant 0 : index
    %c0_29 = arith.constant 0 : index
    %39 = vector.load %arg10[%c0_28, %c0_29] : memref<128x32xf32, #tpu.memory_space<vmem>>, vector<128x8xf32>
    tpu.vector_store %arg10[%c0_28, %c0_29], %38 {strides = array<i32>} : memref<128x32xf32, #tpu.memory_space<vmem>>, vector<128x8xf32>,
    %c0_30 = arith.constant 0 : index
    %c0_31 = arith.constant 0 : index
    %c0_32 = arith.constant 0 : index
    %40 = vector.load %arg8[%c0_30, %c0_31, %c0_32] : memref<4x128x1xf32, #tpu.memory_space<vmem>>, vector<1x128x1xf32>
    %41 = vector.shape_cast %40 : vector<1x128x1xf32> to vector<128x1xf32>
    %42 = vector.shape_cast %19 : vector<128x1xf32> to vector<1x128x1xf32>
    tpu.vector_store %arg8[%c0_30, %c0_31, %c0_32], %42 {strides = array<i32>} : memref<4x128x1xf32, #tpu.memory_space<vmem>>, vector<1x128x1xf32>,
    %c0_33 = arith.constant 0 : index
    %c0_34 = arith.constant 0 : index
    %c8 = arith.constant 8 : index
    %43 = vector.load %arg3[%c0_33, %c0_34, %c8] : memref<1x128x32xf32, #tpu.memory_space<vmem>>, vector<1x128x8xf32>
    %44 = vector.shape_cast %43 : vector<1x128x8xf32> to vector<128x8xf32>
    %cst_35 = arith.constant 2.82842708 : f32
    %45 = vector.broadcast %cst_35 : f32 to vector<128x8xf32>
    %46 = arith.mulf %44, %45 : vector<128x8xf32>
    %c0_36 = arith.constant 0 : index
    %c0_37 = arith.constant 0 : index
    %c8_38 = arith.constant 8 : index
    %47 = vector.load %arg4[%c0_36, %c0_37, %c8_38] : memref<1x128x32xf32, #tpu.memory_space<vmem>>, vector<1x128x8xf32>
    %48 = vector.shape_cast %47 : vector<1x128x8xf32> to vector<128x8xf32>
    %c0_39 = arith.constant 0 : index
    %c0_40 = arith.constant 0 : index
    %c8_41 = arith.constant 8 : index
    %49 = vector.load %arg5[%c0_39, %c0_40, %c8_41] : memref<1x128x32xf32, #tpu.memory_space<vmem>>, vector<1x128x8xf32>
    %50 = vector.shape_cast %49 : vector<1x128x8xf32> to vector<128x8xf32>
    %cst_42 = arith.constant dense<0.000000e+00> : vector<128x128xf32>
    %51 = tpu.matmul %46, %48, %cst_42 {dimension_numbers = #tpu.dot_dimension_numbers<[1], [1], [0], [0], [0, 0, 1, 0], [], []>} : vector<128x8xf32>, vector<128x8xf32>, vector<128x128xf32> -> vector<128x128xf32>
    %c0_43 = arith.constant 0 : index
    %c1 = arith.constant 1 : index
    %c0_44 = arith.constant 0 : index
    %c0_45 = arith.constant 0 : index
    %52 = vector.load %arg6[%c0_43, %c1, %c0_44, %c0_45] : memref<1x4x128x128xf32, #tpu.memory_space<vmem>>, vector<1x1x128x128xf32>
    %53 = vector.shape_cast %52 : vector<1x1x128x128xf32> to vector<128x128xf32>
    %54 = arith.addf %51, %53 : vector<128x128xf32>
    %c1_46 = arith.constant 1 : index
    %c0_47 = arith.constant 0 : index
    %c0_48 = arith.constant 0 : index
    %55 = vector.load %arg8[%c1_46, %c0_47, %c0_48] : memref<4x128x1xf32, #tpu.memory_space<vmem>>, vector<1x128x1xf32>
    %56 = vector.shape_cast %55 : vector<1x128x1xf32> to vector<128x1xf32>
    %cst_49 = arith.constant dense<0xFF800000> : vector<128xf32>
    %57 = vector.multi_reduction <maximumf>, %54, %cst_49 [1] : vector<128x128xf32> to vector<128xf32>
    %58 = vector.shape_cast %57 : vector<128xf32> to vector<128x1xf32>
    %59 = arith.maximumf %56, %58 : vector<128x1xf32>
    %60 = arith.subf %56, %59 : vector<128x1xf32>
    %61 = math.exp %60 : vector<128x1xf32>
    %62 = vector.broadcast %59 : vector<128x1xf32> to vector<128x128xf32>
    %63 = arith.subf %54, %62 : vector<128x128xf32>
    %64 = math.exp %63 : vector<128x128xf32>
    %c1_50 = arith.constant 1 : index
    %c0_51 = arith.constant 0 : index
    %c0_52 = arith.constant 0 : index
    %65 = vector.load %arg9[%c1_50, %c0_51, %c0_52] : memref<4x128x1xf32, #tpu.memory_space<vmem>>, vector<1x128x1xf32>
    %66 = vector.shape_cast %65 : vector<1x128x1xf32> to vector<128x1xf32>
    %67 = arith.mulf %61, %66 : vector<128x1xf32>
    %cst_53 = arith.constant dense<0.000000e+00> : vector<128xf32>
    %68 = vector.multi_reduction <add>, %64, %cst_53 [1] : vector<128x128xf32> to vector<128xf32>
    %69 = vector.shape_cast %68 : vector<128xf32> to vector<128x1xf32>
    %70 = arith.addf %67, %69 : vector<128x1xf32>
    %c1_54 = arith.constant 1 : index
    %c0_55 = arith.constant 0 : index
    %c0_56 = arith.constant 0 : index
    %71 = vector.load %arg9[%c1_54, %c0_55, %c0_56] : memref<4x128x1xf32, #tpu.memory_space<vmem>>, vector<1x128x1xf32>
    %72 = vector.shape_cast %71 : vector<1x128x1xf32> to vector<128x1xf32>
    %73 = vector.shape_cast %70 : vector<128x1xf32> to vector<1x128x1xf32>
    tpu.vector_store %arg9[%c1_54, %c0_55, %c0_56], %73 {strides = array<i32>} : memref<4x128x1xf32, #tpu.memory_space<vmem>>, vector<1x128x1xf32>,
    %cst_57 = arith.constant dense<0.000000e+00> : vector<128x8xf32>
    %74 = tpu.matmul %64, %50, %cst_57 {dimension_numbers = #tpu.dot_dimension_numbers<[1], [0], [0], [1], [0, 0, 1, 1], [], []>} : vector<128x128xf32>, vector<128x8xf32>, vector<128x8xf32> -> vector<128x8xf32>
    %c0_58 = arith.constant 0 : index
    %c8_59 = arith.constant 8 : index
    %75 = vector.load %arg10[%c0_58, %c8_59] : memref<128x32xf32, #tpu.memory_space<vmem>>, vector<128x8xf32>
    %76 = vector.broadcast %61 : vector<128x1xf32> to vector<128x8xf32>
    %77 = arith.mulf %76, %75 : vector<128x8xf32>
    %78 = arith.addf %77, %74 : vector<128x8xf32>
    %c0_60 = arith.constant 0 : index
    %c8_61 = arith.constant 8 : index
    %79 = vector.load %arg10[%c0_60, %c8_61] : memref<128x32xf32, #tpu.memory_space<vmem>>, vector<128x8xf32>
    tpu.vector_store %arg10[%c0_60, %c8_61], %78 {strides = array<i32>} : memref<128x32xf32, #tpu.memory_space<vmem>>, vector<128x8xf32>,
    %c1_62 = arith.constant 1 : index
    %c0_63 = arith.constant 0 : index
    %c0_64 = arith.constant 0 : index
    %80 = vector.load %arg8[%c1_62, %c0_63, %c0_64] : memref<4x128x1xf32, #tpu.memory_space<vmem>>, vector<1x128x1xf32>
    %81 = vector.shape_cast %80 : vector<1x128x1xf32> to vector<128x1xf32>
    %82 = vector.shape_cast %59 : vector<128x1xf32> to vector<1x128x1xf32>
    tpu.vector_store %arg8[%c1_62, %c0_63, %c0_64], %82 {strides = array<i32>} : memref<4x128x1xf32, #tpu.memory_space<vmem>>, vector<1x128x1xf32>,
    %c0_65 = arith.constant 0 : index
    %c0_66 = arith.constant 0 : index
    %c16 = arith.constant 16 : index
    %83 = vector.load %arg3[%c0_65, %c0_66, %c16] : memref<1x128x32xf32, #tpu.memory_space<vmem>>, vector<1x128x8xf32>
    %84 = vector.shape_cast %83 : vector<1x128x8xf32> to vector<128x8xf32>
    %cst_67 = arith.constant 2.82842708 : f32
    %85 = vector.broadcast %cst_67 : f32 to vector<128x8xf32>
    %86 = arith.mulf %84, %85 : vector<128x8xf32>
    %c0_68 = arith.constant 0 : index
    %c0_69 = arith.constant 0 : index
    %c16_70 = arith.constant 16 : index
    %87 = vector.load %arg4[%c0_68, %c0_69, %c16_70] : memref<1x128x32xf32, #tpu.memory_space<vmem>>, vector<1x128x8xf32>
    %88 = vector.shape_cast %87 : vector<1x128x8xf32> to vector<128x8xf32>
    %c0_71 = arith.constant 0 : index
    %c0_72 = arith.constant 0 : index
    %c16_73 = arith.constant 16 : index
    %89 = vector.load %arg5[%c0_71, %c0_72, %c16_73] : memref<1x128x32xf32, #tpu.memory_space<vmem>>, vector<1x128x8xf32>
    %90 = vector.shape_cast %89 : vector<1x128x8xf32> to vector<128x8xf32>
    %cst_74 = arith.constant dense<0.000000e+00> : vector<128x128xf32>
    %91 = tpu.matmul %86, %88, %cst_74 {dimension_numbers = #tpu.dot_dimension_numbers<[1], [1], [0], [0], [0, 0, 1, 0], [], []>} : vector<128x8xf32>, vector<128x8xf32>, vector<128x128xf32> -> vector<128x128xf32>
    %c0_75 = arith.constant 0 : index
    %c2 = arith.constant 2 : index
    %c0_76 = arith.constant 0 : index
    %c0_77 = arith.constant 0 : index
    %92 = vector.load %arg6[%c0_75, %c2, %c0_76, %c0_77] : memref<1x4x128x128xf32, #tpu.memory_space<vmem>>, vector<1x1x128x128xf32>
    %93 = vector.shape_cast %92 : vector<1x1x128x128xf32> to vector<128x128xf32>
    %94 = arith.addf %91, %93 : vector<128x128xf32>
    %c2_78 = arith.constant 2 : index
    %c0_79 = arith.constant 0 : index
    %c0_80 = arith.constant 0 : index
    %95 = vector.load %arg8[%c2_78, %c0_79, %c0_80] : memref<4x128x1xf32, #tpu.memory_space<vmem>>, vector<1x128x1xf32>
    %96 = vector.shape_cast %95 : vector<1x128x1xf32> to vector<128x1xf32>
    %cst_81 = arith.constant dense<0xFF800000> : vector<128xf32>
    %97 = vector.multi_reduction <maximumf>, %94, %cst_81 [1] : vector<128x128xf32> to vector<128xf32>
    %98 = vector.shape_cast %97 : vector<128xf32> to vector<128x1xf32>
    %99 = arith.maximumf %96, %98 : vector<128x1xf32>
    %100 = arith.subf %96, %99 : vector<128x1xf32>
    %101 = math.exp %100 : vector<128x1xf32>
    %102 = vector.broadcast %99 : vector<128x1xf32> to vector<128x128xf32>
    %103 = arith.subf %94, %102 : vector<128x128xf32>
    %104 = math.exp %103 : vector<128x128xf32>
    %c2_82 = arith.constant 2 : index
    %c0_83 = arith.constant 0 : index
    %c0_84 = arith.constant 0 : index
    %105 = vector.load %arg9[%c2_82, %c0_83, %c0_84] : memref<4x128x1xf32, #tpu.memory_space<vmem>>, vector<1x128x1xf32>
    %106 = vector.shape_cast %105 : vector<1x128x1xf32> to vector<128x1xf32>
    %107 = arith.mulf %101, %106 : vector<128x1xf32>
    %cst_85 = arith.constant dense<0.000000e+00> : vector<128xf32>
    %108 = vector.multi_reduction <add>, %104, %cst_85 [1] : vector<128x128xf32> to vector<128xf32>
    %109 = vector.shape_cast %108 : vector<128xf32> to vector<128x1xf32>
    %110 = arith.addf %107, %109 : vector<128x1xf32>
    %c2_86 = arith.constant 2 : index
    %c0_87 = arith.constant 0 : index
    %c0_88 = arith.constant 0 : index
    %111 = vector.load %arg9[%c2_86, %c0_87, %c0_88] : memref<4x128x1xf32, #tpu.memory_space<vmem>>, vector<1x128x1xf32>
    %112 = vector.shape_cast %111 : vector<1x128x1xf32> to vector<128x1xf32>
    %113 = vector.shape_cast %110 : vector<128x1xf32> to vector<1x128x1xf32>
    tpu.vector_store %arg9[%c2_86, %c0_87, %c0_88], %113 {strides = array<i32>} : memref<4x128x1xf32, #tpu.memory_space<vmem>>, vector<1x128x1xf32>,
    %cst_89 = arith.constant dense<0.000000e+00> : vector<128x8xf32>
    %114 = tpu.matmul %104, %90, %cst_89 {dimension_numbers = #tpu.dot_dimension_numbers<[1], [0], [0], [1], [0, 0, 1, 1], [], []>} : vector<128x128xf32>, vector<128x8xf32>, vector<128x8xf32> -> vector<128x8xf32>
    %c0_90 = arith.constant 0 : index
    %c16_91 = arith.constant 16 : index
    %115 = vector.load %arg10[%c0_90, %c16_91] : memref<128x32xf32, #tpu.memory_space<vmem>>, vector<128x8xf32>
    %116 = vector.broadcast %101 : vector<128x1xf32> to vector<128x8xf32>
    %117 = arith.mulf %116, %115 : vector<128x8xf32>
    %118 = arith.addf %117, %114 : vector<128x8xf32>
    %c0_92 = arith.constant 0 : index
    %c16_93 = arith.constant 16 : index
    %119 = vector.load %arg10[%c0_92, %c16_93] : memref<128x32xf32, #tpu.memory_space<vmem>>, vector<128x8xf32>
    tpu.vector_store %arg10[%c0_92, %c16_93], %118 {strides = array<i32>} : memref<128x32xf32, #tpu.memory_space<vmem>>, vector<128x8xf32>,
    %c2_94 = arith.constant 2 : index
    %c0_95 = arith.constant 0 : index
    %c0_96 = arith.constant 0 : index
    %120 = vector.load %arg8[%c2_94, %c0_95, %c0_96] : memref<4x128x1xf32, #tpu.memory_space<vmem>>, vector<1x128x1xf32>
    %121 = vector.shape_cast %120 : vector<1x128x1xf32> to vector<128x1xf32>
    %122 = vector.shape_cast %99 : vector<128x1xf32> to vector<1x128x1xf32>
    tpu.vector_store %arg8[%c2_94, %c0_95, %c0_96], %122 {strides = array<i32>} : memref<4x128x1xf32, #tpu.memory_space<vmem>>, vector<1x128x1xf32>,
    %c0_97 = arith.constant 0 : index
    %c0_98 = arith.constant 0 : index
    %c24 = arith.constant 24 : index
    %123 = vector.load %arg3[%c0_97, %c0_98, %c24] : memref<1x128x32xf32, #tpu.memory_space<vmem>>, vector<1x128x8xf32>
    %124 = vector.shape_cast %123 : vector<1x128x8xf32> to vector<128x8xf32>
    %cst_99 = arith.constant 2.82842708 : f32
    %125 = vector.broadcast %cst_99 : f32 to vector<128x8xf32>
    %126 = arith.mulf %124, %125 : vector<128x8xf32>
    %c0_100 = arith.constant 0 : index
    %c0_101 = arith.constant 0 : index
    %c24_102 = arith.constant 24 : index
    %127 = vector.load %arg4[%c0_100, %c0_101, %c24_102] : memref<1x128x32xf32, #tpu.memory_space<vmem>>, vector<1x128x8xf32>
    %128 = vector.shape_cast %127 : vector<1x128x8xf32> to vector<128x8xf32>
    %c0_103 = arith.constant 0 : index
    %c0_104 = arith.constant 0 : index
    %c24_105 = arith.constant 24 : index
    %129 = vector.load %arg5[%c0_103, %c0_104, %c24_105] : memref<1x128x32xf32, #tpu.memory_space<vmem>>, vector<1x128x8xf32>
    %130 = vector.shape_cast %129 : vector<1x128x8xf32> to vector<128x8xf32>
    %cst_106 = arith.constant dense<0.000000e+00> : vector<128x128xf32>
    %131 = tpu.matmul %126, %128, %cst_106 {dimension_numbers = #tpu.dot_dimension_numbers<[1], [1], [0], [0], [0, 0, 1, 0], [], []>} : vector<128x8xf32>, vector<128x8xf32>, vector<128x128xf32> -> vector<128x128xf32>
    %c0_107 = arith.constant 0 : index
    %c3 = arith.constant 3 : index
    %c0_108 = arith.constant 0 : index
    %c0_109 = arith.constant 0 : index
    %132 = vector.load %arg6[%c0_107, %c3, %c0_108, %c0_109] : memref<1x4x128x128xf32, #tpu.memory_space<vmem>>, vector<1x1x128x128xf32>
    %133 = vector.shape_cast %132 : vector<1x1x128x128xf32> to vector<128x128xf32>
    %134 = arith.addf %131, %133 : vector<128x128xf32>
    %c3_110 = arith.constant 3 : index
    %c0_111 = arith.constant 0 : index
    %c0_112 = arith.constant 0 : index
    %135 = vector.load %arg8[%c3_110, %c0_111, %c0_112] : memref<4x128x1xf32, #tpu.memory_space<vmem>>, vector<1x128x1xf32>
    %136 = vector.shape_cast %135 : vector<1x128x1xf32> to vector<128x1xf32>
    %cst_113 = arith.constant dense<0xFF800000> : vector<128xf32>
    %137 = vector.multi_reduction <maximumf>, %134, %cst_113 [1] : vector<128x128xf32> to vector<128xf32>
    %138 = vector.shape_cast %137 : vector<128xf32> to vector<128x1xf32>
    %139 = arith.maximumf %136, %138 : vector<128x1xf32>
    %140 = arith.subf %136, %139 : vector<128x1xf32>
    %141 = math.exp %140 : vector<128x1xf32>
    %142 = vector.broadcast %139 : vector<128x1xf32> to vector<128x128xf32>
    %143 = arith.subf %134, %142 : vector<128x128xf32>
    %144 = math.exp %143 : vector<128x128xf32>
    %c3_114 = arith.constant 3 : index
    %c0_115 = arith.constant 0 : index
    %c0_116 = arith.constant 0 : index
    %145 = vector.load %arg9[%c3_114, %c0_115, %c0_116] : memref<4x128x1xf32, #tpu.memory_space<vmem>>, vector<1x128x1xf32>
    %146 = vector.shape_cast %145 : vector<1x128x1xf32> to vector<128x1xf32>
    %147 = arith.mulf %141, %146 : vector<128x1xf32>
    %cst_117 = arith.constant dense<0.000000e+00> : vector<128xf32>
    %148 = vector.multi_reduction <add>, %144, %cst_117 [1] : vector<128x128xf32> to vector<128xf32>
    %149 = vector.shape_cast %148 : vector<128xf32> to vector<128x1xf32>
    %150 = arith.addf %147, %149 : vector<128x1xf32>
    %c3_118 = arith.constant 3 : index
    %c0_119 = arith.constant 0 : index
    %c0_120 = arith.constant 0 : index
    %151 = vector.load %arg9[%c3_118, %c0_119, %c0_120] : memref<4x128x1xf32, #tpu.memory_space<vmem>>, vector<1x128x1xf32>
    %152 = vector.shape_cast %151 : vector<1x128x1xf32> to vector<128x1xf32>
    %153 = vector.shape_cast %150 : vector<128x1xf32> to vector<1x128x1xf32>
    tpu.vector_store %arg9[%c3_118, %c0_119, %c0_120], %153 {strides = array<i32>} : memref<4x128x1xf32, #tpu.memory_space<vmem>>, vector<1x128x1xf32>,
    %cst_121 = arith.constant dense<0.000000e+00> : vector<128x8xf32>
    %154 = tpu.matmul %144, %130, %cst_121 {dimension_numbers = #tpu.dot_dimension_numbers<[1], [0], [0], [1], [0, 0, 1, 1], [], []>} : vector<128x128xf32>, vector<128x8xf32>, vector<128x8xf32> -> vector<128x8xf32>
    %c0_122 = arith.constant 0 : index
    %c24_123 = arith.constant 24 : index
    %155 = vector.load %arg10[%c0_122, %c24_123] : memref<128x32xf32, #tpu.memory_space<vmem>>, vector<128x8xf32>
    %156 = vector.broadcast %141 : vector<128x1xf32> to vector<128x8xf32>
    %157 = arith.mulf %156, %155 : vector<128x8xf32>
    %158 = arith.addf %157, %154 : vector<128x8xf32>
    %c0_124 = arith.constant 0 : index
    %c24_125 = arith.constant 24 : index
    %159 = vector.load %arg10[%c0_124, %c24_125] : memref<128x32xf32, #tpu.memory_space<vmem>>, vector<128x8xf32>
    tpu.vector_store %arg10[%c0_124, %c24_125], %158 {strides = array<i32>} : memref<128x32xf32, #tpu.memory_space<vmem>>, vector<128x8xf32>,
    %c3_126 = arith.constant 3 : index
    %c0_127 = arith.constant 0 : index
    %c0_128 = arith.constant 0 : index
    %160 = vector.load %arg8[%c3_126, %c0_127, %c0_128] : memref<4x128x1xf32, #tpu.memory_space<vmem>>, vector<1x128x1xf32>
    %161 = vector.shape_cast %160 : vector<1x128x1xf32> to vector<128x1xf32>
    %162 = vector.shape_cast %139 : vector<128x1xf32> to vector<1x128x1xf32>
    tpu.vector_store %arg8[%c3_126, %c0_127, %c0_128], %162 {strides = array<i32>} : memref<4x128x1xf32, #tpu.memory_space<vmem>>, vector<1x128x1xf32>,
    %c1_i32 = arith.constant 1 : i32
    %163 = arith.cmpi eq, %arg2, %c1_i32 : i32
    %164 = arith.extui %163 : i1 to i32
    %c0_i32_129 = arith.constant 0 : i32
    %165 = arith.cmpi ne, %164, %c0_i32_129 : i32
    scf.if %165 {
      %c0_130 = arith.constant 0 : index
      %c0_131 = arith.constant 0 : index
      %c0_132 = arith.constant 0 : index
      %166 = vector.load %arg9[%c0_130, %c0_131, %c0_132] : memref<4x128x1xf32, #tpu.memory_space<vmem>>, vector<1x128x1xf32>
      %167 = vector.shape_cast %166 : vector<1x128x1xf32> to vector<128x1xf32>
      %cst_133 = arith.constant 1.000000e+00 : f32
      %168 = vector.broadcast %cst_133 : f32 to vector<128x1xf32>
      %169 = arith.divf %168, %167 : vector<128x1xf32>
      %c0_134 = arith.constant 0 : index
      %c0_135 = arith.constant 0 : index
      %170 = vector.load %arg10[%c0_134, %c0_135] : memref<128x32xf32, #tpu.memory_space<vmem>>, vector<128x8xf32>
      %171 = vector.broadcast %169 : vector<128x1xf32> to vector<128x8xf32>
      %172 = arith.mulf %170, %171 : vector<128x8xf32>
      %c1_136 = arith.constant 1 : index
      %c0_137 = arith.constant 0 : index
      %c0_138 = arith.constant 0 : index
      %173 = vector.load %arg9[%c1_136, %c0_137, %c0_138] : memref<4x128x1xf32, #tpu.memory_space<vmem>>, vector<1x128x1xf32>
      %174 = vector.shape_cast %173 : vector<1x128x1xf32> to vector<128x1xf32>
      %cst_139 = arith.constant 1.000000e+00 : f32
      %175 = vector.broadcast %cst_139 : f32 to vector<128x1xf32>
      %176 = arith.divf %175, %174 : vector<128x1xf32>
      %c0_140 = arith.constant 0 : index
      %c8_141 = arith.constant 8 : index
      %177 = vector.load %arg10[%c0_140, %c8_141] : memref<128x32xf32, #tpu.memory_space<vmem>>, vector<128x8xf32>
      %178 = vector.broadcast %176 : vector<128x1xf32> to vector<128x8xf32>
      %179 = arith.mulf %177, %178 : vector<128x8xf32>
      %c2_142 = arith.constant 2 : index
      %c0_143 = arith.constant 0 : index
      %c0_144 = arith.constant 0 : index
      %180 = vector.load %arg9[%c2_142, %c0_143, %c0_144] : memref<4x128x1xf32, #tpu.memory_space<vmem>>, vector<1x128x1xf32>
      %181 = vector.shape_cast %180 : vector<1x128x1xf32> to vector<128x1xf32>
      %cst_145 = arith.constant 1.000000e+00 : f32
      %182 = vector.broadcast %cst_145 : f32 to vector<128x1xf32>
      %183 = arith.divf %182, %181 : vector<128x1xf32>
      %c0_146 = arith.constant 0 : index
      %c16_147 = arith.constant 16 : index
      %184 = vector.load %arg10[%c0_146, %c16_147] : memref<128x32xf32, #tpu.memory_space<vmem>>, vector<128x8xf32>
      %185 = vector.broadcast %183 : vector<128x1xf32> to vector<128x8xf32>
      %186 = arith.mulf %184, %185 : vector<128x8xf32>
      %c3_148 = arith.constant 3 : index
      %c0_149 = arith.constant 0 : index
      %c0_150 = arith.constant 0 : index
      %187 = vector.load %arg9[%c3_148, %c0_149, %c0_150] : memref<4x128x1xf32, #tpu.memory_space<vmem>>, vector<1x128x1xf32>
      %188 = vector.shape_cast %187 : vector<1x128x1xf32> to vector<128x1xf32>
      %cst_151 = arith.constant 1.000000e+00 : f32
      %189 = vector.broadcast %cst_151 : f32 to vector<128x1xf32>
      %190 = arith.divf %189, %188 : vector<128x1xf32>
      %c0_152 = arith.constant 0 : index
      %c24_153 = arith.constant 24 : index
      %191 = vector.load %arg10[%c0_152, %c24_153] : memref<128x32xf32, #tpu.memory_space<vmem>>, vector<128x8xf32>
      %192 = vector.broadcast %190 : vector<128x1xf32> to vector<128x8xf32>
      %193 = arith.mulf %191, %192 : vector<128x8xf32>
      %194 = tpu.concatenate %172, %179, %186, %193 in 1 : vector<128x8xf32>, vector<128x8xf32>, vector<128x8xf32>, vector<128x8xf32> -> vector<128x32xf32>
      %c0_154 = arith.constant 0 : index
      %c0_155 = arith.constant 0 : index
      %c0_156 = arith.constant 0 : index
      %195 = vector.load %arg7[%c0_154, %c0_155, %c0_156] : memref<1x128x32xf32, #tpu.memory_space<vmem>>, vector<1x128x32xf32>
      %196 = vector.shape_cast %195 : vector<1x128x32xf32> to vector<128x32xf32>
      %197 = vector.shape_cast %194 : vector<128x32xf32> to vector<1x128x32xf32>
      tpu.vector_store %arg7[%c0_154, %c0_155, %c0_156], %197 {strides = array<i32>} : memref<1x128x32xf32, #tpu.memory_space<vmem>>, vector<1x128x32xf32>,
    } else {
    }
    return
  }
  func.func @transform_0(%arg0: i32, %arg1: i32, %arg2: i32) -> (i32, i32, i32) {
    %c0_i32 = arith.constant 0 : i32
    %c0_i32_0 = arith.constant 0 : i32
    return %arg0, %arg1, %c0_i32 : i32, i32, i32
  }
  func.func @transform_1(%arg0: i32, %arg1: i32, %arg2: i32) -> (i32, i32, i32) {
    %c0_i32 = arith.constant 0 : i32
    %c0_i32_0 = arith.constant 0 : i32
    return %arg0, %arg2, %c0_i32 : i32, i32, i32
  }
  func.func @transform_2(%arg0: i32, %arg1: i32, %arg2: i32) -> (i32, i32, i32) {
    %c0_i32 = arith.constant 0 : i32
    %c0_i32_0 = arith.constant 0 : i32
    return %arg0, %arg2, %c0_i32 : i32, i32, i32
  }
  func.func @transform_3(%arg0: i32, %arg1: i32, %arg2: i32) -> (i32, i32, i32, i32) {
    %c0_i32 = arith.constant 0 : i32
    %c0_i32_0 = arith.constant 0 : i32
    return %arg0, %c0_i32, %arg1, %arg2 : i32, i32, i32, i32
  }
  func.func @transform_4(%arg0: i32, %arg1: i32, %arg2: i32) -> (i32, i32, i32) {
    %c0_i32 = arith.constant 0 : i32
    %c0_i32_0 = arith.constant 0 : i32
    return %arg0, %arg1, %c0_i32 : i32, i32, i32
  }
}

</mosaic_0001>

<llo_original>
// kernel: tpu_custom_call.1
$region0: #{tpu_custom_call.1}
  #allocation0 [shape = 'u32[]', space=smem, size = 0x4, offset = 0x4, fixed_abs, tag = 'smem constant byte address 0x4 - core index']
  #allocation1 [shape = 'u32[144,128]{1,0:T(1,128)}', space=vmem, size = 0x12000, scoped, tag = 'internal scratch']
  #allocation2 [shape = 'f32[4,128,1]{2,1,0:T(8,128)}', space=vmem, size = 0x40000, scoped, tag = 'scratch operand']
  #allocation3 [shape = 'f32[4,128,1]{2,1,0:T(8,128)}', space=vmem, size = 0x40000, scoped, tag = 'scratch operand']
  #allocation4 [shape = 'f32[128,32]{1,0:T(8,128)}', space=vmem, size = 0x10000, scoped, tag = 'scratch operand']
  #allocation7 [shape = 's32[]', space=sflag, size = 0x4, offset = 0, fixed_abs, tag = 'sflag constant byte address 0x0 - dummy sync flag']
  %s0 = inlined_call_operand.vmem [shape: f32[2,256,32], index: 0, kind: input, shape index: {}]
  %s1 = inlined_call_operand.vmem [shape: f32[2,256,32], index: 1, kind: input, shape index: {}]
  %s2 = inlined_call_operand.vmem [shape: f32[2,256,32], index: 2, kind: input, shape index: {}]
  %s3 = inlined_call_operand.hbm [shape: f32[2,4,256,256], index: 3, kind: input, shape index: {}]
  %s4 = inlined_call_operand.vmem [shape: f32[2,256,32], index: 4, kind: output, shape index: {}]
  %s5 = sld [smem:[#allocation0]]
  $region61: #{tpu_custom_call.1} parent=0
    _
  %s7 = ssub.s32 1, %s5
  %s8 = scalar_select 0, %s7, %s5
  $region1: #{tpu_custom_call.1} parent=0
    #allocation5 [shape = 'u8[524288]{0}', space=vmem, size = 0x80000, scoped, tag = 'input window, operand 3']
    #allocation6 [shape = 's32[2]{0}', space=sflag, size = 0x8, scoped, tag = 'scoped memory for tpu_custom_call.1']
    %9 = vsyncpa [#allocation6], 0
    %s10 = scalar_lea.sflag [#allocation6], 1
    %11 = vsyncpa %s10, 0
    loop: start=0, step=1, limit=10
    $region2: #{tpu_custom_call.1} parent=1 // loop_pre_header
      _
    $region3: #{tpu_custom_call.1} parent=1 // loop_header
      %s13 = sphi 0, %s17
      %p14 = scmp.ge.s32.totalorder %s13, 10
      %s20 = sphi 0, %s39
      %s21 = sphi 0, %s35
      %s22 = sphi 0, %s31
      %s23 = sphi 0, %s20
      %s24 = sphi 0, %s21
      %s25 = sphi 0, %s22
      %s26 = sphi 0, %s23
      %s27 = sphi 0, %s24
      %s28 = sphi 0, %s25
      %s44 = sphi 0, %s46
      %s47 = sphi 0, %s44
      %s48 = sphi 0, %s47
      %s64 = sphi 0, %s48
      %s72 = sphi 0, %s74
      %s75 = sphi 0, %s72
      %s76 = sphi 0, %s75
      %s92 = sphi 0, %s76
      %s100 = sphi 0, %s102
      %s103 = sphi 0, %s100
      %s104 = sphi 0, %s103
      %s120 = sphi 0, %s104
      %s130 = sphi 0, %s132
      %s133 = sphi 0, %s130
      %s134 = sphi 0, %s133
      %s150 = sphi 0, %s134
      %s158 = sphi 0, %s160
      %s161 = sphi 0, %s158
      %s162 = sphi 0, %s161
      %s178 = sphi 0, %s162
    $region4: #{tpu_custom_call.1} parent=1 // loop_header_branch
      %16 = sbr.rel (%p14) target = $region8
    $region5: #{tpu_custom_call.1} parent=1 // loop_body
      %s18 = ssub.s32 %s13, 1
      %s19 = ssub.s32 %s13, 2
      %s29 = sadd.s32 1, %s22
      %p30 = scmp.ge.s32.totalorder %s29, 2
      %s31 = scalar_select %p30, 0, %s29
      %s32 = sadd.s32 1, %s21
      %s33 = scalar_select %p30, %s32, %s21
      %p34 = scmp.ge.s32.totalorder %s33, 2
      %s35 = scalar_select %p34, 0, %s33
      %s36 = sadd.s32 1, %s20
      %s37 = scalar_select %p34, %s36, %s20
      %p38 = scmp.ge.s32.totalorder %s37, 2
      %s39 = scalar_select %p38, 0, %s37
      %s40 = ssub.s32 %s20, %s39
      %s41 = ssub.s32 %s21, %s35
      %s42 = sor.u32 %s40, %s41
      %p43 = scmp.eq.s32.totalorder %s42, 0
      %s45 = sadd.s32 %s44, 1
      %s46 = scalar_select %p43, %s44, %s45
      %p49 = pneg %p43
      %p50 = scmp.eq.s32.totalorder %s13, 7
      %p51 = por %p49, %p50
      %p52 = scmp.ne.s32.totalorder %s44, %s47
      %p53 = scmp.eq.s32.totalorder %s13, 0
      %p54 = por %p52, %p53
      %p55 = scmp.ne.s32.totalorder %s44, %s47
      %p56 = scmp.eq.s32.totalorder %s18, 7
      %p57 = por %p55, %p56
      %p58 = scmp.ne.s32.totalorder %s47, %s48
      %p59 = scmp.eq.s32.totalorder %s18, 0
      %p60 = por %p58, %p59
      %p61 = scmp.ne.s32.totalorder %s47, %s48
      %p62 = scmp.eq.s32.totalorder %s19, 7
      %p63 = por %p61, %p62
      %p65 = scmp.ne.s32.totalorder %s48, %s64
      %p66 = scmp.eq.s32.totalorder %s19, 0
      %p67 = por %p65, %p66
      %s68 = ssub.s32 %s20, %s39
      %s69 = ssub.s32 %s22, %s31
      %s70 = sor.u32 %s68, %s69
      %p71 = scmp.eq.s32.totalorder %s70, 0
      %s73 = sadd.s32 %s72, 1
      %s74 = scalar_select %p71, %s72, %s73
      %p77 = pneg %p71
      %p78 = scmp.eq.s32.totalorder %s13, 7
      %p79 = por %p77, %p78
      %p80 = scmp.ne.s32.totalorder %s72, %s75
      %p81 = scmp.eq.s32.totalorder %s13, 0
      %p82 = por %p80, %p81
      %p83 = scmp.ne.s32.totalorder %s72, %s75
      %p84 = scmp.eq.s32.totalorder %s18, 7
      %p85 = por %p83, %p84
      %p86 = scmp.ne.s32.totalorder %s75, %s76
      %p87 = scmp.eq.s32.totalorder %s18, 0
      %p88 = por %p86, %p87
      %p89 = scmp.ne.s32.totalorder %s75, %s76
      %p90 = scmp.eq.s32.totalorder %s19, 7
      %p91 = por %p89, %p90
      %p93 = scmp.ne.s32.totalorder %s76, %s92
      %p94 = scmp.eq.s32.totalorder %s19, 0
      %p95 = por %p93, %p94
      %s96 = ssub.s32 %s20, %s39
      %s97 = ssub.s32 %s22, %s31
      %s98 = sor.u32 %s96, %s97
      %p99 = scmp.eq.s32.totalorder %s98, 0
      %s101 = sadd.s32 %s100, 1
      %s102 = scalar_select %p99, %s100, %s101
      %p105 = pneg %p99
      %p106 = scmp.eq.s32.totalorder %s13, 7
      %p107 = por %p105, %p106
      %p108 = scmp.ne.s32.totalorder %s100, %s103
      %p109 = scmp.eq.s32.totalorder %s13, 0
      %p110 = por %p108, %p109
      %p111 = scmp.ne.s32.totalorder %s100, %s103
      %p112 = scmp.eq.s32.totalorder %s18, 7
      %p113 = por %p111, %p112
      %p114 = scmp.ne.s32.totalorder %s103, %s104
      %p115 = scmp.eq.s32.totalorder %s18, 0
      %p116 = por %p114, %p115
      %p117 = scmp.ne.s32.totalorder %s103, %s104
      %p118 = scmp.eq.s32.totalorder %s19, 7
      %p119 = por %p117, %p118
      %p121 = scmp.ne.s32.totalorder %s104, %s120
      %p122 = scmp.eq.s32.totalorder %s19, 0
      %p123 = por %p121, %p122
      %s124 = ssub.s32 %s20, %s39
      %s125 = ssub.s32 %s21, %s35
      %s126 = sor.u32 %s124, %s125
      %s127 = ssub.s32 %s22, %s31
      %s128 = sor.u32 %s126, %s127
      %p129 = scmp.eq.s32.totalorder %s128, 0
      %s131 = sadd.s32 %s130, 1
      %s132 = scalar_select %p129, %s130, %s131
      %p135 = pneg %p129
      %p136 = scmp.eq.s32.totalorder %s13, 7
      %p137 = por %p135, %p136
      %p138 = scmp.ne.s32.totalorder %s130, %s133
      %p139 = scmp.eq.s32.totalorder %s13, 0
      %p140 = por %p138, %p139
      %p141 = scmp.ne.s32.totalorder %s130, %s133
      %p142 = scmp.eq.s32.totalorder %s18, 7
      %p143 = por %p141, %p142
      %p144 = scmp.ne.s32.totalorder %s133, %s134
      %p145 = scmp.eq.s32.totalorder %s18, 0
      %p146 = por %p144, %p145
      %p147 = scmp.ne.s32.totalorder %s133, %s134
      %p148 = scmp.eq.s32.totalorder %s19, 7
      %p149 = por %p147, %p148
      %p151 = scmp.ne.s32.totalorder %s134, %s150
      %p152 = scmp.eq.s32.totalorder %s19, 0
      %p153 = por %p151, %p152
      %s154 = ssub.s32 %s20, %s39
      %s155 = ssub.s32 %s21, %s35
      %s156 = sor.u32 %s154, %s155
      %p157 = scmp.eq.s32.totalorder %s156, 0
      %s159 = sadd.s32 %s158, 1
      %s160 = scalar_select %p157, %s158, %s159
      %p163 = pneg %p157
      %p164 = scmp.eq.s32.totalorder %s13, 7
      %p165 = por %p163, %p164
      %p166 = scmp.ne.s32.totalorder %s158, %s161
      %p167 = scmp.eq.s32.totalorder %s13, 0
      %p168 = por %p166, %p167
      %p169 = scmp.ne.s32.totalorder %s158, %s161
      %p170 = scmp.eq.s32.totalorder %s18, 7
      %p171 = por %p169, %p170
      %p172 = scmp.ne.s32.totalorder %s161, %s162
      %p173 = scmp.eq.s32.totalorder %s18, 0
      %p174 = por %p172, %p173
      %p175 = scmp.ne.s32.totalorder %s161, %s162
      %p176 = scmp.eq.s32.totalorder %s19, 7
      %p177 = por %p175, %p176
      %p179 = scmp.ne.s32.totalorder %s162, %s178
      %p180 = scmp.eq.s32.totalorder %s19, 0
      %p181 = por %p179, %p180
      %p182 = scmp.le.s32.totalorder 1, %s13
      %p183 = scmp.lt.s32.totalorder %s13, 9
      %p184 = pnand %p182, %p183
      %p185 = pneg %p184
      // Predicated region
      $region9: #{tpu_custom_call.1} parent=5 // pred_check
        _
      $region10: #{tpu_custom_call.1} parent=5 // pred_check_branch
        %187 = sbr.rel (%p184) target = $region12
      $region11: #{tpu_custom_call.1} parent=5 // pred_region
        %s188 = ssub.s32 %s13, 1
      $region12: #{tpu_custom_call.1} parent=5 // pred_fallthru
        _
      %p189 = scmp.lt.s32.totalorder %s13, 8
      // Predicated region
      $region13: #{tpu_custom_call.1} parent=5 // pred_check
        %p190 = pneg %p189
      $region14: #{tpu_custom_call.1} parent=5 // pred_check_branch
        %192 = sbr.rel (%p190) target = $region16
      $region15: #{tpu_custom_call.1} parent=5 // pred_region
        // Predicated region
        $region17: #{tpu_custom_call.1} parent=15 // pred_check
          %p193 = pneg %p54
        $region18: #{tpu_custom_call.1} parent=15 // pred_check_branch
          %195 = sbr.rel (%p193) target = $region20
        $region19: #{tpu_custom_call.1} parent=15 // pred_region
          %s196 = smul.u32 16, %s21
          %p197 = scmp.lt.s32.totalorder %s20, 1
          %s198 = scalar_select %p197, %s20, 1
          %p199 = scmp.lt.s32.totalorder %s196, 31
          %s200 = scalar_select %p199, %s196, 31
          %s201 = smul.addr %s198, 32
          %s202 = sadd.s32 %s200, %s201
          %s203 = smul.addr %s202, 8
          %s204 = scalar_lea.vmem %s0, %s203
          %s205 = smul.u32 16, %s21
        $region20: #{tpu_custom_call.1} parent=15 // pred_fallthru
          _
        // Predicated region
        $region21: #{tpu_custom_call.1} parent=15 // pred_check
          %p206 = pneg %p82
        $region22: #{tpu_custom_call.1} parent=15 // pred_check_branch
          %208 = sbr.rel (%p206) target = $region24
        $region23: #{tpu_custom_call.1} parent=15 // pred_region
          %s209 = smul.u32 16, %s22
          %p210 = scmp.lt.s32.totalorder %s20, 1
          %s211 = scalar_select %p210, %s20, 1
          %p212 = scmp.lt.s32.totalorder %s209, 31
          %s213 = scalar_select %p212, %s209, 31
          %s214 = smul.addr %s211, 32
          %s215 = sadd.s32 %s213, %s214
          %s216 = smul.addr %s215, 8
          %s217 = scalar_lea.vmem %s1, %s216
          %s218 = smul.u32 16, %s22
        $region24: #{tpu_custom_call.1} parent=15 // pred_fallthru
          _
        // Predicated region
        $region25: #{tpu_custom_call.1} parent=15 // pred_check
          %p219 = pneg %p110
        $region26: #{tpu_custom_call.1} parent=15 // pred_check_branch
          %221 = sbr.rel (%p219) target = $region28
        $region27: #{tpu_custom_call.1} parent=15 // pred_region
          %s222 = smul.u32 16, %s22
          %p223 = scmp.lt.s32.totalorder %s20, 1
          %s224 = scalar_select %p223, %s20, 1
          %p225 = scmp.lt.s32.totalorder %s222, 31
          %s226 = scalar_select %p225, %s222, 31
          %s227 = smul.addr %s224, 32
          %s228 = sadd.s32 %s226, %s227
          %s229 = smul.addr %s228, 8
          %s230 = scalar_lea.vmem %s2, %s229
          %s231 = smul.u32 16, %s22
        $region28: #{tpu_custom_call.1} parent=15 // pred_fallthru
          _
        // Predicated region
        $region29: #{tpu_custom_call.1} parent=15 // pred_check
          %p232 = pneg %p140
        $region30: #{tpu_custom_call.1} parent=15 // pred_check_branch
          %234 = sbr.rel (%p232) target = $region32
        $region31: #{tpu_custom_call.1} parent=15 // pred_region
          #allocation8 [shape = 'u32[6]{0}', space=smem, size = 0x18, scoped, tag = 'DMA stride descriptor']
          %s235 = sand.u32 %s130, 1
          %s236 = scalar_lea.sflag [#allocation6], %s235
          %s237 = sand.u32 %s130, 1
          %s238 = smul.addr %s237, 512
          %s239 = scalar_lea.vmem [#allocation5], %s238
          %s240 = smul.u32 16, %s21
          %s242 = ssub.s32 8192, 8192
          %243 = vsyncadd %s236, %s242
          %s244 = smul.addr %s240, 2
          %s245 = sadd.s32 %s22, %s244
          %s246 = smul.addr %s20, 256
          %s247 = sadd.s32 %s245, %s246
          %s248 = smul.addr %s247, 128
          %s249 = scalar_lea.hbm %s3, %s248
          %s251 = sshll.u32 1, 14
          %s252 = sxor.u32 4294967295, %s251
          %s254 = sld [smem:[#allocation0]]
          %s255 = sadd.s32 2, %s254
          %s257 = sshll.u32 7, 26
          %s258 = sxor.u32 4294967295, %s257
          %s259 = sand.u32 0, %s258
          %s260 = sshll.u32 %s255, 26
          %s261 = sor.u32 %s259, %s260
          %s262 = sshll.u32 %s239, 4
          %s263 = int_to_ptr.vmem [resolvable:$true] %s262
          %269 = sst [smem:[#allocation8]] 8192
          %s270 = scalar_lea.smem [#allocation8], 1
          %271 = sst [smem:[%s270]] 2048
          %s272 = scalar_lea.smem [#allocation8], 2
          %273 = sst [smem:[%s272]] 16
          %s274 = scalar_lea.smem [#allocation8], 3
          %275 = sst [smem:[%s274]] 256
          %s276 = scalar_lea.smem [#allocation8], 4
          %277 = sst [smem:[%s276]] 128
          %s278 = scalar_lea.smem [#allocation8], 5
          %279 = sst [smem:[%s278]] 8
          %281 = dma.general %s249, 8192, %s263, %s236, [#allocation7], [#allocation8], %s261, 0
        $region32: #{tpu_custom_call.1} parent=15 // pred_fallthru
          _
      $region16: #{tpu_custom_call.1} parent=5 // pred_fallthru
        _
      %p282 = scmp.le.s32.totalorder 1, %s13
      %p283 = scmp.lt.s32.totalorder %s13, 9
      %p284 = pnand %p282, %p283
      %p285 = pneg %p284
      // Predicated region
      $region33: #{tpu_custom_call.1} parent=5 // pred_check
        _
      $region34: #{tpu_custom_call.1} parent=5 // pred_check_branch
        %287 = sbr.rel (%p284) target = $region36
      $region35: #{tpu_custom_call.1} parent=5 // pred_region
        %s288 = ssub.s32 %s13, 1
        %s289 = sand.u32 %s133, 1
        %s290 = scalar_lea.sflag [#allocation6], %s289
        %s291 = sand.u32 %s133, 1
        %s292 = smul.addr %s291, 512
        %s293 = scalar_lea.vmem [#allocation5], %s292
        // Predicated region
        $region37: #{tpu_custom_call.1} parent=35 // pred_check
          %p294 = pneg %p146
        $region38: #{tpu_custom_call.1} parent=35 // pred_check_branch
          %296 = sbr.rel (%p294) target = $region40
        $region39: #{tpu_custom_call.1} parent=35 // pred_region
          %297 = dma.done %s290, 8192
        $region40: #{tpu_custom_call.1} parent=35 // pred_fallthru
          _
        %s298 = smul.u32 16, %s24
        %p299 = scmp.lt.s32.totalorder %s23, 1
        %s300 = scalar_select %p299, %s23, 1
        %p301 = scmp.lt.s32.totalorder %s298, 31
        %s302 = scalar_select %p301, %s298, 31
        %s303 = smul.addr %s300, 32
        %s304 = sadd.s32 %s302, %s303
        %s305 = smul.addr %s304, 8
        %s306 = scalar_lea.vmem %s0, %s305
        %p307 = pneg %p60
        %p308 = pneg %p57
        %s309 = smul.u32 16, %s25
        %p310 = scmp.lt.s32.totalorder %s23, 1
        %s311 = scalar_select %p310, %s23, 1
        %p312 = scmp.lt.s32.totalorder %s309, 31
        %s313 = scalar_select %p312, %s309, 31
        %s314 = smul.addr %s311, 32
        %s315 = sadd.s32 %s313, %s314
        %s316 = smul.addr %s315, 8
        %s317 = scalar_lea.vmem %s1, %s316
        %p318 = pneg %p88
        %p319 = pneg %p85
        %s320 = smul.u32 16, %s25
        %p321 = scmp.lt.s32.totalorder %s23, 1
        %s322 = scalar_select %p321, %s23, 1
        %p323 = scmp.lt.s32.totalorder %s320, 31
        %s324 = scalar_select %p323, %s320, 31
        %s325 = smul.addr %s322, 32
        %s326 = sadd.s32 %s324, %s325
        %s327 = smul.addr %s326, 8
        %s328 = scalar_lea.vmem %s2, %s327
        %p329 = pneg %p116
        %p330 = pneg %p113
        %s331 = sand.u32 %s133, 1
        %s332 = scalar_lea.sflag [#allocation6], %s331
        %s333 = sand.u32 %s133, 1
        %s334 = smul.addr %s333, 512
        %s335 = scalar_lea.vmem [#allocation5], %s334
        %p336 = pneg %p146
        %p337 = pneg %p143
        %p338 = pneg %p174
        %p339 = pneg %p171
        %s340 = smul.u32 16, %s24
        %p341 = scmp.lt.s32.totalorder %s23, 1
        %s342 = scalar_select %p341, %s23, 1
        %p343 = scmp.lt.s32.totalorder %s340, 31
        %s344 = scalar_select %p343, %s340, 31
        %s345 = smul.addr %s342, 32
        %s346 = sadd.s32 %s344, %s345
        %s347 = smul.addr %s346, 8
        %s348 = scalar_lea.vmem %s4, %s347
        %s349 = smul.u32 16, %s24
        %p350 = scmp.lt.s32.totalorder %s23, 1
        %s351 = scalar_select %p350, %s23, 1
        %p352 = scmp.lt.s32.totalorder %s349, 31
        %s353 = scalar_select %p352, %s349, 31
        %s354 = smul.addr %s351, 32
        %s355 = sadd.s32 %s353, %s354
        %s356 = smul.addr %s355, 8
        %s357 = scalar_lea.vmem %s0, %s356
        %s358 = smul.u32 16, %s24
        %s359 = smul.u32 16, %s25
        %p360 = scmp.lt.s32.totalorder %s23, 1
        %s361 = scalar_select %p360, %s23, 1
        %p362 = scmp.lt.s32.totalorder %s359, 31
        %s363 = scalar_select %p362, %s359, 31
        %s364 = smul.addr %s361, 32
        %s365 = sadd.s32 %s363, %s364
        %s366 = smul.addr %s365, 8
        %s367 = scalar_lea.vmem %s1, %s366
        %s368 = smul.u32 16, %s25
        %s369 = smul.u32 16, %s25
        %p370 = scmp.lt.s32.totalorder %s23, 1
        %s371 = scalar_select %p370, %s23, 1
        %p372 = scmp.lt.s32.totalorder %s369, 31
        %s373 = scalar_select %p372, %s369, 31
        %s374 = smul.addr %s371, 32
        %s375 = sadd.s32 %s373, %s374
        %s376 = smul.addr %s375, 8
        %s377 = scalar_lea.vmem %s2, %s376
        %s378 = smul.u32 16, %s25
        %s379 = smul.u32 16, %s24
        %s380 = smul.u32 16, %s24
        %p381 = scmp.lt.s32.totalorder %s23, 1
        %s382 = scalar_select %p381, %s23, 1
        %p383 = scmp.lt.s32.totalorder %s380, 31
        %s384 = scalar_select %p383, %s380, 31
        %s385 = smul.addr %s382, 32
        %s386 = sadd.s32 %s384, %s385
        %s387 = smul.addr %s386, 8
        %s388 = scalar_lea.vmem %s4, %s387
        %s389 = smul.u32 16, %s24
        %p390 = scmp.eq.s32.totalorder %s25, 0
        // Predicated region
        $region41: #{tpu_custom_call.1} parent=35 // pred_check
          %p391 = pneg %p390
        $region42: #{tpu_custom_call.1} parent=35 // pred_check_branch
          %393 = sbr.rel (%p391) target = $region44
        $region43: #{tpu_custom_call.1} parent=35 // pred_region
          %vm394 = vcmask 7168
          %395 = vst.msk [vmem:[#allocation2] sm:$0xff] %vm394, -inf
          %396 = vst.msk [vmem:[#allocation2 + $0x8] sm:$0xff] %vm394, -inf
          %397 = vst.msk [vmem:[#allocation2 + $0x10] sm:$0xff] %vm394, -inf
          %398 = vst.msk [vmem:[#allocation2 + $0x18] sm:$0xff] %vm394, -inf
          %399 = vst.msk [vmem:[#allocation2 + $0x20] sm:$0xff] %vm394, -inf
          %400 = vst.msk [vmem:[#allocation2 + $0x28] sm:$0xff] %vm394, -inf
          %401 = vst.msk [vmem:[#allocation2 + $0x30] sm:$0xff] %vm394, -inf
          %402 = vst.msk [vmem:[#allocation2 + $0x38] sm:$0xff] %vm394, -inf
          %403 = vst.msk [vmem:[#allocation2 + $0x40] sm:$0xff] %vm394, -inf
          %404 = vst.msk [vmem:[#allocation2 + $0x48] sm:$0xff] %vm394, -inf
          %405 = vst.msk [vmem:[#allocation2 + $0x50] sm:$0xff] %vm394, -inf
          %406 = vst.msk [vmem:[#allocation2 + $0x58] sm:$0xff] %vm394, -inf
          %407 = vst.msk [vmem:[#allocation2 + $0x60] sm:$0xff] %vm394, -inf
          %408 = vst.msk [vmem:[#allocation2 + $0x68] sm:$0xff] %vm394, -inf
          %409 = vst.msk [vmem:[#allocation2 + $0x70] sm:$0xff] %vm394, -inf
          %410 = vst.msk [vmem:[#allocation2 + $0x78] sm:$0xff] %vm394, -inf
          %411 = vst.msk [vmem:[#allocation2 + $0x80] sm:$0xff] %vm394, -inf
          %412 = vst.msk [vmem:[#allocation2 + $0x88] sm:$0xff] %vm394, -inf
          %413 = vst.msk [vmem:[#allocation2 + $0x90] sm:$0xff] %vm394, -inf
          %414 = vst.msk [vmem:[#allocation2 + $0x98] sm:$0xff] %vm394, -inf
          %415 = vst.msk [vmem:[#allocation2 + $0xa0] sm:$0xff] %vm394, -inf
          %416 = vst.msk [vmem:[#allocation2 + $0xa8] sm:$0xff] %vm394, -inf
          %417 = vst.msk [vmem:[#allocation2 + $0xb0] sm:$0xff] %vm394, -inf
          %418 = vst.msk [vmem:[#allocation2 + $0xb8] sm:$0xff] %vm394, -inf
          %419 = vst.msk [vmem:[#allocation2 + $0xc0] sm:$0xff] %vm394, -inf
          %420 = vst.msk [vmem:[#allocation2 + $0xc8] sm:$0xff] %vm394, -inf
          %421 = vst.msk [vmem:[#allocation2 + $0xd0] sm:$0xff] %vm394, -inf
          %422 = vst.msk [vmem:[#allocation2 + $0xd8] sm:$0xff] %vm394, -inf
          %423 = vst.msk [vmem:[#allocation2 + $0xe0] sm:$0xff] %vm394, -inf
          %424 = vst.msk [vmem:[#allocation2 + $0xe8] sm:$0xff] %vm394, -inf
          %425 = vst.msk [vmem:[#allocation2 + $0xf0] sm:$0xff] %vm394, -inf
          %426 = vst.msk [vmem:[#allocation2 + $0xf8] sm:$0xff] %vm394, -inf
          %427 = vst.msk [vmem:[#allocation2 + $0x100] sm:$0xff] %vm394, -inf
          %428 = vst.msk [vmem:[#allocation2 + $0x108] sm:$0xff] %vm394, -inf
          %429 = vst.msk [vmem:[#allocation2 + $0x110] sm:$0xff] %vm394, -inf
          %430 = vst.msk [vmem:[#allocation2 + $0x118] sm:$0xff] %vm394, -inf
          %431 = vst.msk [vmem:[#allocation2 + $0x120] sm:$0xff] %vm394, -inf
          %432 = vst.msk [vmem:[#allocation2 + $0x128] sm:$0xff] %vm394, -inf
          %433 = vst.msk [vmem:[#allocation2 + $0x130] sm:$0xff] %vm394, -inf
          %434 = vst.msk [vmem:[#allocation2 + $0x138] sm:$0xff] %vm394, -inf
          %435 = vst.msk [vmem:[#allocation2 + $0x140] sm:$0xff] %vm394, -inf
          %436 = vst.msk [vmem:[#allocation2 + $0x148] sm:$0xff] %vm394, -inf
          %437 = vst.msk [vmem:[#allocation2 + $0x150] sm:$0xff] %vm394, -inf
          %438 = vst.msk [vmem:[#allocation2 + $0x158] sm:$0xff] %vm394, -inf
          %439 = vst.msk [vmem:[#allocation2 + $0x160] sm:$0xff] %vm394, -inf
          %440 = vst.msk [vmem:[#allocation2 + $0x168] sm:$0xff] %vm394, -inf
          %441 = vst.msk [vmem:[#allocation2 + $0x170] sm:$0xff] %vm394, -inf
          %442 = vst.msk [vmem:[#allocation2 + $0x178] sm:$0xff] %vm394, -inf
          %443 = vst.msk [vmem:[#allocation2 + $0x180] sm:$0xff] %vm394, -inf
          %444 = vst.msk [vmem:[#allocation2 + $0x188] sm:$0xff] %vm394, -inf
          %445 = vst.msk [vmem:[#allocation2 + $0x190] sm:$0xff] %vm394, -inf
          %446 = vst.msk [vmem:[#allocation2 + $0x198] sm:$0xff] %vm394, -inf
          %447 = vst.msk [vmem:[#allocation2 + $0x1a0] sm:$0xff] %vm394, -inf
          %448 = vst.msk [vmem:[#allocation2 + $0x1a8] sm:$0xff] %vm394, -inf
          %449 = vst.msk [vmem:[#allocation2 + $0x1b0] sm:$0xff] %vm394, -inf
          %450 = vst.msk [vmem:[#allocation2 + $0x1b8] sm:$0xff] %vm394, -inf
          %451 = vst.msk [vmem:[#allocation2 + $0x1c0] sm:$0xff] %vm394, -inf
          %452 = vst.msk [vmem:[#allocation2 + $0x1c8] sm:$0xff] %vm394, -inf
          %453 = vst.msk [vmem:[#allocation2 + $0x1d0] sm:$0xff] %vm394, -inf
          %454 = vst.msk [vmem:[#allocation2 + $0x1d8] sm:$0xff] %vm394, -inf
          %455 = vst.msk [vmem:[#allocation2 + $0x1e0] sm:$0xff] %vm394, -inf
          %456 = vst.msk [vmem:[#allocation2 + $0x1e8] sm:$0xff] %vm394, -inf
          %457 = vst.msk [vmem:[#allocation2 + $0x1f0] sm:$0xff] %vm394, -inf
          %458 = vst.msk [vmem:[#allocation2 + $0x1f8] sm:$0xff] %vm394, -inf
          %459 = vst.msk [vmem:[#allocation3] sm:$0xff] %vm394, 0.0
          %460 = vst.msk [vmem:[#allocation3 + $0x8] sm:$0xff] %vm394, 0.0
          %461 = vst.msk [vmem:[#allocation3 + $0x10] sm:$0xff] %vm394, 0.0
          %462 = vst.msk [vmem:[#allocation3 + $0x18] sm:$0xff] %vm394, 0.0
          %463 = vst.msk [vmem:[#allocation3 + $0x20] sm:$0xff] %vm394, 0.0
          %464 = vst.msk [vmem:[#allocation3 + $0x28] sm:$0xff] %vm394, 0.0
          %465 = vst.msk [vmem:[#allocation3 + $0x30] sm:$0xff] %vm394, 0.0
          %466 = vst.msk [vmem:[#allocation3 + $0x38] sm:$0xff] %vm394, 0.0
          %467 = vst.msk [vmem:[#allocation3 + $0x40] sm:$0xff] %vm394, 0.0
          %468 = vst.msk [vmem:[#allocation3 + $0x48] sm:$0xff] %vm394, 0.0
          %469 = vst.msk [vmem:[#allocation3 + $0x50] sm:$0xff] %vm394, 0.0
          %470 = vst.msk [vmem:[#allocation3 + $0x58] sm:$0xff] %vm394, 0.0
          %471 = vst.msk [vmem:[#allocation3 + $0x60] sm:$0xff] %vm394, 0.0
          %472 = vst.msk [vmem:[#allocation3 + $0x68] sm:$0xff] %vm394, 0.0
          %473 = vst.msk [vmem:[#allocation3 + $0x70] sm:$0xff] %vm394, 0.0
          %474 = vst.msk [vmem:[#allocation3 + $0x78] sm:$0xff] %vm394, 0.0
          %475 = vst.msk [vmem:[#allocation3 + $0x80] sm:$0xff] %vm394, 0.0
          %476 = vst.msk [vmem:[#allocation3 + $0x88] sm:$0xff] %vm394, 0.0
          %477 = vst.msk [vmem:[#allocation3 + $0x90] sm:$0xff] %vm394, 0.0
          %478 = vst.msk [vmem:[#allocation3 + $0x98] sm:$0xff] %vm394, 0.0
          %479 = vst.msk [vmem:[#allocation3 + $0xa0] sm:$0xff] %vm394, 0.0
          %480 = vst.msk [vmem:[#allocation3 + $0xa8] sm:$0xff] %vm394, 0.0
          %481 = vst.msk [vmem:[#allocation3 + $0xb0] sm:$0xff] %vm394, 0.0
          %482 = vst.msk [vmem:[#allocation3 + $0xb8] sm:$0xff] %vm394, 0.0
          %483 = vst.msk [vmem:[#allocation3 + $0xc0] sm:$0xff] %vm394, 0.0
          %484 = vst.msk [vmem:[#allocation3 + $0xc8] sm:$0xff] %vm394, 0.0
          %485 = vst.msk [vmem:[#allocation3 + $0xd0] sm:$0xff] %vm394, 0.0
          %486 = vst.msk [vmem:[#allocation3 + $0xd8] sm:$0xff] %vm394, 0.0
          %487 = vst.msk [vmem:[#allocation3 + $0xe0] sm:$0xff] %vm394, 0.0
          %488 = vst.msk [vmem:[#allocation3 + $0xe8] sm:$0xff] %vm394, 0.0
          %489 = vst.msk [vmem:[#allocation3 + $0xf0] sm:$0xff] %vm394, 0.0
          %490 = vst.msk [vmem:[#allocation3 + $0xf8] sm:$0xff] %vm394, 0.0
          %491 = vst.msk [vmem:[#allocation3 + $0x100] sm:$0xff] %vm394, 0.0
          %492 = vst.msk [vmem:[#allocation3 + $0x108] sm:$0xff] %vm394, 0.0
          %493 = vst.msk [vmem:[#allocation3 + $0x110] sm:$0xff] %vm394, 0.0
          %494 = vst.msk [vmem:[#allocation3 + $0x118] sm:$0xff] %vm394, 0.0
          %495 = vst.msk [vmem:[#allocation3 + $0x120] sm:$0xff] %vm394, 0.0
          %496 = vst.msk [vmem:[#allocation3 + $0x128] sm:$0xff] %vm394, 0.0
          %497 = vst.msk [vmem:[#allocation3 + $0x130] sm:$0xff] %vm394, 0.0
          %498 = vst.msk [vmem:[#allocation3 + $0x138] sm:$0xff] %vm394, 0.0
          %499 = vst.msk [vmem:[#allocation3 + $0x140] sm:$0xff] %vm394, 0.0
          %500 = vst.msk [vmem:[#allocation3 + $0x148] sm:$0xff] %vm394, 0.0
          %501 = vst.msk [vmem:[#allocation3 + $0x150] sm:$0xff] %vm394, 0.0
          %502 = vst.msk [vmem:[#allocation3 + $0x158] sm:$0xff] %vm394, 0.0
          %503 = vst.msk [vmem:[#allocation3 + $0x160] sm:$0xff] %vm394, 0.0
          %504 = vst.msk [vmem:[#allocation3 + $0x168] sm:$0xff] %vm394, 0.0
          %505 = vst.msk [vmem:[#allocation3 + $0x170] sm:$0xff] %vm394, 0.0
          %506 = vst.msk [vmem:[#allocation3 + $0x178] sm:$0xff] %vm394, 0.0
          %507 = vst.msk [vmem:[#allocation3 + $0x180] sm:$0xff] %vm394, 0.0
          %508 = vst.msk [vmem:[#allocation3 + $0x188] sm:$0xff] %vm394, 0.0
          %509 = vst.msk [vmem:[#allocation3 + $0x190] sm:$0xff] %vm394, 0.0
          %510 = vst.msk [vmem:[#allocation3 + $0x198] sm:$0xff] %vm394, 0.0
          %511 = vst.msk [vmem:[#allocation3 + $0x1a0] sm:$0xff] %vm394, 0.0
          %512 = vst.msk [vmem:[#allocation3 + $0x1a8] sm:$0xff] %vm394, 0.0
          %513 = vst.msk [vmem:[#allocation3 + $0x1b0] sm:$0xff] %vm394, 0.0
          %514 = vst.msk [vmem:[#allocation3 + $0x1b8] sm:$0xff] %vm394, 0.0
          %515 = vst.msk [vmem:[#allocation3 + $0x1c0] sm:$0xff] %vm394, 0.0
          %516 = vst.msk [vmem:[#allocation3 + $0x1c8] sm:$0xff] %vm394, 0.0
          %517 = vst.msk [vmem:[#allocation3 + $0x1d0] sm:$0xff] %vm394, 0.0
          %518 = vst.msk [vmem:[#allocation3 + $0x1d8] sm:$0xff] %vm394, 0.0
          %519 = vst.msk [vmem:[#allocation3 + $0x1e0] sm:$0xff] %vm394, 0.0
          %520 = vst.msk [vmem:[#allocation3 + $0x1e8] sm:$0xff] %vm394, 0.0
          %521 = vst.msk [vmem:[#allocation3 + $0x1f0] sm:$0xff] %vm394, 0.0
          %522 = vst.msk [vmem:[#allocation3 + $0x1f8] sm:$0xff] %vm394, 0.0
          %vm523 = vcmask 261120
          %524 = vst.msk [vmem:[#allocation4] sm:$0xff] %vm523, 0.0
          %525 = vst.msk [vmem:[#allocation4 + $0x8] sm:$0xff] %vm523, 0.0
          %526 = vst.msk [vmem:[#allocation4 + $0x10] sm:$0xff] %vm523, 0.0
          %527 = vst.msk [vmem:[#allocation4 + $0x18] sm:$0xff] %vm523, 0.0
          %528 = vst.msk [vmem:[#allocation4 + $0x20] sm:$0xff] %vm523, 0.0
          %529 = vst.msk [vmem:[#allocation4 + $0x28] sm:$0xff] %vm523, 0.0
          %530 = vst.msk [vmem:[#allocation4 + $0x30] sm:$0xff] %vm523, 0.0
          %531 = vst.msk [vmem:[#allocation4 + $0x38] sm:$0xff] %vm523, 0.0
          %532 = vst.msk [vmem:[#allocation4 + $0x40] sm:$0xff] %vm523, 0.0
          %533 = vst.msk [vmem:[#allocation4 + $0x48] sm:$0xff] %vm523, 0.0
          %534 = vst.msk [vmem:[#allocation4 + $0x50] sm:$0xff] %vm523, 0.0
          %535 = vst.msk [vmem:[#allocation4 + $0x58] sm:$0xff] %vm523, 0.0
          %536 = vst.msk [vmem:[#allocation4 + $0x60] sm:$0xff] %vm523, 0.0
          %537 = vst.msk [vmem:[#allocation4 + $0x68] sm:$0xff] %vm523, 0.0
          %538 = vst.msk [vmem:[#allocation4 + $0x70] sm:$0xff] %vm523, 0.0
          %539 = vst.msk [vmem:[#allocation4 + $0x78] sm:$0xff] %vm523, 0.0
        $region44: #{tpu_custom_call.1} parent=35 // pred_fallthru
          _
        %v540 = vld [vmem:[%s357] sm:$0xff]
        %v541 = vld [vmem:[%s357 + $0x8] sm:$0xff]
        %v542 = vld [vmem:[%s357 + $0x10] sm:$0xff]
        %v543 = vld [vmem:[%s357 + $0x18] sm:$0xff]
        %v544 = vld [vmem:[%s357 + $0x20] sm:$0xff]
        %v545 = vld [vmem:[%s357 + $0x28] sm:$0xff]
        %v546 = vld [vmem:[%s357 + $0x30] sm:$0xff]
        %v547 = vld [vmem:[%s357 + $0x38] sm:$0xff]
        %v548 = vld [vmem:[%s357 + $0x40] sm:$0xff]
        %v549 = vld [vmem:[%s357 + $0x48] sm:$0xff]
        %v550 = vld [vmem:[%s357 + $0x50] sm:$0xff]
        %v551 = vld [vmem:[%s357 + $0x58] sm:$0xff]
        %v552 = vld [vmem:[%s357 + $0x60] sm:$0xff]
        %v553 = vld [vmem:[%s357 + $0x68] sm:$0xff]
        %v554 = vld [vmem:[%s357 + $0x70] sm:$0xff]
        %v555 = vld [vmem:[%s357 + $0x78] sm:$0xff]
        %v556 = vmul.f32 %v540, 2.828427
        %v557 = vmul.f32 %v541, 2.828427
        %v558 = vmul.f32 %v542, 2.828427
        %v559 = vmul.f32 %v543, 2.828427
        %v560 = vmul.f32 %v544, 2.828427
        %v561 = vmul.f32 %v545, 2.828427
        %v562 = vmul.f32 %v546, 2.828427
        %v563 = vmul.f32 %v547, 2.828427
        %v564 = vmul.f32 %v548, 2.828427
        %v565 = vmul.f32 %v549, 2.828427
        %v566 = vmul.f32 %v550, 2.828427
        %v567 = vmul.f32 %v551, 2.828427
        %v568 = vmul.f32 %v552, 2.828427
        %v569 = vmul.f32 %v553, 2.828427
        %v570 = vmul.f32 %v554, 2.828427
        %v571 = vmul.f32 %v555, 2.828427
        %v572 = vld [vmem:[%s367] sm:$0xff]
        %v573 = vld [vmem:[%s367 + $0x8] sm:$0xff]
        %v574 = vld [vmem:[%s367 + $0x10] sm:$0xff]
        %v575 = vld [vmem:[%s367 + $0x18] sm:$0xff]
        %v576 = vld [vmem:[%s367 + $0x20] sm:$0xff]
        %v577 = vld [vmem:[%s367 + $0x28] sm:$0xff]
        %v578 = vld [vmem:[%s367 + $0x30] sm:$0xff]
        %v579 = vld [vmem:[%s367 + $0x38] sm:$0xff]
        %v580 = vld [vmem:[%s367 + $0x40] sm:$0xff]
        %v581 = vld [vmem:[%s367 + $0x48] sm:$0xff]
        %v582 = vld [vmem:[%s367 + $0x50] sm:$0xff]
        %v583 = vld [vmem:[%s367 + $0x58] sm:$0xff]
        %v584 = vld [vmem:[%s367 + $0x60] sm:$0xff]
        %v585 = vld [vmem:[%s367 + $0x68] sm:$0xff]
        %v586 = vld [vmem:[%s367 + $0x70] sm:$0xff]
        %v587 = vld [vmem:[%s367 + $0x78] sm:$0xff]
        %v588 = vld [vmem:[%s377] sm:$0xff]
        %v589 = vld [vmem:[%s377 + $0x8] sm:$0xff]
        %v590 = vld [vmem:[%s377 + $0x10] sm:$0xff]
        %v591 = vld [vmem:[%s377 + $0x18] sm:$0xff]
        %v592 = vld [vmem:[%s377 + $0x20] sm:$0xff]
        %v593 = vld [vmem:[%s377 + $0x28] sm:$0xff]
        %v594 = vld [vmem:[%s377 + $0x30] sm:$0xff]
        %v595 = vld [vmem:[%s377 + $0x38] sm:$0xff]
        %v596 = vld [vmem:[%s377 + $0x40] sm:$0xff]
        %v597 = vld [vmem:[%s377 + $0x48] sm:$0xff]
        %v598 = vld [vmem:[%s377 + $0x50] sm:$0xff]
        %v599 = vld [vmem:[%s377 + $0x58] sm:$0xff]
        %v600 = vld [vmem:[%s377 + $0x60] sm:$0xff]
        %v601 = vld [vmem:[%s377 + $0x68] sm:$0xff]
        %v602 = vld [vmem:[%s377 + $0x70] sm:$0xff]
        %v603 = vld [vmem:[%s377 + $0x78] sm:$0xff]
        %v604 = vld [vmem:[%s293] sm:$0xff]
        %v605 = vld [vmem:[%s293 + $0x8] sm:$0xff]
        %v606 = vld [vmem:[%s293 + $0x10] sm:$0xff]
        %v607 = vld [vmem:[%s293 + $0x18] sm:$0xff]
        %v608 = vld [vmem:[%s293 + $0x20] sm:$0xff]
        %v609 = vld [vmem:[%s293 + $0x28] sm:$0xff]
        %v610 = vld [vmem:[%s293 + $0x30] sm:$0xff]
        %v611 = vld [vmem:[%s293 + $0x38] sm:$0xff]
        %v612 = vld [vmem:[%s293 + $0x40] sm:$0xff]
        %v613 = vld [vmem:[%s293 + $0x48] sm:$0xff]
        %v614 = vld [vmem:[%s293 + $0x50] sm:$0xff]
        %v615 = vld [vmem:[%s293 + $0x58] sm:$0xff]
        %v616 = vld [vmem:[%s293 + $0x60] sm:$0xff]
        %v617 = vld [vmem:[%s293 + $0x68] sm:$0xff]
        %v618 = vld [vmem:[%s293 + $0x70] sm:$0xff]
        %v619 = vld [vmem:[%s293 + $0x78] sm:$0xff]
        %vm620 = vcmask 64512
        %v622 = vsel %vm620, %v556, 0
        %v625 = vsel %vm620, %v557, 0
        %v628 = vsel %vm620, %v558, 0
        %v631 = vsel %vm620, %v559, 0
        %v634 = vsel %vm620, %v560, 0
        %v637 = vsel %vm620, %v561, 0
        %v640 = vsel %vm620, %v562, 0
        %v643 = vsel %vm620, %v563, 0
        %v646 = vsel %vm620, %v564, 0
        %v649 = vsel %vm620, %v565, 0
        %v652 = vsel %vm620, %v566, 0
        %v655 = vsel %vm620, %v567, 0
        %v658 = vsel %vm620, %v568, 0
        %v661 = vsel %vm620, %v569, 0
        %v664 = vsel %vm620, %v570, 0
        %v667 = vsel %vm620, %v571, 0
        %v670 = vsel %vm620, %v572, 0
        %v673 = vsel %vm620, %v573, 0
        %v676 = vsel %vm620, %v574, 0
        %v679 = vsel %vm620, %v575, 0
        %v682 = vsel %vm620, %v576, 0
        %v685 = vsel %vm620, %v577, 0
        %v688 = vsel %vm620, %v578, 0
        %v691 = vsel %vm620, %v579, 0
        %v694 = vsel %vm620, %v580, 0
        %v697 = vsel %vm620, %v581, 0
        %v700 = vsel %vm620, %v582, 0
        %v703 = vsel %vm620, %v583, 0
        %v706 = vsel %vm620, %v584, 0
        %v709 = vsel %vm620, %v585, 0
        %v712 = vsel %vm620, %v586, 0
        %v715 = vsel %vm620, %v587, 0
        %717 = vmatprep.subr.mxu0 0.0
        %718 = vmatpush1.xpose.msra.mxu0 %v670
        %719 = vmatprep.subr.mxu0 0.0
        %720 = vmatpush1.xpose.msra.mxu0 %v673
        %721 = vmatprep.subr.mxu0 0.0
        %722 = vmatpush1.xpose.msra.mxu0 %v676
        %723 = vmatprep.subr.mxu0 0.0
        %724 = vmatpush1.xpose.msra.mxu0 %v679
        %725 = vmatprep.subr.mxu0 0.0
        %726 = vmatpush1.xpose.msra.mxu0 %v682
        %727 = vmatprep.subr.mxu0 0.0
        %728 = vmatpush1.xpose.msra.mxu0 %v685
        %729 = vmatprep.subr.mxu0 0.0
        %730 = vmatpush1.xpose.msra.mxu0 %v688
        %731 = vmatprep.subr.mxu0 0.0
        %732 = vmatpush1.xpose.msra.mxu0 %v691
        %733 = vmatprep.subr.mxu0 0.0
        %734 = vmatpush1.xpose.msra.mxu0 %v694
        %735 = vmatprep.subr.mxu0 0.0
        %736 = vmatpush1.xpose.msra.mxu0 %v697
        %737 = vmatprep.subr.mxu0 0.0
        %738 = vmatpush1.xpose.msra.mxu0 %v700
        %739 = vmatprep.subr.mxu0 0.0
        %740 = vmatpush1.xpose.msra.mxu0 %v703
        %741 = vmatprep.subr.mxu0 0.0
        %742 = vmatpush1.xpose.msra.mxu0 %v706
        %743 = vmatprep.subr.mxu0 0.0
        %744 = vmatpush1.xpose.msra.mxu0 %v709
        %745 = vmatprep.subr.mxu0 0.0
        %746 = vmatpush1.xpose.msra.mxu0 %v712
        %747 = vmatprep.subr.mxu0 0.0
        %748 = vmatpush1.xpose.msra.mxu0 %v715
        %749 = vmatprep.subr.mxu0 0.0
        %750 = vmatpush1.xpose.msra.mxu0 0.0
        %751 = vmatprep.subr.mxu0 0.0
        %752 = vmatpush1.xpose.msra.mxu0 0.0
        %753 = vmatprep.subr.mxu0 0.0
        %754 = vmatpush1.xpose.msra.mxu0 0.0
        %755 = vmatprep.subr.mxu0 0.0
        %756 = vmatpush1.xpose.msra.mxu0 0.0
        %757 = vmatprep.subr.mxu0 0.0
        %758 = vmatpush1.xpose.msra.mxu0 0.0
        %759 = vmatprep.subr.mxu0 0.0
        %760 = vmatpush1.xpose.msra.mxu0 0.0
        %761 = vmatprep.subr.mxu0 0.0
        %762 = vmatpush1.xpose.msra.mxu0 0.0
        %763 = vmatprep.subr.mxu0 0.0
        %764 = vmatpush1.xpose.msra.mxu0 0.0
        %765 = vmatprep.subr.mxu0 0.0
        %766 = vmatpush1.xpose.msra.mxu0 0.0
        %767 = vmatprep.subr.mxu0 0.0
        %768 = vmatpush1.xpose.msra.mxu0 0.0
        %769 = vmatprep.subr.mxu0 0.0
        %770 = vmatpush1.xpose.msra.mxu0 0.0
        %771 = vmatprep.subr.mxu0 0.0
        %772 = vmatpush1.xpose.msra.mxu0 0.0
        %773 = vmatprep.subr.mxu0 0.0
        %774 = vmatpush1.xpose.msra.mxu0 0.0
        %775 = vmatprep.subr.mxu0 0.0
        %776 = vmatpush1.xpose.msra.mxu0 0.0
        %777 = vmatprep.subr.mxu0 0.0
        %778 = vmatpush1.xpose.msra.mxu0 0.0
        %779 = vmatprep.subr.mxu0 0.0
        %780 = vmatpush1.xpose.msra.mxu0 0.0
        %781 = vmatprep.mubr.f32.mxu0 0.0
        %782 = vmatmul.mubr.f32.gmra.mrb[0].mxu0 %v622
        %v783 = vpop.f32.mrb[0].mxu0
        %v784 = vadd.f32 %v604, %v783
        %v785 = vpop.f32.mrb[0].mxu0
        %786 = vmatprep.mubr.f32.mxu0 0.0
        %787 = vmatmul.mubr.f32.gmra.mrb[0].mxu0 %v625
        %v788 = vpop.f32.mrb[0].mxu0
        %v789 = vadd.f32 %v605, %v788
        %v790 = vpop.f32.mrb[0].mxu0
        %791 = vmatprep.mubr.f32.mxu0 0.0
        %792 = vmatmul.mubr.f32.gmra.mrb[0].mxu0 %v628
        %v793 = vpop.f32.mrb[0].mxu0
        %v794 = vadd.f32 %v606, %v793
        %v795 = vpop.f32.mrb[0].mxu0
        %796 = vmatprep.mubr.f32.mxu0 0.0
        %797 = vmatmul.mubr.f32.gmra.mrb[0].mxu0 %v631
        %v798 = vpop.f32.mrb[0].mxu0
        %v799 = vadd.f32 %v607, %v798
        %v800 = vpop.f32.mrb[0].mxu0
        %801 = vmatprep.mubr.f32.mxu0 0.0
        %802 = vmatmul.mubr.f32.gmra.mrb[0].mxu0 %v634
        %v803 = vpop.f32.mrb[0].mxu0
        %v804 = vadd.f32 %v608, %v803
        %v805 = vpop.f32.mrb[0].mxu0
        %806 = vmatprep.mubr.f32.mxu0 0.0
        %807 = vmatmul.mubr.f32.gmra.mrb[0].mxu0 %v637
        %v808 = vpop.f32.mrb[0].mxu0
        %v809 = vadd.f32 %v609, %v808
        %v810 = vpop.f32.mrb[0].mxu0
        %811 = vmatprep.mubr.f32.mxu0 0.0
        %812 = vmatmul.mubr.f32.gmra.mrb[0].mxu0 %v640
        %v813 = vpop.f32.mrb[0].mxu0
        %v814 = vadd.f32 %v610, %v813
        %v815 = vpop.f32.mrb[0].mxu0
        %816 = vmatprep.mubr.f32.mxu0 0.0
        %817 = vmatmul.mubr.f32.gmra.mrb[0].mxu0 %v643
        %v818 = vpop.f32.mrb[0].mxu0
        %v819 = vadd.f32 %v611, %v818
        %v820 = vpop.f32.mrb[0].mxu0
        %821 = vmatprep.mubr.f32.mxu0 0.0
        %822 = vmatmul.mubr.f32.gmra.mrb[0].mxu0 %v646
        %v823 = vpop.f32.mrb[0].mxu0
        %v824 = vadd.f32 %v612, %v823
        %v825 = vpop.f32.mrb[0].mxu0
        %826 = vmatprep.mubr.f32.mxu0 0.0
        %827 = vmatmul.mubr.f32.gmra.mrb[0].mxu0 %v649
        %v828 = vpop.f32.mrb[0].mxu0
        %v829 = vadd.f32 %v613, %v828
        %v830 = vpop.f32.mrb[0].mxu0
        %831 = vmatprep.mubr.f32.mxu0 0.0
        %832 = vmatmul.mubr.f32.gmra.mrb[0].mxu0 %v652
        %v833 = vpop.f32.mrb[0].mxu0
        %v834 = vadd.f32 %v614, %v833
        %v835 = vpop.f32.mrb[0].mxu0
        %836 = vmatprep.mubr.f32.mxu0 0.0
        %837 = vmatmul.mubr.f32.gmra.mrb[0].mxu0 %v655
        %v838 = vpop.f32.mrb[0].mxu0
        %v839 = vadd.f32 %v615, %v838
        %v840 = vpop.f32.mrb[0].mxu0
        %841 = vmatprep.mubr.f32.mxu0 0.0
        %842 = vmatmul.mubr.f32.gmra.mrb[0].mxu0 %v658
        %v843 = vpop.f32.mrb[0].mxu0
        %v844 = vadd.f32 %v616, %v843
        %v845 = vpop.f32.mrb[0].mxu0
        %846 = vmatprep.mubr.f32.mxu0 0.0
        %847 = vmatmul.mubr.f32.gmra.mrb[0].mxu0 %v661
        %v848 = vpop.f32.mrb[0].mxu0
        %v849 = vadd.f32 %v617, %v848
        %v850 = vpop.f32.mrb[0].mxu0
        %851 = vmatprep.mubr.f32.mxu0 0.0
        %852 = vmatmul.mubr.f32.gmra.mrb[0].mxu0 %v664
        %v853 = vpop.f32.mrb[0].mxu0
        %v854 = vadd.f32 %v618, %v853
        %v855 = vpop.f32.mrb[0].mxu0
        %856 = vmatprep.mubr.f32.mxu0 0.0
        %857 = vmatmul.mubr.f32.gmra.mrb[0].mxu0 %v667
        %v858 = vpop.f32.mrb[0].mxu0
        %v859 = vadd.f32 %v619, %v858
        %v860 = vpop.f32.mrb[0].mxu0
        %861 = vdwg.mxu0
        %v862 = vld [vmem:[#allocation2] sm:$0xff]
        %v863 = vld [vmem:[#allocation2 + $0x8] sm:$0xff]
        %v864 = vld [vmem:[#allocation2 + $0x10] sm:$0xff]
        %v865 = vld [vmem:[#allocation2 + $0x18] sm:$0xff]
        %v866 = vld [vmem:[#allocation2 + $0x20] sm:$0xff]
        %v867 = vld [vmem:[#allocation2 + $0x28] sm:$0xff]
        %v868 = vld [vmem:[#allocation2 + $0x30] sm:$0xff]
        %v869 = vld [vmem:[#allocation2 + $0x38] sm:$0xff]
        %v870 = vld [vmem:[#allocation2 + $0x40] sm:$0xff]
        %v871 = vld [vmem:[#allocation2 + $0x48] sm:$0xff]
        %v872 = vld [vmem:[#allocation2 + $0x50] sm:$0xff]
        %v873 = vld [vmem:[#allocation2 + $0x58] sm:$0xff]
        %v874 = vld [vmem:[#allocation2 + $0x60] sm:$0xff]
        %v875 = vld [vmem:[#allocation2 + $0x68] sm:$0xff]
        %v876 = vld [vmem:[#allocation2 + $0x70] sm:$0xff]
        %v877 = vld [vmem:[#allocation2 + $0x78] sm:$0xff]
        %878 = vmax.xlane.f32.xlu0 %v784
        %v879 = vpop.xlane.xlu0 %878
        %880 = vmax.xlane.f32.xlu0 %v789
        %v881 = vpop.xlane.xlu0 %880
        %882 = vmax.xlane.f32.xlu0 %v794
        %v883 = vpop.xlane.xlu0 %882
        %884 = vmax.xlane.f32.xlu0 %v799
        %v885 = vpop.xlane.xlu0 %884
        %886 = vmax.xlane.f32.xlu0 %v804
        %v887 = vpop.xlane.xlu0 %886
        %888 = vmax.xlane.f32.xlu0 %v809
        %v889 = vpop.xlane.xlu0 %888
        %890 = vmax.xlane.f32.xlu0 %v814
        %v891 = vpop.xlane.xlu0 %890
        %892 = vmax.xlane.f32.xlu0 %v819
        %v893 = vpop.xlane.xlu0 %892
        %894 = vmax.xlane.f32.xlu0 %v824
        %v895 = vpop.xlane.xlu0 %894
        %896 = vmax.xlane.f32.xlu0 %v829
        %v897 = vpop.xlane.xlu0 %896
        %898 = vmax.xlane.f32.xlu0 %v834
        %v899 = vpop.xlane.xlu0 %898
        %900 = vmax.xlane.f32.xlu0 %v839
        %v901 = vpop.xlane.xlu0 %900
        %902 = vmax.xlane.f32.xlu0 %v844
        %v903 = vpop.xlane.xlu0 %902
        %904 = vmax.xlane.f32.xlu0 %v849
        %v905 = vpop.xlane.xlu0 %904
        %906 = vmax.xlane.f32.xlu0 %v854
        %v907 = vpop.xlane.xlu0 %906
        %908 = vmax.xlane.f32.xlu0 %v859
        %v909 = vpop.xlane.xlu0 %908
        %v910 = vmax.f32 %v862, %v879
        %v911 = vmax.f32 %v863, %v881
        %v912 = vmax.f32 %v864, %v883
        %v913 = vmax.f32 %v865, %v885
        %v914 = vmax.f32 %v866, %v887
        %v915 = vmax.f32 %v867, %v889
        %v916 = vmax.f32 %v868, %v891
        %v917 = vmax.f32 %v869, %v893
        %v918 = vmax.f32 %v870, %v895
        %v919 = vmax.f32 %v871, %v897
        %v920 = vmax.f32 %v872, %v899
        %v921 = vmax.f32 %v873, %v901
        %v922 = vmax.f32 %v874, %v903
        %v923 = vmax.f32 %v875, %v905
        %v924 = vmax.f32 %v876, %v907
        %v925 = vmax.f32 %v877, %v909
        %v926 = vsub.f32 %v862, %v910
        %v927 = vsub.f32 %v863, %v911
        %v928 = vsub.f32 %v864, %v912
        %v929 = vsub.f32 %v865, %v913
        %v930 = vsub.f32 %v866, %v914
        %v931 = vsub.f32 %v867, %v915
        %v932 = vsub.f32 %v868, %v916
        %v933 = vsub.f32 %v869, %v917
        %v934 = vsub.f32 %v870, %v918
        %v935 = vsub.f32 %v871, %v919
        %v936 = vsub.f32 %v872, %v920
        %v937 = vsub.f32 %v873, %v921
        %v938 = vsub.f32 %v874, %v922
        %v939 = vsub.f32 %v875, %v923
        %v940 = vsub.f32 %v876, %v924
        %v941 = vsub.f32 %v877, %v925
        %v942 = vmul.f32 %v926, 1.442695
        %v943 = vpow.pop %v942
        %v944 = vmul.f32 %v927, 1.442695
        %v945 = vpow.pop %v944
        %v946 = vmul.f32 %v928, 1.442695
        %v947 = vpow.pop %v946
        %v948 = vmul.f32 %v929, 1.442695
        %v949 = vpow.pop %v948
        %v950 = vmul.f32 %v930, 1.442695
        %v951 = vpow.pop %v950
        %v952 = vmul.f32 %v931, 1.442695
        %v953 = vpow.pop %v952
        %v954 = vmul.f32 %v932, 1.442695
        %v955 = vpow.pop %v954
        %v956 = vmul.f32 %v933, 1.442695
        %v957 = vpow.pop %v956
        %v958 = vmul.f32 %v934, 1.442695
        %v959 = vpow.pop %v958
        %v960 = vmul.f32 %v935, 1.442695
        %v961 = vpow.pop %v960
        %v962 = vmul.f32 %v936, 1.442695
        %v963 = vpow.pop %v962
        %v964 = vmul.f32 %v937, 1.442695
        %v965 = vpow.pop %v964
        %v966 = vmul.f32 %v938, 1.442695
        %v967 = vpow.pop %v966
        %v968 = vmul.f32 %v939, 1.442695
        %v969 = vpow.pop %v968
        %v970 = vmul.f32 %v940, 1.442695
        %v971 = vpow.pop %v970
        %v972 = vmul.f32 %v941, 1.442695
        %v973 = vpow.pop %v972
        %975 = vset.pattern.permute.xlu0 0
        %976 = vperm.xlu0 %975, %v910
        %v977 = vpop.permute.xlu0 %976
        %980 = vset.pattern.permute.xlu0 0
        %981 = vperm.xlu0 %980, %v911
        %v982 = vpop.permute.xlu0 %981
        %985 = vset.pattern.permute.xlu0 0
        %986 = vperm.xlu0 %985, %v912
        %v987 = vpop.permute.xlu0 %986
        %990 = vset.pattern.permute.xlu0 0
        %991 = vperm.xlu0 %990, %v913
        %v992 = vpop.permute.xlu0 %991
        %995 = vset.pattern.permute.xlu0 0
        %996 = vperm.xlu0 %995, %v914
        %v997 = vpop.permute.xlu0 %996
        %1000 = vset.pattern.permute.xlu0 0
        %1001 = vperm.xlu0 %1000, %v915
        %v1002 = vpop.permute.xlu0 %1001
        %1005 = vset.pattern.permute.xlu0 0
        %1006 = vperm.xlu0 %1005, %v916
        %v1007 = vpop.permute.xlu0 %1006
        %1010 = vset.pattern.permute.xlu0 0
        %1011 = vperm.xlu0 %1010, %v917
        %v1012 = vpop.permute.xlu0 %1011
        %1015 = vset.pattern.permute.xlu0 0
        %1016 = vperm.xlu0 %1015, %v918
        %v1017 = vpop.permute.xlu0 %1016
        %1020 = vset.pattern.permute.xlu0 0
        %1021 = vperm.xlu0 %1020, %v919
        %v1022 = vpop.permute.xlu0 %1021
        %1025 = vset.pattern.permute.xlu0 0
        %1026 = vperm.xlu0 %1025, %v920
        %v1027 = vpop.permute.xlu0 %1026
        %1030 = vset.pattern.permute.xlu0 0
        %1031 = vperm.xlu0 %1030, %v921
        %v1032 = vpop.permute.xlu0 %1031
        %1035 = vset.pattern.permute.xlu0 0
        %1036 = vperm.xlu0 %1035, %v922
        %v1037 = vpop.permute.xlu0 %1036
        %1040 = vset.pattern.permute.xlu0 0
        %1041 = vperm.xlu0 %1040, %v923
        %v1042 = vpop.permute.xlu0 %1041
        %1045 = vset.pattern.permute.xlu0 0
        %1046 = vperm.xlu0 %1045, %v924
        %v1047 = vpop.permute.xlu0 %1046
        %1050 = vset.pattern.permute.xlu0 0
        %1051 = vperm.xlu0 %1050, %v925
        %v1052 = vpop.permute.xlu0 %1051
        %v1054 = vsub.f32 %v784, %v977
        %v1055 = vsub.f32 %v789, %v982
        %v1056 = vsub.f32 %v794, %v987
        %v1057 = vsub.f32 %v799, %v992
        %v1058 = vsub.f32 %v804, %v997
        %v1059 = vsub.f32 %v809, %v1002
        %v1060 = vsub.f32 %v814, %v1007
        %v1061 = vsub.f32 %v819, %v1012
        %v1062 = vsub.f32 %v824, %v1017
        %v1063 = vsub.f32 %v829, %v1022
        %v1064 = vsub.f32 %v834, %v1027
        %v1065 = vsub.f32 %v839, %v1032
        %v1066 = vsub.f32 %v844, %v1037
        %v1067 = vsub.f32 %v849, %v1042
        %v1068 = vsub.f32 %v854, %v1047
        %v1069 = vsub.f32 %v859, %v1052
        %v1070 = vmul.f32 %v1054, 1.442695
        %v1071 = vpow.pop %v1070
        %v1072 = vmul.f32 %v1055, 1.442695
        %v1073 = vpow.pop %v1072
        %v1074 = vmul.f32 %v1056, 1.442695
        %v1075 = vpow.pop %v1074
        %v1076 = vmul.f32 %v1057, 1.442695
        %v1077 = vpow.pop %v1076
        %v1078 = vmul.f32 %v1058, 1.442695
        %v1079 = vpow.pop %v1078
        %v1080 = vmul.f32 %v1059, 1.442695
        %v1081 = vpow.pop %v1080
        %v1082 = vmul.f32 %v1060, 1.442695
        %v1083 = vpow.pop %v1082
        %v1084 = vmul.f32 %v1061, 1.442695
        %v1085 = vpow.pop %v1084
        %v1086 = vmul.f32 %v1062, 1.442695
        %v1087 = vpow.pop %v1086
        %v1088 = vmul.f32 %v1063, 1.442695
        %v1089 = vpow.pop %v1088
        %v1090 = vmul.f32 %v1064, 1.442695
        %v1091 = vpow.pop %v1090
        %v1092 = vmul.f32 %v1065, 1.442695
        %v1093 = vpow.pop %v1092
        %v1094 = vmul.f32 %v1066, 1.442695
        %v1095 = vpow.pop %v1094
        %v1096 = vmul.f32 %v1067, 1.442695
        %v1097 = vpow.pop %v1096
        %v1098 = vmul.f32 %v1068, 1.442695
        %v1099 = vpow.pop %v1098
        %v1100 = vmul.f32 %v1069, 1.442695
        %v1101 = vpow.pop %v1100
        %v1102 = vld [vmem:[#allocation3] sm:$0xff]
        %v1103 = vld [vmem:[#allocation3 + $0x8] sm:$0xff]
        %v1104 = vld [vmem:[#allocation3 + $0x10] sm:$0xff]
        %v1105 = vld [vmem:[#allocation3 + $0x18] sm:$0xff]
        %v1106 = vld [vmem:[#allocation3 + $0x20] sm:$0xff]
        %v1107 = vld [vmem:[#allocation3 + $0x28] sm:$0xff]
        %v1108 = vld [vmem:[#allocation3 + $0x30] sm:$0xff]
        %v1109 = vld [vmem:[#allocation3 + $0x38] sm:$0xff]
        %v1110 = vld [vmem:[#allocation3 + $0x40] sm:$0xff]
        %v1111 = vld [vmem:[#allocation3 + $0x48] sm:$0xff]
        %v1112 = vld [vmem:[#allocation3 + $0x50] sm:$0xff]
        %v1113 = vld [vmem:[#allocation3 + $0x58] sm:$0xff]
        %v1114 = vld [vmem:[#allocation3 + $0x60] sm:$0xff]
        %v1115 = vld [vmem:[#allocation3 + $0x68] sm:$0xff]
        %v1116 = vld [vmem:[#allocation3 + $0x70] sm:$0xff]
        %v1117 = vld [vmem:[#allocation3 + $0x78] sm:$0xff]
        %v1118 = vmul.f32 %v943, %v1102
        %v1119 = vmul.f32 %v945, %v1103
        %v1120 = vmul.f32 %v947, %v1104
        %v1121 = vmul.f32 %v949, %v1105
        %v1122 = vmul.f32 %v951, %v1106
        %v1123 = vmul.f32 %v953, %v1107
        %v1124 = vmul.f32 %v955, %v1108
        %v1125 = vmul.f32 %v957, %v1109
        %v1126 = vmul.f32 %v959, %v1110
        %v1127 = vmul.f32 %v961, %v1111
        %v1128 = vmul.f32 %v963, %v1112
        %v1129 = vmul.f32 %v965, %v1113
        %v1130 = vmul.f32 %v967, %v1114
        %v1131 = vmul.f32 %v969, %v1115
        %v1132 = vmul.f32 %v971, %v1116
        %v1133 = vmul.f32 %v973, %v1117
        %1134 = vadd.xlane.f32.xlu0 %v1071
        %v1135 = vpop.xlane.xlu0 %1134
        %1136 = vadd.xlane.f32.xlu0 %v1073
        %v1137 = vpop.xlane.xlu0 %1136
        %1138 = vadd.xlane.f32.xlu0 %v1075
        %v1139 = vpop.xlane.xlu0 %1138
        %1140 = vadd.xlane.f32.xlu0 %v1077
        %v1141 = vpop.xlane.xlu0 %1140
        %1142 = vadd.xlane.f32.xlu0 %v1079
        %v1143 = vpop.xlane.xlu0 %1142
        %1144 = vadd.xlane.f32.xlu0 %v1081
        %v1145 = vpop.xlane.xlu0 %1144
        %1146 = vadd.xlane.f32.xlu0 %v1083
        %v1147 = vpop.xlane.xlu0 %1146
        %1148 = vadd.xlane.f32.xlu0 %v1085
        %v1149 = vpop.xlane.xlu0 %1148
        %1150 = vadd.xlane.f32.xlu0 %v1087
        %v1151 = vpop.xlane.xlu0 %1150
        %1152 = vadd.xlane.f32.xlu0 %v1089
        %v1153 = vpop.xlane.xlu0 %1152
        %1154 = vadd.xlane.f32.xlu0 %v1091
        %v1155 = vpop.xlane.xlu0 %1154
        %1156 = vadd.xlane.f32.xlu0 %v1093
        %v1157 = vpop.xlane.xlu0 %1156
        %1158 = vadd.xlane.f32.xlu0 %v1095
        %v1159 = vpop.xlane.xlu0 %1158
        %1160 = vadd.xlane.f32.xlu0 %v1097
        %v1161 = vpop.xlane.xlu0 %1160
        %1162 = vadd.xlane.f32.xlu0 %v1099
        %v1163 = vpop.xlane.xlu0 %1162
        %1164 = vadd.xlane.f32.xlu0 %v1101
        %v1165 = vpop.xlane.xlu0 %1164
        %v1166 = vadd.f32 %v1118, %v1135
        %v1167 = vadd.f32 %v1119, %v1137
        %v1168 = vadd.f32 %v1120, %v1139
        %v1169 = vadd.f32 %v1121, %v1141
        %v1170 = vadd.f32 %v1122, %v1143
        %v1171 = vadd.f32 %v1123, %v1145
        %v1172 = vadd.f32 %v1124, %v1147
        %v1173 = vadd.f32 %v1125, %v1149
        %v1174 = vadd.f32 %v1126, %v1151
        %v1175 = vadd.f32 %v1127, %v1153
        %v1176 = vadd.f32 %v1128, %v1155
        %v1177 = vadd.f32 %v1129, %v1157
        %v1178 = vadd.f32 %v1130, %v1159
        %v1179 = vadd.f32 %v1131, %v1161
        %v1180 = vadd.f32 %v1132, %v1163
        %v1181 = vadd.f32 %v1133, %v1165
        %vm1182 = vcmask 7168
        %1183 = vst.msk [vmem:[#allocation3] sm:$0xff] %vm1182, %v1166
        %1184 = vst.msk [vmem:[#allocation3 + $0x8] sm:$0xff] %vm1182, %v1167
        %1185 = vst.msk [vmem:[#allocation3 + $0x10] sm:$0xff] %vm1182, %v1168
        %1186 = vst.msk [vmem:[#allocation3 + $0x18] sm:$0xff] %vm1182, %v1169
        %1187 = vst.msk [vmem:[#allocation3 + $0x20] sm:$0xff] %vm1182, %v1170
        %1188 = vst.msk [vmem:[#allocation3 + $0x28] sm:$0xff] %vm1182, %v1171
        %1189 = vst.msk [vmem:[#allocation3 + $0x30] sm:$0xff] %vm1182, %v1172
        %1190 = vst.msk [vmem:[#allocation3 + $0x38] sm:$0xff] %vm1182, %v1173
        %1191 = vst.msk [vmem:[#allocation3 + $0x40] sm:$0xff] %vm1182, %v1174
        %1192 = vst.msk [vmem:[#allocation3 + $0x48] sm:$0xff] %vm1182, %v1175
        %1193 = vst.msk [vmem:[#allocation3 + $0x50] sm:$0xff] %vm1182, %v1176
        %1194 = vst.msk [vmem:[#allocation3 + $0x58] sm:$0xff] %vm1182, %v1177
        %1195 = vst.msk [vmem:[#allocation3 + $0x60] sm:$0xff] %vm1182, %v1178
        %1196 = vst.msk [vmem:[#allocation3 + $0x68] sm:$0xff] %vm1182, %v1179
        %1197 = vst.msk [vmem:[#allocation3 + $0x70] sm:$0xff] %vm1182, %v1180
        %1198 = vst.msk [vmem:[#allocation3 + $0x78] sm:$0xff] %vm1182, %v1181
        %1199 = vmatprep.subr.mxu0 0.0
        %1200 = vmatpush1.msra.mxu0 %v588
        %1201 = vmatprep.subr.mxu0 0.0
        %1202 = vmatpush1.msra.mxu0 %v589
        %1203 = vmatprep.subr.mxu0 0.0
        %1204 = vmatpush1.msra.mxu0 %v590
        %1205 = vmatprep.subr.mxu0 0.0
        %1206 = vmatpush1.msra.mxu0 %v591
        %1207 = vmatprep.subr.mxu0 0.0
        %1208 = vmatpush1.msra.mxu0 %v592
        %1209 = vmatprep.subr.mxu0 0.0
        %1210 = vmatpush1.msra.mxu0 %v593
        %1211 = vmatprep.subr.mxu0 0.0
        %1212 = vmatpush1.msra.mxu0 %v594
        %1213 = vmatprep.subr.mxu0 0.0
        %1214 = vmatpush1.msra.mxu0 %v595
        %1215 = vmatprep.subr.mxu0 0.0
        %1216 = vmatpush1.msra.mxu0 %v596
        %1217 = vmatprep.subr.mxu0 0.0
        %1218 = vmatpush1.msra.mxu0 %v597
        %1219 = vmatprep.subr.mxu0 0.0
        %1220 = vmatpush1.msra.mxu0 %v598
        %1221 = vmatprep.subr.mxu0 0.0
        %1222 = vmatpush1.msra.mxu0 %v599
        %1223 = vmatprep.subr.mxu0 0.0
        %1224 = vmatpush1.msra.mxu0 %v600
        %1225 = vmatprep.subr.mxu0 0.0
        %1226 = vmatpush1.msra.mxu0 %v601
        %1227 = vmatprep.subr.mxu0 0.0
        %1228 = vmatpush1.msra.mxu0 %v602
        %1229 = vmatprep.subr.mxu0 0.0
        %1230 = vmatpush1.msra.mxu0 %v603
        %1231 = vmatprep.subr.mxu0 0.0
        %1232 = vmatpush1.msra.mxu0 0.0
        %1233 = vmatprep.subr.mxu0 0.0
        %1234 = vmatpush1.msra.mxu0 0.0
        %1235 = vmatprep.subr.mxu0 0.0
        %1236 = vmatpush1.msra.mxu0 0.0
        %1237 = vmatprep.subr.mxu0 0.0
        %1238 = vmatpush1.msra.mxu0 0.0
        %1239 = vmatprep.subr.mxu0 0.0
        %1240 = vmatpush1.msra.mxu0 0.0
        %1241 = vmatprep.subr.mxu0 0.0
        %1242 = vmatpush1.msra.mxu0 0.0
        %1243 = vmatprep.subr.mxu0 0.0
        %1244 = vmatpush1.msra.mxu0 0.0
        %1245 = vmatprep.subr.mxu0 0.0
        %1246 = vmatpush1.msra.mxu0 0.0
        %1247 = vmatprep.subr.mxu0 0.0
        %1248 = vmatpush1.msra.mxu0 0.0
        %1249 = vmatprep.subr.mxu0 0.0
        %1250 = vmatpush1.msra.mxu0 0.0
        %1251 = vmatprep.subr.mxu0 0.0
        %1252 = vmatpush1.msra.mxu0 0.0
        %1253 = vmatprep.subr.mxu0 0.0
        %1254 = vmatpush1.msra.mxu0 0.0
        %1255 = vmatprep.subr.mxu0 0.0
        %1256 = vmatpush1.msra.mxu0 0.0
        %1257 = vmatprep.subr.mxu0 0.0
        %1258 = vmatpush1.msra.mxu0 0.0
        %1259 = vmatprep.subr.mxu0 0.0
        %1260 = vmatpush1.msra.mxu0 0.0
        %1261 = vmatprep.subr.mxu0 0.0
        %1262 = vmatpush1.msra.mxu0 0.0
        %1263 = vmatprep.mubr.f32.mxu0 0.0
        %1264 = vmatmul.mubr.f32.gmra.mrb[0].mxu0 %v1071
        %v1265 = vpop.f32.mrb[0].mxu0
        %v1266 = vadd.f32 0.0, %v1265
        %v1267 = vpop.f32.mrb[0].mxu0
        %1268 = vmatprep.mubr.f32.mxu0 0.0
        %1269 = vmatmul.mubr.f32.gmra.mrb[0].mxu0 %v1073
        %v1270 = vpop.f32.mrb[0].mxu0
        %v1271 = vadd.f32 0.0, %v1270
        %v1272 = vpop.f32.mrb[0].mxu0
        %1273 = vmatprep.mubr.f32.mxu0 0.0
        %1274 = vmatmul.mubr.f32.gmra.mrb[0].mxu0 %v1075
        %v1275 = vpop.f32.mrb[0].mxu0
        %v1276 = vadd.f32 0.0, %v1275
        %v1277 = vpop.f32.mrb[0].mxu0
        %1278 = vmatprep.mubr.f32.mxu0 0.0
        %1279 = vmatmul.mubr.f32.gmra.mrb[0].mxu0 %v1077
        %v1280 = vpop.f32.mrb[0].mxu0
        %v1281 = vadd.f32 0.0, %v1280
        %v1282 = vpop.f32.mrb[0].mxu0
        %1283 = vmatprep.mubr.f32.mxu0 0.0
        %1284 = vmatmul.mubr.f32.gmra.mrb[0].mxu0 %v1079
        %v1285 = vpop.f32.mrb[0].mxu0
        %v1286 = vadd.f32 0.0, %v1285
        %v1287 = vpop.f32.mrb[0].mxu0
        %1288 = vmatprep.mubr.f32.mxu0 0.0
        %1289 = vmatmul.mubr.f32.gmra.mrb[0].mxu0 %v1081
        %v1290 = vpop.f32.mrb[0].mxu0
        %v1291 = vadd.f32 0.0, %v1290
        %v1292 = vpop.f32.mrb[0].mxu0
        %1293 = vmatprep.mubr.f32.mxu0 0.0
        %1294 = vmatmul.mubr.f32.gmra.mrb[0].mxu0 %v1083
        %v1295 = vpop.f32.mrb[0].mxu0
        %v1296 = vadd.f32 0.0, %v1295
        %v1297 = vpop.f32.mrb[0].mxu0
        %1298 = vmatprep.mubr.f32.mxu0 0.0
        %1299 = vmatmul.mubr.f32.gmra.mrb[0].mxu0 %v1085
        %v1300 = vpop.f32.mrb[0].mxu0
        %v1301 = vadd.f32 0.0, %v1300
        %v1302 = vpop.f32.mrb[0].mxu0
        %1303 = vmatprep.mubr.f32.mxu0 0.0
        %1304 = vmatmul.mubr.f32.gmra.mrb[0].mxu0 %v1087
        %v1305 = vpop.f32.mrb[0].mxu0
        %v1306 = vadd.f32 0.0, %v1305
        %v1307 = vpop.f32.mrb[0].mxu0
        %1308 = vmatprep.mubr.f32.mxu0 0.0
        %1309 = vmatmul.mubr.f32.gmra.mrb[0].mxu0 %v1089
        %v1310 = vpop.f32.mrb[0].mxu0
        %v1311 = vadd.f32 0.0, %v1310
        %v1312 = vpop.f32.mrb[0].mxu0
        %1313 = vmatprep.mubr.f32.mxu0 0.0
        %1314 = vmatmul.mubr.f32.gmra.mrb[0].mxu0 %v1091
        %v1315 = vpop.f32.mrb[0].mxu0
        %v1316 = vadd.f32 0.0, %v1315
        %v1317 = vpop.f32.mrb[0].mxu0
        %1318 = vmatprep.mubr.f32.mxu0 0.0
        %1319 = vmatmul.mubr.f32.gmra.mrb[0].mxu0 %v1093
        %v1320 = vpop.f32.mrb[0].mxu0
        %v1321 = vadd.f32 0.0, %v1320
        %v1322 = vpop.f32.mrb[0].mxu0
        %1323 = vmatprep.mubr.f32.mxu0 0.0
        %1324 = vmatmul.mubr.f32.gmra.mrb[0].mxu0 %v1095
        %v1325 = vpop.f32.mrb[0].mxu0
        %v1326 = vadd.f32 0.0, %v1325
        %v1327 = vpop.f32.mrb[0].mxu0
        %1328 = vmatprep.mubr.f32.mxu0 0.0
        %1329 = vmatmul.mubr.f32.gmra.mrb[0].mxu0 %v1097
        %v1330 = vpop.f32.mrb[0].mxu0
        %v1331 = vadd.f32 0.0, %v1330
        %v1332 = vpop.f32.mrb[0].mxu0
        %1333 = vmatprep.mubr.f32.mxu0 0.0
        %1334 = vmatmul.mubr.f32.gmra.mrb[0].mxu0 %v1099
        %v1335 = vpop.f32.mrb[0].mxu0
        %v1336 = vadd.f32 0.0, %v1335
        %v1337 = vpop.f32.mrb[0].mxu0
        %1338 = vmatprep.mubr.f32.mxu0 0.0
        %1339 = vmatmul.mubr.f32.gmra.mrb[0].mxu0 %v1101
        %v1340 = vpop.f32.mrb[0].mxu0
        %v1341 = vadd.f32 0.0, %v1340
        %v1342 = vpop.f32.mrb[0].mxu0
        %1343 = vdwg.mxu0
        %v1344 = vld [vmem:[#allocation4] sm:$0xff]
        %v1345 = vld [vmem:[#allocation4 + $0x8] sm:$0xff]
        %v1346 = vld [vmem:[#allocation4 + $0x10] sm:$0xff]
        %v1347 = vld [vmem:[#allocation4 + $0x18] sm:$0xff]
        %v1348 = vld [vmem:[#allocation4 + $0x20] sm:$0xff]
        %v1349 = vld [vmem:[#allocation4 + $0x28] sm:$0xff]
        %v1350 = vld [vmem:[#allocation4 + $0x30] sm:$0xff]
        %v1351 = vld [vmem:[#allocation4 + $0x38] sm:$0xff]
        %v1352 = vld [vmem:[#allocation4 + $0x40] sm:$0xff]
        %v1353 = vld [vmem:[#allocation4 + $0x48] sm:$0xff]
        %v1354 = vld [vmem:[#allocation4 + $0x50] sm:$0xff]
        %v1355 = vld [vmem:[#allocation4 + $0x58] sm:$0xff]
        %v1356 = vld [vmem:[#allocation4 + $0x60] sm:$0xff]
        %v1357 = vld [vmem:[#allocation4 + $0x68] sm:$0xff]
        %v1358 = vld [vmem:[#allocation4 + $0x70] sm:$0xff]
        %v1359 = vld [vmem:[#allocation4 + $0x78] sm:$0xff]
        %1361 = vset.pattern.permute.xlu0 0
        %1362 = vperm.xlu0 %1361, %v943
        %v1363 = vpop.permute.xlu0 %1362
        %1366 = vset.pattern.permute.xlu0 0
        %1367 = vperm.xlu0 %1366, %v945
        %v1368 = vpop.permute.xlu0 %1367
        %1371 = vset.pattern.permute.xlu0 0
        %1372 = vperm.xlu0 %1371, %v947
        %v1373 = vpop.permute.xlu0 %1372
        %1376 = vset.pattern.permute.xlu0 0
        %1377 = vperm.xlu0 %1376, %v949
        %v1378 = vpop.permute.xlu0 %1377
        %1381 = vset.pattern.permute.xlu0 0
        %1382 = vperm.xlu0 %1381, %v951
        %v1383 = vpop.permute.xlu0 %1382
        %1386 = vset.pattern.permute.xlu0 0
        %1387 = vperm.xlu0 %1386, %v953
        %v1388 = vpop.permute.xlu0 %1387
        %1391 = vset.pattern.permute.xlu0 0
        %1392 = vperm.xlu0 %1391, %v955
        %v1393 = vpop.permute.xlu0 %1392
        %1396 = vset.pattern.permute.xlu0 0
        %1397 = vperm.xlu0 %1396, %v957
        %v1398 = vpop.permute.xlu0 %1397
        %1401 = vset.pattern.permute.xlu0 0
        %1402 = vperm.xlu0 %1401, %v959
        %v1403 = vpop.permute.xlu0 %1402
        %1406 = vset.pattern.permute.xlu0 0
        %1407 = vperm.xlu0 %1406, %v961
        %v1408 = vpop.permute.xlu0 %1407
        %1411 = vset.pattern.permute.xlu0 0
        %1412 = vperm.xlu0 %1411, %v963
        %v1413 = vpop.permute.xlu0 %1412
        %1416 = vset.pattern.permute.xlu0 0
        %1417 = vperm.xlu0 %1416, %v965
        %v1418 = vpop.permute.xlu0 %1417
        %1421 = vset.pattern.permute.xlu0 0
        %1422 = vperm.xlu0 %1421, %v967
        %v1423 = vpop.permute.xlu0 %1422
        %1426 = vset.pattern.permute.xlu0 0
        %1427 = vperm.xlu0 %1426, %v969
        %v1428 = vpop.permute.xlu0 %1427
        %1431 = vset.pattern.permute.xlu0 0
        %1432 = vperm.xlu0 %1431, %v971
        %v1433 = vpop.permute.xlu0 %1432
        %1436 = vset.pattern.permute.xlu0 0
        %1437 = vperm.xlu0 %1436, %v973
        %v1438 = vpop.permute.xlu0 %1437
        %v1440 = vmul.f32 %v1363, %v1344
        %v1441 = vmul.f32 %v1368, %v1345
        %v1442 = vmul.f32 %v1373, %v1346
        %v1443 = vmul.f32 %v1378, %v1347
        %v1444 = vmul.f32 %v1383, %v1348
        %v1445 = vmul.f32 %v1388, %v1349
        %v1446 = vmul.f32 %v1393, %v1350
        %v1447 = vmul.f32 %v1398, %v1351
        %v1448 = vmul.f32 %v1403, %v1352
        %v1449 = vmul.f32 %v1408, %v1353
        %v1450 = vmul.f32 %v1413, %v1354
        %v1451 = vmul.f32 %v1418, %v1355
        %v1452 = vmul.f32 %v1423, %v1356
        %v1453 = vmul.f32 %v1428, %v1357
        %v1454 = vmul.f32 %v1433, %v1358
        %v1455 = vmul.f32 %v1438, %v1359
        %v1456 = vadd.f32 %v1440, %v1266
        %v1457 = vadd.f32 %v1441, %v1271
        %v1458 = vadd.f32 %v1442, %v1276
        %v1459 = vadd.f32 %v1443, %v1281
        %v1460 = vadd.f32 %v1444, %v1286
        %v1461 = vadd.f32 %v1445, %v1291
        %v1462 = vadd.f32 %v1446, %v1296
        %v1463 = vadd.f32 %v1447, %v1301
        %v1464 = vadd.f32 %v1448, %v1306
        %v1465 = vadd.f32 %v1449, %v1311
        %v1466 = vadd.f32 %v1450, %v1316
        %v1467 = vadd.f32 %v1451, %v1321
        %v1468 = vadd.f32 %v1452, %v1326
        %v1469 = vadd.f32 %v1453, %v1331
        %v1470 = vadd.f32 %v1454, %v1336
        %v1471 = vadd.f32 %v1455, %v1341
        %1472 = vst.msk [vmem:[#allocation4] sm:$0xff] %vm620, %v1456
        %1473 = vst.msk [vmem:[#allocation4 + $0x8] sm:$0xff] %vm620, %v1457
        %1474 = vst.msk [vmem:[#allocation4 + $0x10] sm:$0xff] %vm620, %v1458
        %1475 = vst.msk [vmem:[#allocation4 + $0x18] sm:$0xff] %vm620, %v1459
        %1476 = vst.msk [vmem:[#allocation4 + $0x20] sm:$0xff] %vm620, %v1460
        %1477 = vst.msk [vmem:[#allocation4 + $0x28] sm:$0xff] %vm620, %v1461
        %1478 = vst.msk [vmem:[#allocation4 + $0x30] sm:$0xff] %vm620, %v1462
        %1479 = vst.msk [vmem:[#allocation4 + $0x38] sm:$0xff] %vm620, %v1463
        %1480 = vst.msk [vmem:[#allocation4 + $0x40] sm:$0xff] %vm620, %v1464
        %1481 = vst.msk [vmem:[#allocation4 + $0x48] sm:$0xff] %vm620, %v1465
        %1482 = vst.msk [vmem:[#allocation4 + $0x50] sm:$0xff] %vm620, %v1466
        %1483 = vst.msk [vmem:[#allocation4 + $0x58] sm:$0xff] %vm620, %v1467
        %1484 = vst.msk [vmem:[#allocation4 + $0x60] sm:$0xff] %vm620, %v1468
        %1485 = vst.msk [vmem:[#allocation4 + $0x68] sm:$0xff] %vm620, %v1469
        %1486 = vst.msk [vmem:[#allocation4 + $0x70] sm:$0xff] %vm620, %v1470
        %1487 = vst.msk [vmem:[#allocation4 + $0x78] sm:$0xff] %vm620, %v1471
        %1488 = vst.msk [vmem:[#allocation2] sm:$0xff] %vm1182, %v910
        %1489 = vst.msk [vmem:[#allocation2 + $0x8] sm:$0xff] %vm1182, %v911
        %1490 = vst.msk [vmem:[#allocation2 + $0x10] sm:$0xff] %vm1182, %v912
        %1491 = vst.msk [vmem:[#allocation2 + $0x18] sm:$0xff] %vm1182, %v913
        %1492 = vst.msk [vmem:[#allocation2 + $0x20] sm:$0xff] %vm1182, %v914
        %1493 = vst.msk [vmem:[#allocation2 + $0x28] sm:$0xff] %vm1182, %v915
        %1494 = vst.msk [vmem:[#allocation2 + $0x30] sm:$0xff] %vm1182, %v916
        %1495 = vst.msk [vmem:[#allocation2 + $0x38] sm:$0xff] %vm1182, %v917
        %1496 = vst.msk [vmem:[#allocation2 + $0x40] sm:$0xff] %vm1182, %v918
        %1497 = vst.msk [vmem:[#allocation2 + $0x48] sm:$0xff] %vm1182, %v919
        %1498 = vst.msk [vmem:[#allocation2 + $0x50] sm:$0xff] %vm1182, %v920
        %1499 = vst.msk [vmem:[#allocation2 + $0x58] sm:$0xff] %vm1182, %v921
        %1500 = vst.msk [vmem:[#allocation2 + $0x60] sm:$0xff] %vm1182, %v922
        %1501 = vst.msk [vmem:[#allocation2 + $0x68] sm:$0xff] %vm1182, %v923
        %1502 = vst.msk [vmem:[#allocation2 + $0x70] sm:$0xff] %vm1182, %v924
        %1503 = vst.msk [vmem:[#allocation2 + $0x78] sm:$0xff] %vm1182, %v925
        %v1504 = vld [vmem:[%s357] sm:$0xff]
        %v1505 = vld [vmem:[%s357 + $0x8] sm:$0xff]
        %v1506 = vld [vmem:[%s357 + $0x10] sm:$0xff]
        %v1507 = vld [vmem:[%s357 + $0x18] sm:$0xff]
        %v1508 = vld [vmem:[%s357 + $0x20] sm:$0xff]
        %v1509 = vld [vmem:[%s357 + $0x28] sm:$0xff]
        %v1510 = vld [vmem:[%s357 + $0x30] sm:$0xff]
        %v1511 = vld [vmem:[%s357 + $0x38] sm:$0xff]
        %v1512 = vld [vmem:[%s357 + $0x40] sm:$0xff]
        %v1513 = vld [vmem:[%s357 + $0x48] sm:$0xff]
        %v1514 = vld [vmem:[%s357 + $0x50] sm:$0xff]
        %v1515 = vld [vmem:[%s357 + $0x58] sm:$0xff]
        %v1516 = vld [vmem:[%s357 + $0x60] sm:$0xff]
        %v1517 = vld [vmem:[%s357 + $0x68] sm:$0xff]
        %v1518 = vld [vmem:[%s357 + $0x70] sm:$0xff]
        %v1519 = vld [vmem:[%s357 + $0x78] sm:$0xff]
        %v1520 = vmul.f32 %v1504, 2.828427
        %v1521 = vmul.f32 %v1505, 2.828427
        %v1522 = vmul.f32 %v1506, 2.828427
        %v1523 = vmul.f32 %v1507, 2.828427
        %v1524 = vmul.f32 %v1508, 2.828427
        %v1525 = vmul.f32 %v1509, 2.828427
        %v1526 = vmul.f32 %v1510, 2.828427
        %v1527 = vmul.f32 %v1511, 2.828427
        %v1528 = vmul.f32 %v1512, 2.828427
        %v1529 = vmul.f32 %v1513, 2.828427
        %v1530 = vmul.f32 %v1514, 2.828427
        %v1531 = vmul.f32 %v1515, 2.828427
        %v1532 = vmul.f32 %v1516, 2.828427
        %v1533 = vmul.f32 %v1517, 2.828427
        %v1534 = vmul.f32 %v1518, 2.828427
        %v1535 = vmul.f32 %v1519, 2.828427
        %v1536 = vld [vmem:[%s367] sm:$0xff]
        %v1537 = vld [vmem:[%s367 + $0x8] sm:$0xff]
        %v1538 = vld [vmem:[%s367 + $0x10] sm:$0xff]
        %v1539 = vld [vmem:[%s367 + $0x18] sm:$0xff]
        %v1540 = vld [vmem:[%s367 + $0x20] sm:$0xff]
        %v1541 = vld [vmem:[%s367 + $0x28] sm:$0xff]
        %v1542 = vld [vmem:[%s367 + $0x30] sm:$0xff]
        %v1543 = vld [vmem:[%s367 + $0x38] sm:$0xff]
        %v1544 = vld [vmem:[%s367 + $0x40] sm:$0xff]
        %v1545 = vld [vmem:[%s367 + $0x48] sm:$0xff]
        %v1546 = vld [vmem:[%s367 + $0x50] sm:$0xff]
        %v1547 = vld [vmem:[%s367 + $0x58] sm:$0xff]
        %v1548 = vld [vmem:[%s367 + $0x60] sm:$0xff]
        %v1549 = vld [vmem:[%s367 + $0x68] sm:$0xff]
        %v1550 = vld [vmem:[%s367 + $0x70] sm:$0xff]
        %v1551 = vld [vmem:[%s367 + $0x78] sm:$0xff]
        %v1552 = vld [vmem:[%s377] sm:$0xff]
        %v1553 = vld [vmem:[%s377 + $0x8] sm:$0xff]
        %v1554 = vld [vmem:[%s377 + $0x10] sm:$0xff]
        %v1555 = vld [vmem:[%s377 + $0x18] sm:$0xff]
        %v1556 = vld [vmem:[%s377 + $0x20] sm:$0xff]
        %v1557 = vld [vmem:[%s377 + $0x28] sm:$0xff]
        %v1558 = vld [vmem:[%s377 + $0x30] sm:$0xff]
        %v1559 = vld [vmem:[%s377 + $0x38] sm:$0xff]
        %v1560 = vld [vmem:[%s377 + $0x40] sm:$0xff]
        %v1561 = vld [vmem:[%s377 + $0x48] sm:$0xff]
        %v1562 = vld [vmem:[%s377 + $0x50] sm:$0xff]
        %v1563 = vld [vmem:[%s377 + $0x58] sm:$0xff]
        %v1564 = vld [vmem:[%s377 + $0x60] sm:$0xff]
        %v1565 = vld [vmem:[%s377 + $0x68] sm:$0xff]
        %v1566 = vld [vmem:[%s377 + $0x70] sm:$0xff]
        %v1567 = vld [vmem:[%s377 + $0x78] sm:$0xff]
        %s1568 = scalar_lea.vmem %s293, 128 [#allocation5]
        %v1569 = vld [vmem:[%s1568] sm:$0xff]
        %v1570 = vld [vmem:[%s1568 + $0x8] sm:$0xff]
        %v1571 = vld [vmem:[%s1568 + $0x10] sm:$0xff]
        %v1572 = vld [vmem:[%s1568 + $0x18] sm:$0xff]
        %v1573 = vld [vmem:[%s1568 + $0x20] sm:$0xff]
        %v1574 = vld [vmem:[%s1568 + $0x28] sm:$0xff]
        %v1575 = vld [vmem:[%s1568 + $0x30] sm:$0xff]
        %v1576 = vld [vmem:[%s1568 + $0x38] sm:$0xff]
        %v1577 = vld [vmem:[%s1568 + $0x40] sm:$0xff]
        %v1578 = vld [vmem:[%s1568 + $0x48] sm:$0xff]
        %v1579 = vld [vmem:[%s1568 + $0x50] sm:$0xff]
        %v1580 = vld [vmem:[%s1568 + $0x58] sm:$0xff]
        %v1581 = vld [vmem:[%s1568 + $0x60] sm:$0xff]
        %v1582 = vld [vmem:[%s1568 + $0x68] sm:$0xff]
        %v1583 = vld [vmem:[%s1568 + $0x70] sm:$0xff]
        %v1584 = vld [vmem:[%s1568 + $0x78] sm:$0xff]
        %1601 = vrot.lane.b32.xlu0 %v1520, 120
        %v1602 = vpop.permute.xlu0 %1601
        %1603 = vrot.lane.b32.xlu0 %v1521, 120
        %v1604 = vpop.permute.xlu0 %1603
        %1605 = vrot.lane.b32.xlu0 %v1522, 120
        %v1606 = vpop.permute.xlu0 %1605
        %1607 = vrot.lane.b32.xlu0 %v1523, 120
        %v1608 = vpop.permute.xlu0 %1607
        %1609 = vrot.lane.b32.xlu0 %v1524, 120
        %v1610 = vpop.permute.xlu0 %1609
        %1611 = vrot.lane.b32.xlu0 %v1525, 120
        %v1612 = vpop.permute.xlu0 %1611
        %1613 = vrot.lane.b32.xlu0 %v1526, 120
        %v1614 = vpop.permute.xlu0 %1613
        %1615 = vrot.lane.b32.xlu0 %v1527, 120
        %v1616 = vpop.permute.xlu0 %1615
        %1617 = vrot.lane.b32.xlu0 %v1528, 120
        %v1618 = vpop.permute.xlu0 %1617
        %1619 = vrot.lane.b32.xlu0 %v1529, 120
        %v1620 = vpop.permute.xlu0 %1619
        %1621 = vrot.lane.b32.xlu0 %v1530, 120
        %v1622 = vpop.permute.xlu0 %1621
        %1623 = vrot.lane.b32.xlu0 %v1531, 120
        %v1624 = vpop.permute.xlu0 %1623
        %1625 = vrot.lane.b32.xlu0 %v1532, 120
        %v1626 = vpop.permute.xlu0 %1625
        %1627 = vrot.lane.b32.xlu0 %v1533, 120
        %v1628 = vpop.permute.xlu0 %1627
        %1629 = vrot.lane.b32.xlu0 %v1534, 120
        %v1630 = vpop.permute.xlu0 %1629
        %1631 = vrot.lane.b32.xlu0 %v1535, 120
        %v1632 = vpop.permute.xlu0 %1631
        %1649 = vrot.lane.b32.xlu0 %v1536, 120
        %v1650 = vpop.permute.xlu0 %1649
        %1651 = vrot.lane.b32.xlu0 %v1537, 120
        %v1652 = vpop.permute.xlu0 %1651
        %1653 = vrot.lane.b32.xlu0 %v1538, 120
        %v1654 = vpop.permute.xlu0 %1653
        %1655 = vrot.lane.b32.xlu0 %v1539, 120
        %v1656 = vpop.permute.xlu0 %1655
        %1657 = vrot.lane.b32.xlu0 %v1540, 120
        %v1658 = vpop.permute.xlu0 %1657
        %1659 = vrot.lane.b32.xlu0 %v1541, 120
        %v1660 = vpop.permute.xlu0 %1659
        %1661 = vrot.lane.b32.xlu0 %v1542, 120
        %v1662 = vpop.permute.xlu0 %1661
        %1663 = vrot.lane.b32.xlu0 %v1543, 120
        %v1664 = vpop.permute.xlu0 %1663
        %1665 = vrot.lane.b32.xlu0 %v1544, 120
        %v1666 = vpop.permute.xlu0 %1665
        %1667 = vrot.lane.b32.xlu0 %v1545, 120
        %v1668 = vpop.permute.xlu0 %1667
        %1669 = vrot.lane.b32.xlu0 %v1546, 120
        %v1670 = vpop.permute.xlu0 %1669
        %1671 = vrot.lane.b32.xlu0 %v1547, 120
        %v1672 = vpop.permute.xlu0 %1671
        %1673 = vrot.lane.b32.xlu0 %v1548, 120
        %v1674 = vpop.permute.xlu0 %1673
        %1675 = vrot.lane.b32.xlu0 %v1549, 120
        %v1676 = vpop.permute.xlu0 %1675
        %1677 = vrot.lane.b32.xlu0 %v1550, 120
        %v1678 = vpop.permute.xlu0 %1677
        %1679 = vrot.lane.b32.xlu0 %v1551, 120
        %v1680 = vpop.permute.xlu0 %1679
        %v1681 = vsel %vm620, %v1602, 0
        %v1683 = vsel %vm620, %v1604, 0
        %v1685 = vsel %vm620, %v1606, 0
        %v1687 = vsel %vm620, %v1608, 0
        %v1689 = vsel %vm620, %v1610, 0
        %v1691 = vsel %vm620, %v1612, 0
        %v1693 = vsel %vm620, %v1614, 0
        %v1695 = vsel %vm620, %v1616, 0
        %v1697 = vsel %vm620, %v1618, 0
        %v1699 = vsel %vm620, %v1620, 0
        %v1701 = vsel %vm620, %v1622, 0
        %v1703 = vsel %vm620, %v1624, 0
        %v1705 = vsel %vm620, %v1626, 0
        %v1707 = vsel %vm620, %v1628, 0
        %v1709 = vsel %vm620, %v1630, 0
        %v1711 = vsel %vm620, %v1632, 0
        %v1713 = vsel %vm620, %v1650, 0
        %v1715 = vsel %vm620, %v1652, 0
        %v1717 = vsel %vm620, %v1654, 0
        %v1719 = vsel %vm620, %v1656, 0
        %v1721 = vsel %vm620, %v1658, 0
        %v1723 = vsel %vm620, %v1660, 0
        %v1725 = vsel %vm620, %v1662, 0
        %v1727 = vsel %vm620, %v1664, 0
        %v1729 = vsel %vm620, %v1666, 0
        %v1731 = vsel %vm620, %v1668, 0
        %v1733 = vsel %vm620, %v1670, 0
        %v1735 = vsel %vm620, %v1672, 0
        %v1737 = vsel %vm620, %v1674, 0
        %v1739 = vsel %vm620, %v1676, 0
        %v1741 = vsel %vm620, %v1678, 0
        %v1743 = vsel %vm620, %v1680, 0
        %1745 = vmatprep.subr.mxu0 0.0
        %1746 = vmatpush1.xpose.msra.mxu0 %v1713
        %1747 = vmatprep.subr.mxu0 0.0
        %1748 = vmatpush1.xpose.msra.mxu0 %v1715
        %1749 = vmatprep.subr.mxu0 0.0
        %1750 = vmatpush1.xpose.msra.mxu0 %v1717
        %1751 = vmatprep.subr.mxu0 0.0
        %1752 = vmatpush1.xpose.msra.mxu0 %v1719
        %1753 = vmatprep.subr.mxu0 0.0
        %1754 = vmatpush1.xpose.msra.mxu0 %v1721
        %1755 = vmatprep.subr.mxu0 0.0
        %1756 = vmatpush1.xpose.msra.mxu0 %v1723
        %1757 = vmatprep.subr.mxu0 0.0
        %1758 = vmatpush1.xpose.msra.mxu0 %v1725
        %1759 = vmatprep.subr.mxu0 0.0
        %1760 = vmatpush1.xpose.msra.mxu0 %v1727
        %1761 = vmatprep.subr.mxu0 0.0
        %1762 = vmatpush1.xpose.msra.mxu0 %v1729
        %1763 = vmatprep.subr.mxu0 0.0
        %1764 = vmatpush1.xpose.msra.mxu0 %v1731
        %1765 = vmatprep.subr.mxu0 0.0
        %1766 = vmatpush1.xpose.msra.mxu0 %v1733
        %1767 = vmatprep.subr.mxu0 0.0
        %1768 = vmatpush1.xpose.msra.mxu0 %v1735
        %1769 = vmatprep.subr.mxu0 0.0
        %1770 = vmatpush1.xpose.msra.mxu0 %v1737
        %1771 = vmatprep.subr.mxu0 0.0
        %1772 = vmatpush1.xpose.msra.mxu0 %v1739
        %1773 = vmatprep.subr.mxu0 0.0
        %1774 = vmatpush1.xpose.msra.mxu0 %v1741
        %1775 = vmatprep.subr.mxu0 0.0
        %1776 = vmatpush1.xpose.msra.mxu0 %v1743
        %1777 = vmatprep.subr.mxu0 0.0
        %1778 = vmatpush1.xpose.msra.mxu0 0.0
        %1779 = vmatprep.subr.mxu0 0.0
        %1780 = vmatpush1.xpose.msra.mxu0 0.0
        %1781 = vmatprep.subr.mxu0 0.0
        %1782 = vmatpush1.xpose.msra.mxu0 0.0
        %1783 = vmatprep.subr.mxu0 0.0
        %1784 = vmatpush1.xpose.msra.mxu0 0.0
        %1785 = vmatprep.subr.mxu0 0.0
        %1786 = vmatpush1.xpose.msra.mxu0 0.0
        %1787 = vmatprep.subr.mxu0 0.0
        %1788 = vmatpush1.xpose.msra.mxu0 0.0
        %1789 = vmatprep.subr.mxu0 0.0
        %1790 = vmatpush1.xpose.msra.mxu0 0.0
        %1791 = vmatprep.subr.mxu0 0.0
        %1792 = vmatpush1.xpose.msra.mxu0 0.0
        %1793 = vmatprep.subr.mxu0 0.0
        %1794 = vmatpush1.xpose.msra.mxu0 0.0
        %1795 = vmatprep.subr.mxu0 0.0
        %1796 = vmatpush1.xpose.msra.mxu0 0.0
        %1797 = vmatprep.subr.mxu0 0.0
        %1798 = vmatpush1.xpose.msra.mxu0 0.0
        %1799 = vmatprep.subr.mxu0 0.0
        %1800 = vmatpush1.xpose.msra.mxu0 0.0
        %1801 = vmatprep.subr.mxu0 0.0
        %1802 = vmatpush1.xpose.msra.mxu0 0.0
        %1803 = vmatprep.subr.mxu0 0.0
        %1804 = vmatpush1.xpose.msra.mxu0 0.0
        %1805 = vmatprep.subr.mxu0 0.0
        %1806 = vmatpush1.xpose.msra.mxu0 0.0
        %1807 = vmatprep.subr.mxu0 0.0
        %1808 = vmatpush1.xpose.msra.mxu0 0.0
        %1809 = vmatprep.mubr.f32.mxu0 0.0
        %1810 = vmatmul.mubr.f32.gmra.mrb[0].mxu0 %v1681
        %v1811 = vpop.f32.mrb[0].mxu0
        %v1812 = vadd.f32 %v1569, %v1811
        %v1813 = vpop.f32.mrb[0].mxu0
        %1814 = vmatprep.mubr.f32.mxu0 0.0
        %1815 = vmatmul.mubr.f32.gmra.mrb[0].mxu0 %v1683
        %v1816 = vpop.f32.mrb[0].mxu0
        %v1817 = vadd.f32 %v1570, %v1816
        %v1818 = vpop.f32.mrb[0].mxu0
        %1819 = vmatprep.mubr.f32.mxu0 0.0
        %1820 = vmatmul.mubr.f32.gmra.mrb[0].mxu0 %v1685
        %v1821 = vpop.f32.mrb[0].mxu0
        %v1822 = vadd.f32 %v1571, %v1821
        %v1823 = vpop.f32.mrb[0].mxu0
        %1824 = vmatprep.mubr.f32.mxu0 0.0
        %1825 = vmatmul.mubr.f32.gmra.mrb[0].mxu0 %v1687
        %v1826 = vpop.f32.mrb[0].mxu0
        %v1827 = vadd.f32 %v1572, %v1826
        %v1828 = vpop.f32.mrb[0].mxu0
        %1829 = vmatprep.mubr.f32.mxu0 0.0
        %1830 = vmatmul.mubr.f32.gmra.mrb[0].mxu0 %v1689
        %v1831 = vpop.f32.mrb[0].mxu0
        %v1832 = vadd.f32 %v1573, %v1831
        %v1833 = vpop.f32.mrb[0].mxu0
        %1834 = vmatprep.mubr.f32.mxu0 0.0
        %1835 = vmatmul.mubr.f32.gmra.mrb[0].mxu0 %v1691
        %v1836 = vpop.f32.mrb[0].mxu0
        %v1837 = vadd.f32 %v1574, %v1836
        %v1838 = vpop.f32.mrb[0].mxu0
        %1839 = vmatprep.mubr.f32.mxu0 0.0
        %1840 = vmatmul.mubr.f32.gmra.mrb[0].mxu0 %v1693
        %v1841 = vpop.f32.mrb[0].mxu0
        %v1842 = vadd.f32 %v1575, %v1841
        %v1843 = vpop.f32.mrb[0].mxu0
        %1844 = vmatprep.mubr.f32.mxu0 0.0
        %1845 = vmatmul.mubr.f32.gmra.mrb[0].mxu0 %v1695
        %v1846 = vpop.f32.mrb[0].mxu0
        %v1847 = vadd.f32 %v1576, %v1846
        %v1848 = vpop.f32.mrb[0].mxu0
        %1849 = vmatprep.mubr.f32.mxu0 0.0
        %1850 = vmatmul.mubr.f32.gmra.mrb[0].mxu0 %v1697
        %v1851 = vpop.f32.mrb[0].mxu0
        %v1852 = vadd.f32 %v1577, %v1851
        %v1853 = vpop.f32.mrb[0].mxu0
        %1854 = vmatprep.mubr.f32.mxu0 0.0
        %1855 = vmatmul.mubr.f32.gmra.mrb[0].mxu0 %v1699
        %v1856 = vpop.f32.mrb[0].mxu0
        %v1857 = vadd.f32 %v1578, %v1856
        %v1858 = vpop.f32.mrb[0].mxu0
        %1859 = vmatprep.mubr.f32.mxu0 0.0
        %1860 = vmatmul.mubr.f32.gmra.mrb[0].mxu0 %v1701
        %v1861 = vpop.f32.mrb[0].mxu0
        %v1862 = vadd.f32 %v1579, %v1861
        %v1863 = vpop.f32.mrb[0].mxu0
        %1864 = vmatprep.mubr.f32.mxu0 0.0
        %1865 = vmatmul.mubr.f32.gmra.mrb[0].mxu0 %v1703
        %v1866 = vpop.f32.mrb[0].mxu0
        %v1867 = vadd.f32 %v1580, %v1866
        %v1868 = vpop.f32.mrb[0].mxu0
        %1869 = vmatprep.mubr.f32.mxu0 0.0
        %1870 = vmatmul.mubr.f32.gmra.mrb[0].mxu0 %v1705
        %v1871 = vpop.f32.mrb[0].mxu0
        %v1872 = vadd.f32 %v1581, %v1871
        %v1873 = vpop.f32.mrb[0].mxu0
        %1874 = vmatprep.mubr.f32.mxu0 0.0
        %1875 = vmatmul.mubr.f32.gmra.mrb[0].mxu0 %v1707
        %v1876 = vpop.f32.mrb[0].mxu0
        %v1877 = vadd.f32 %v1582, %v1876
        %v1878 = vpop.f32.mrb[0].mxu0
        %1879 = vmatprep.mubr.f32.mxu0 0.0
        %1880 = vmatmul.mubr.f32.gmra.mrb[0].mxu0 %v1709
        %v1881 = vpop.f32.mrb[0].mxu0
        %v1882 = vadd.f32 %v1583, %v1881
        %v1883 = vpop.f32.mrb[0].mxu0
        %1884 = vmatprep.mubr.f32.mxu0 0.0
        %1885 = vmatmul.mubr.f32.gmra.mrb[0].mxu0 %v1711
        %v1886 = vpop.f32.mrb[0].mxu0
        %v1887 = vadd.f32 %v1584, %v1886
        %v1888 = vpop.f32.mrb[0].mxu0
        %1889 = vdwg.mxu0
        %s1890 = scalar_lea.vmem [#allocation2], 128
        %v1891 = vld [vmem:[%s1890] sm:$0xff]
        %v1892 = vld [vmem:[%s1890 + $0x8] sm:$0xff]
        %v1893 = vld [vmem:[%s1890 + $0x10] sm:$0xff]
        %v1894 = vld [vmem:[%s1890 + $0x18] sm:$0xff]
        %v1895 = vld [vmem:[%s1890 + $0x20] sm:$0xff]
        %v1896 = vld [vmem:[%s1890 + $0x28] sm:$0xff]
        %v1897 = vld [vmem:[%s1890 + $0x30] sm:$0xff]
        %v1898 = vld [vmem:[%s1890 + $0x38] sm:$0xff]
        %v1899 = vld [vmem:[%s1890 + $0x40] sm:$0xff]
        %v1900 = vld [vmem:[%s1890 + $0x48] sm:$0xff]
        %v1901 = vld [vmem:[%s1890 + $0x50] sm:$0xff]
        %v1902 = vld [vmem:[%s1890 + $0x58] sm:$0xff]
        %v1903 = vld [vmem:[%s1890 + $0x60] sm:$0xff]
        %v1904 = vld [vmem:[%s1890 + $0x68] sm:$0xff]
        %v1905 = vld [vmem:[%s1890 + $0x70] sm:$0xff]
        %v1906 = vld [vmem:[%s1890 + $0x78] sm:$0xff]
        %1907 = vmax.xlane.f32.xlu0 %v1812
        %v1908 = vpop.xlane.xlu0 %1907
        %1909 = vmax.xlane.f32.xlu0 %v1817
        %v1910 = vpop.xlane.xlu0 %1909
        %1911 = vmax.xlane.f32.xlu0 %v1822
        %v1912 = vpop.xlane.xlu0 %1911
        %1913 = vmax.xlane.f32.xlu0 %v1827
        %v1914 = vpop.xlane.xlu0 %1913
        %1915 = vmax.xlane.f32.xlu0 %v1832
        %v1916 = vpop.xlane.xlu0 %1915
        %1917 = vmax.xlane.f32.xlu0 %v1837
        %v1918 = vpop.xlane.xlu0 %1917
        %1919 = vmax.xlane.f32.xlu0 %v1842
        %v1920 = vpop.xlane.xlu0 %1919
        %1921 = vmax.xlane.f32.xlu0 %v1847
        %v1922 = vpop.xlane.xlu0 %1921
        %1923 = vmax.xlane.f32.xlu0 %v1852
        %v1924 = vpop.xlane.xlu0 %1923
        %1925 = vmax.xlane.f32.xlu0 %v1857
        %v1926 = vpop.xlane.xlu0 %1925
        %1927 = vmax.xlane.f32.xlu0 %v1862
        %v1928 = vpop.xlane.xlu0 %1927
        %1929 = vmax.xlane.f32.xlu0 %v1867
        %v1930 = vpop.xlane.xlu0 %1929
        %1931 = vmax.xlane.f32.xlu0 %v1872
        %v1932 = vpop.xlane.xlu0 %1931
        %1933 = vmax.xlane.f32.xlu0 %v1877
        %v1934 = vpop.xlane.xlu0 %1933
        %1935 = vmax.xlane.f32.xlu0 %v1882
        %v1936 = vpop.xlane.xlu0 %1935
        %1937 = vmax.xlane.f32.xlu0 %v1887
        %v1938 = vpop.xlane.xlu0 %1937
        %v1939 = vmax.f32 %v1891, %v1908
        %v1940 = vmax.f32 %v1892, %v1910
        %v1941 = vmax.f32 %v1893, %v1912
        %v1942 = vmax.f32 %v1894, %v1914
        %v1943 = vmax.f32 %v1895, %v1916
        %v1944 = vmax.f32 %v1896, %v1918
        %v1945 = vmax.f32 %v1897, %v1920
        %v1946 = vmax.f32 %v1898, %v1922
        %v1947 = vmax.f32 %v1899, %v1924
        %v1948 = vmax.f32 %v1900, %v1926
        %v1949 = vmax.f32 %v1901, %v1928
        %v1950 = vmax.f32 %v1902, %v1930
        %v1951 = vmax.f32 %v1903, %v1932
        %v1952 = vmax.f32 %v1904, %v1934
        %v1953 = vmax.f32 %v1905, %v1936
        %v1954 = vmax.f32 %v1906, %v1938
        %v1955 = vsub.f32 %v1891, %v1939
        %v1956 = vsub.f32 %v1892, %v1940
        %v1957 = vsub.f32 %v1893, %v1941
        %v1958 = vsub.f32 %v1894, %v1942
        %v1959 = vsub.f32 %v1895, %v1943
        %v1960 = vsub.f32 %v1896, %v1944
        %v1961 = vsub.f32 %v1897, %v1945
        %v1962 = vsub.f32 %v1898, %v1946
        %v1963 = vsub.f32 %v1899, %v1947
        %v1964 = vsub.f32 %v1900, %v1948
        %v1965 = vsub.f32 %v1901, %v1949
        %v1966 = vsub.f32 %v1902, %v1950
        %v1967 = vsub.f32 %v1903, %v1951
        %v1968 = vsub.f32 %v1904, %v1952
        %v1969 = vsub.f32 %v1905, %v1953
        %v1970 = vsub.f32 %v1906, %v1954
        %v1971 = vmul.f32 %v1955, 1.442695
        %v1972 = vpow.pop %v1971
        %v1973 = vmul.f32 %v1956, 1.442695
        %v1974 = vpow.pop %v1973
        %v1975 = vmul.f32 %v1957, 1.442695
        %v1976 = vpow.pop %v1975
        %v1977 = vmul.f32 %v1958, 1.442695
        %v1978 = vpow.pop %v1977
        %v1979 = vmul.f32 %v1959, 1.442695
        %v1980 = vpow.pop %v1979
        %v1981 = vmul.f32 %v1960, 1.442695
        %v1982 = vpow.pop %v1981
        %v1983 = vmul.f32 %v1961, 1.442695
        %v1984 = vpow.pop %v1983
        %v1985 = vmul.f32 %v1962, 1.442695
        %v1986 = vpow.pop %v1985
        %v1987 = vmul.f32 %v1963, 1.442695
        %v1988 = vpow.pop %v1987
        %v1989 = vmul.f32 %v1964, 1.442695
        %v1990 = vpow.pop %v1989
        %v1991 = vmul.f32 %v1965, 1.442695
        %v1992 = vpow.pop %v1991
        %v1993 = vmul.f32 %v1966, 1.442695
        %v1994 = vpow.pop %v1993
        %v1995 = vmul.f32 %v1967, 1.442695
        %v1996 = vpow.pop %v1995
        %v1997 = vmul.f32 %v1968, 1.442695
        %v1998 = vpow.pop %v1997
        %v1999 = vmul.f32 %v1969, 1.442695
        %v2000 = vpow.pop %v1999
        %v2001 = vmul.f32 %v1970, 1.442695
        %v2002 = vpow.pop %v2001
        %2004 = vset.pattern.permute.xlu0 0
        %2005 = vperm.xlu0 %2004, %v1939
        %v2006 = vpop.permute.xlu0 %2005
        %2009 = vset.pattern.permute.xlu0 0
        %2010 = vperm.xlu0 %2009, %v1940
        %v2011 = vpop.permute.xlu0 %2010
        %2014 = vset.pattern.permute.xlu0 0
        %2015 = vperm.xlu0 %2014, %v1941
        %v2016 = vpop.permute.xlu0 %2015
        %2019 = vset.pattern.permute.xlu0 0
        %2020 = vperm.xlu0 %2019, %v1942
        %v2021 = vpop.permute.xlu0 %2020
        %2024 = vset.pattern.permute.xlu0 0
        %2025 = vperm.xlu0 %2024, %v1943
        %v2026 = vpop.permute.xlu0 %2025
        %2029 = vset.pattern.permute.xlu0 0
        %2030 = vperm.xlu0 %2029, %v1944
        %v2031 = vpop.permute.xlu0 %2030
        %2034 = vset.pattern.permute.xlu0 0
        %2035 = vperm.xlu0 %2034, %v1945
        %v2036 = vpop.permute.xlu0 %2035
        %2039 = vset.pattern.permute.xlu0 0
        %2040 = vperm.xlu0 %2039, %v1946
        %v2041 = vpop.permute.xlu0 %2040
        %2044 = vset.pattern.permute.xlu0 0
        %2045 = vperm.xlu0 %2044, %v1947
        %v2046 = vpop.permute.xlu0 %2045
        %2049 = vset.pattern.permute.xlu0 0
        %2050 = vperm.xlu0 %2049, %v1948
        %v2051 = vpop.permute.xlu0 %2050
        %2054 = vset.pattern.permute.xlu0 0
        %2055 = vperm.xlu0 %2054, %v1949
        %v2056 = vpop.permute.xlu0 %2055
        %2059 = vset.pattern.permute.xlu0 0
        %2060 = vperm.xlu0 %2059, %v1950
        %v2061 = vpop.permute.xlu0 %2060
        %2064 = vset.pattern.permute.xlu0 0
        %2065 = vperm.xlu0 %2064, %v1951
        %v2066 = vpop.permute.xlu0 %2065
        %2069 = vset.pattern.permute.xlu0 0
        %2070 = vperm.xlu0 %2069, %v1952
        %v2071 = vpop.permute.xlu0 %2070
        %2074 = vset.pattern.permute.xlu0 0
        %2075 = vperm.xlu0 %2074, %v1953
        %v2076 = vpop.permute.xlu0 %2075
        %2079 = vset.pattern.permute.xlu0 0
        %2080 = vperm.xlu0 %2079, %v1954
        %v2081 = vpop.permute.xlu0 %2080
        %v2083 = vsub.f32 %v1812, %v2006
        %v2084 = vsub.f32 %v1817, %v2011
        %v2085 = vsub.f32 %v1822, %v2016
        %v2086 = vsub.f32 %v1827, %v2021
        %v2087 = vsub.f32 %v1832, %v2026
        %v2088 = vsub.f32 %v1837, %v2031
        %v2089 = vsub.f32 %v1842, %v2036
        %v2090 = vsub.f32 %v1847, %v2041
        %v2091 = vsub.f32 %v1852, %v2046
        %v2092 = vsub.f32 %v1857, %v2051
        %v2093 = vsub.f32 %v1862, %v2056
        %v2094 = vsub.f32 %v1867, %v2061
        %v2095 = vsub.f32 %v1872, %v2066
        %v2096 = vsub.f32 %v1877, %v2071
        %v2097 = vsub.f32 %v1882, %v2076
        %v2098 = vsub.f32 %v1887, %v2081
        %v2099 = vmul.f32 %v2083, 1.442695
        %v2100 = vpow.pop %v2099
        %v2101 = vmul.f32 %v2084, 1.442695
        %v2102 = vpow.pop %v2101
        %v2103 = vmul.f32 %v2085, 1.442695
        %v2104 = vpow.pop %v2103
        %v2105 = vmul.f32 %v2086, 1.442695
        %v2106 = vpow.pop %v2105
        %v2107 = vmul.f32 %v2087, 1.442695
        %v2108 = vpow.pop %v2107
        %v2109 = vmul.f32 %v2088, 1.442695
        %v2110 = vpow.pop %v2109
        %v2111 = vmul.f32 %v2089, 1.442695
        %v2112 = vpow.pop %v2111
        %v2113 = vmul.f32 %v2090, 1.442695
        %v2114 = vpow.pop %v2113
        %v2115 = vmul.f32 %v2091, 1.442695
        %v2116 = vpow.pop %v2115
        %v2117 = vmul.f32 %v2092, 1.442695
        %v2118 = vpow.pop %v2117
        %v2119 = vmul.f32 %v2093, 1.442695
        %v2120 = vpow.pop %v2119
        %v2121 = vmul.f32 %v2094, 1.442695
        %v2122 = vpow.pop %v2121
        %v2123 = vmul.f32 %v2095, 1.442695
        %v2124 = vpow.pop %v2123
        %v2125 = vmul.f32 %v2096, 1.442695
        %v2126 = vpow.pop %v2125
        %v2127 = vmul.f32 %v2097, 1.442695
        %v2128 = vpow.pop %v2127
        %v2129 = vmul.f32 %v2098, 1.442695
        %v2130 = vpow.pop %v2129
        %s2131 = scalar_lea.vmem [#allocation3], 128
        %v2132 = vld [vmem:[%s2131] sm:$0xff]
        %v2133 = vld [vmem:[%s2131 + $0x8] sm:$0xff]
        %v2134 = vld [vmem:[%s2131 + $0x10] sm:$0xff]
        %v2135 = vld [vmem:[%s2131 + $0x18] sm:$0xff]
        %v2136 = vld [vmem:[%s2131 + $0x20] sm:$0xff]
        %v2137 = vld [vmem:[%s2131 + $0x28] sm:$0xff]
        %v2138 = vld [vmem:[%s2131 + $0x30] sm:$0xff]
        %v2139 = vld [vmem:[%s2131 + $0x38] sm:$0xff]
        %v2140 = vld [vmem:[%s2131 + $0x40] sm:$0xff]
        %v2141 = vld [vmem:[%s2131 + $0x48] sm:$0xff]
        %v2142 = vld [vmem:[%s2131 + $0x50] sm:$0xff]
        %v2143 = vld [vmem:[%s2131 + $0x58] sm:$0xff]
        %v2144 = vld [vmem:[%s2131 + $0x60] sm:$0xff]
        %v2145 = vld [vmem:[%s2131 + $0x68] sm:$0xff]
        %v2146 = vld [vmem:[%s2131 + $0x70] sm:$0xff]
        %v2147 = vld [vmem:[%s2131 + $0x78] sm:$0xff]
        %v2148 = vmul.f32 %v1972, %v2132
        %v2149 = vmul.f32 %v1974, %v2133
        %v2150 = vmul.f32 %v1976, %v2134
        %v2151 = vmul.f32 %v1978, %v2135
        %v2152 = vmul.f32 %v1980, %v2136
        %v2153 = vmul.f32 %v1982, %v2137
        %v2154 = vmul.f32 %v1984, %v2138
        %v2155 = vmul.f32 %v1986, %v2139
        %v2156 = vmul.f32 %v1988, %v2140
        %v2157 = vmul.f32 %v1990, %v2141
        %v2158 = vmul.f32 %v1992, %v2142
        %v2159 = vmul.f32 %v1994, %v2143
        %v2160 = vmul.f32 %v1996, %v2144
        %v2161 = vmul.f32 %v1998, %v2145
        %v2162 = vmul.f32 %v2000, %v2146
        %v2163 = vmul.f32 %v2002, %v2147
        %2164 = vadd.xlane.f32.xlu0 %v2100
        %v2165 = vpop.xlane.xlu0 %2164
        %2166 = vadd.xlane.f32.xlu0 %v2102
        %v2167 = vpop.xlane.xlu0 %2166
        %2168 = vadd.xlane.f32.xlu0 %v2104
        %v2169 = vpop.xlane.xlu0 %2168
        %2170 = vadd.xlane.f32.xlu0 %v2106
        %v2171 = vpop.xlane.xlu0 %2170
        %2172 = vadd.xlane.f32.xlu0 %v2108
        %v2173 = vpop.xlane.xlu0 %2172
        %2174 = vadd.xlane.f32.xlu0 %v2110
        %v2175 = vpop.xlane.xlu0 %2174
        %2176 = vadd.xlane.f32.xlu0 %v2112
        %v2177 = vpop.xlane.xlu0 %2176
        %2178 = vadd.xlane.f32.xlu0 %v2114
        %v2179 = vpop.xlane.xlu0 %2178
        %2180 = vadd.xlane.f32.xlu0 %v2116
        %v2181 = vpop.xlane.xlu0 %2180
        %2182 = vadd.xlane.f32.xlu0 %v2118
        %v2183 = vpop.xlane.xlu0 %2182
        %2184 = vadd.xlane.f32.xlu0 %v2120
        %v2185 = vpop.xlane.xlu0 %2184
        %2186 = vadd.xlane.f32.xlu0 %v2122
        %v2187 = vpop.xlane.xlu0 %2186
        %2188 = vadd.xlane.f32.xlu0 %v2124
        %v2189 = vpop.xlane.xlu0 %2188
        %2190 = vadd.xlane.f32.xlu0 %v2126
        %v2191 = vpop.xlane.xlu0 %2190
        %2192 = vadd.xlane.f32.xlu0 %v2128
        %v2193 = vpop.xlane.xlu0 %2192
        %2194 = vadd.xlane.f32.xlu0 %v2130
        %v2195 = vpop.xlane.xlu0 %2194
        %v2196 = vadd.f32 %v2148, %v2165
        %v2197 = vadd.f32 %v2149, %v2167
        %v2198 = vadd.f32 %v2150, %v2169
        %v2199 = vadd.f32 %v2151, %v2171
        %v2200 = vadd.f32 %v2152, %v2173
        %v2201 = vadd.f32 %v2153, %v2175
        %v2202 = vadd.f32 %v2154, %v2177
        %v2203 = vadd.f32 %v2155, %v2179
        %v2204 = vadd.f32 %v2156, %v2181
        %v2205 = vadd.f32 %v2157, %v2183
        %v2206 = vadd.f32 %v2158, %v2185
        %v2207 = vadd.f32 %v2159, %v2187
        %v2208 = vadd.f32 %v2160, %v2189
        %v2209 = vadd.f32 %v2161, %v2191
        %v2210 = vadd.f32 %v2162, %v2193
        %v2211 = vadd.f32 %v2163, %v2195
        %2212 = vst.msk [vmem:[%s2131] sm:$0xff] %vm1182, %v2196
        %2213 = vst.msk [vmem:[%s2131 + $0x8] sm:$0xff] %vm1182, %v2197
        %2214 = vst.msk [vmem:[%s2131 + $0x10] sm:$0xff] %vm1182, %v2198
        %2215 = vst.msk [vmem:[%s2131 + $0x18] sm:$0xff] %vm1182, %v2199
        %2216 = vst.msk [vmem:[%s2131 + $0x20] sm:$0xff] %vm1182, %v2200
        %2217 = vst.msk [vmem:[%s2131 + $0x28] sm:$0xff] %vm1182, %v2201
        %2218 = vst.msk [vmem:[%s2131 + $0x30] sm:$0xff] %vm1182, %v2202
        %2219 = vst.msk [vmem:[%s2131 + $0x38] sm:$0xff] %vm1182, %v2203
        %2220 = vst.msk [vmem:[%s2131 + $0x40] sm:$0xff] %vm1182, %v2204
        %2221 = vst.msk [vmem:[%s2131 + $0x48] sm:$0xff] %vm1182, %v2205
        %2222 = vst.msk [vmem:[%s2131 + $0x50] sm:$0xff] %vm1182, %v2206
        %2223 = vst.msk [vmem:[%s2131 + $0x58] sm:$0xff] %vm1182, %v2207
        %2224 = vst.msk [vmem:[%s2131 + $0x60] sm:$0xff] %vm1182, %v2208
        %2225 = vst.msk [vmem:[%s2131 + $0x68] sm:$0xff] %vm1182, %v2209
        %2226 = vst.msk [vmem:[%s2131 + $0x70] sm:$0xff] %vm1182, %v2210
        %2227 = vst.msk [vmem:[%s2131 + $0x78] sm:$0xff] %vm1182, %v2211
        %2244 = vrot.lane.b32.xlu0 %v1552, 120
        %v2245 = vpop.permute.xlu0 %2244
        %2246 = vrot.lane.b32.xlu0 %v1553, 120
        %v2247 = vpop.permute.xlu0 %2246
        %2248 = vrot.lane.b32.xlu0 %v1554, 120
        %v2249 = vpop.permute.xlu0 %2248
        %2250 = vrot.lane.b32.xlu0 %v1555, 120
        %v2251 = vpop.permute.xlu0 %2250
        %2252 = vrot.lane.b32.xlu0 %v1556, 120
        %v2253 = vpop.permute.xlu0 %2252
        %2254 = vrot.lane.b32.xlu0 %v1557, 120
        %v2255 = vpop.permute.xlu0 %2254
        %2256 = vrot.lane.b32.xlu0 %v1558, 120
        %v2257 = vpop.permute.xlu0 %2256
        %2258 = vrot.lane.b32.xlu0 %v1559, 120
        %v2259 = vpop.permute.xlu0 %2258
        %2260 = vrot.lane.b32.xlu0 %v1560, 120
        %v2261 = vpop.permute.xlu0 %2260
        %2262 = vrot.lane.b32.xlu0 %v1561, 120
        %v2263 = vpop.permute.xlu0 %2262
        %2264 = vrot.lane.b32.xlu0 %v1562, 120
        %v2265 = vpop.permute.xlu0 %2264
        %2266 = vrot.lane.b32.xlu0 %v1563, 120
        %v2267 = vpop.permute.xlu0 %2266
        %2268 = vrot.lane.b32.xlu0 %v1564, 120
        %v2269 = vpop.permute.xlu0 %2268
        %2270 = vrot.lane.b32.xlu0 %v1565, 120
        %v2271 = vpop.permute.xlu0 %2270
        %2272 = vrot.lane.b32.xlu0 %v1566, 120
        %v2273 = vpop.permute.xlu0 %2272
        %2274 = vrot.lane.b32.xlu0 %v1567, 120
        %v2275 = vpop.permute.xlu0 %2274
        %2292 = vmatprep.subr.mxu0 0.0
        %2293 = vmatpush1.msra.mxu0 %v2245
        %2294 = vmatprep.subr.mxu0 0.0
        %2295 = vmatpush1.msra.mxu0 %v2247
        %2296 = vmatprep.subr.mxu0 0.0
        %2297 = vmatpush1.msra.mxu0 %v2249
        %2298 = vmatprep.subr.mxu0 0.0
        %2299 = vmatpush1.msra.mxu0 %v2251
        %2300 = vmatprep.subr.mxu0 0.0
        %2301 = vmatpush1.msra.mxu0 %v2253
        %2302 = vmatprep.subr.mxu0 0.0
        %2303 = vmatpush1.msra.mxu0 %v2255
        %2304 = vmatprep.subr.mxu0 0.0
        %2305 = vmatpush1.msra.mxu0 %v2257
        %2306 = vmatprep.subr.mxu0 0.0
        %2307 = vmatpush1.msra.mxu0 %v2259
        %2308 = vmatprep.subr.mxu0 0.0
        %2309 = vmatpush1.msra.mxu0 %v2261
        %2310 = vmatprep.subr.mxu0 0.0
        %2311 = vmatpush1.msra.mxu0 %v2263
        %2312 = vmatprep.subr.mxu0 0.0
        %2313 = vmatpush1.msra.mxu0 %v2265
        %2314 = vmatprep.subr.mxu0 0.0
        %2315 = vmatpush1.msra.mxu0 %v2267
        %2316 = vmatprep.subr.mxu0 0.0
        %2317 = vmatpush1.msra.mxu0 %v2269
        %2318 = vmatprep.subr.mxu0 0.0
        %2319 = vmatpush1.msra.mxu0 %v2271
        %2320 = vmatprep.subr.mxu0 0.0
        %2321 = vmatpush1.msra.mxu0 %v2273
        %2322 = vmatprep.subr.mxu0 0.0
        %2323 = vmatpush1.msra.mxu0 %v2275
        %2324 = vmatprep.subr.mxu0 0.0
        %2325 = vmatpush1.msra.mxu0 0.0
        %2326 = vmatprep.subr.mxu0 0.0
        %2327 = vmatpush1.msra.mxu0 0.0
        %2328 = vmatprep.subr.mxu0 0.0
        %2329 = vmatpush1.msra.mxu0 0.0
        %2330 = vmatprep.subr.mxu0 0.0
        %2331 = vmatpush1.msra.mxu0 0.0
        %2332 = vmatprep.subr.mxu0 0.0
        %2333 = vmatpush1.msra.mxu0 0.0
        %2334 = vmatprep.subr.mxu0 0.0
        %2335 = vmatpush1.msra.mxu0 0.0
        %2336 = vmatprep.subr.mxu0 0.0
        %2337 = vmatpush1.msra.mxu0 0.0
        %2338 = vmatprep.subr.mxu0 0.0
        %2339 = vmatpush1.msra.mxu0 0.0
        %2340 = vmatprep.subr.mxu0 0.0
        %2341 = vmatpush1.msra.mxu0 0.0
        %2342 = vmatprep.subr.mxu0 0.0
        %2343 = vmatpush1.msra.mxu0 0.0
        %2344 = vmatprep.subr.mxu0 0.0
        %2345 = vmatpush1.msra.mxu0 0.0
        %2346 = vmatprep.subr.mxu0 0.0
        %2347 = vmatpush1.msra.mxu0 0.0
        %2348 = vmatprep.subr.mxu0 0.0
        %2349 = vmatpush1.msra.mxu0 0.0
        %2350 = vmatprep.subr.mxu0 0.0
        %2351 = vmatpush1.msra.mxu0 0.0
        %2352 = vmatprep.subr.mxu0 0.0
        %2353 = vmatpush1.msra.mxu0 0.0
        %2354 = vmatprep.subr.mxu0 0.0
        %2355 = vmatpush1.msra.mxu0 0.0
        %2356 = vmatprep.mubr.f32.mxu0 0.0
        %2357 = vmatmul.mubr.f32.gmra.mrb[0].mxu0 %v2100
        %v2358 = vpop.f32.mrb[0].mxu0
        %v2359 = vadd.f32 0.0, %v2358
        %v2360 = vpop.f32.mrb[0].mxu0
        %2361 = vmatprep.mubr.f32.mxu0 0.0
        %2362 = vmatmul.mubr.f32.gmra.mrb[0].mxu0 %v2102
        %v2363 = vpop.f32.mrb[0].mxu0
        %v2364 = vadd.f32 0.0, %v2363
        %v2365 = vpop.f32.mrb[0].mxu0
        %2366 = vmatprep.mubr.f32.mxu0 0.0
        %2367 = vmatmul.mubr.f32.gmra.mrb[0].mxu0 %v2104
        %v2368 = vpop.f32.mrb[0].mxu0
        %v2369 = vadd.f32 0.0, %v2368
        %v2370 = vpop.f32.mrb[0].mxu0
        %2371 = vmatprep.mubr.f32.mxu0 0.0
        %2372 = vmatmul.mubr.f32.gmra.mrb[0].mxu0 %v2106
        %v2373 = vpop.f32.mrb[0].mxu0
        %v2374 = vadd.f32 0.0, %v2373
        %v2375 = vpop.f32.mrb[0].mxu0
        %2376 = vmatprep.mubr.f32.mxu0 0.0
        %2377 = vmatmul.mubr.f32.gmra.mrb[0].mxu0 %v2108
        %v2378 = vpop.f32.mrb[0].mxu0
        %v2379 = vadd.f32 0.0, %v2378
        %v2380 = vpop.f32.mrb[0].mxu0
        %2381 = vmatprep.mubr.f32.mxu0 0.0
        %2382 = vmatmul.mubr.f32.gmra.mrb[0].mxu0 %v2110
        %v2383 = vpop.f32.mrb[0].mxu0
        %v2384 = vadd.f32 0.0, %v2383
        %v2385 = vpop.f32.mrb[0].mxu0
        %2386 = vmatprep.mubr.f32.mxu0 0.0
        %2387 = vmatmul.mubr.f32.gmra.mrb[0].mxu0 %v2112
        %v2388 = vpop.f32.mrb[0].mxu0
        %v2389 = vadd.f32 0.0, %v2388
        %v2390 = vpop.f32.mrb[0].mxu0
        %2391 = vmatprep.mubr.f32.mxu0 0.0
        %2392 = vmatmul.mubr.f32.gmra.mrb[0].mxu0 %v2114
        %v2393 = vpop.f32.mrb[0].mxu0
        %v2394 = vadd.f32 0.0, %v2393
        %v2395 = vpop.f32.mrb[0].mxu0
        %2396 = vmatprep.mubr.f32.mxu0 0.0
        %2397 = vmatmul.mubr.f32.gmra.mrb[0].mxu0 %v2116
        %v2398 = vpop.f32.mrb[0].mxu0
        %v2399 = vadd.f32 0.0, %v2398
        %v2400 = vpop.f32.mrb[0].mxu0
        %2401 = vmatprep.mubr.f32.mxu0 0.0
        %2402 = vmatmul.mubr.f32.gmra.mrb[0].mxu0 %v2118
        %v2403 = vpop.f32.mrb[0].mxu0
        %v2404 = vadd.f32 0.0, %v2403
        %v2405 = vpop.f32.mrb[0].mxu0
        %2406 = vmatprep.mubr.f32.mxu0 0.0
        %2407 = vmatmul.mubr.f32.gmra.mrb[0].mxu0 %v2120
        %v2408 = vpop.f32.mrb[0].mxu0
        %v2409 = vadd.f32 0.0, %v2408
        %v2410 = vpop.f32.mrb[0].mxu0
        %2411 = vmatprep.mubr.f32.mxu0 0.0
        %2412 = vmatmul.mubr.f32.gmra.mrb[0].mxu0 %v2122
        %v2413 = vpop.f32.mrb[0].mxu0
        %v2414 = vadd.f32 0.0, %v2413
        %v2415 = vpop.f32.mrb[0].mxu0
        %2416 = vmatprep.mubr.f32.mxu0 0.0
        %2417 = vmatmul.mubr.f32.gmra.mrb[0].mxu0 %v2124
        %v2418 = vpop.f32.mrb[0].mxu0
        %v2419 = vadd.f32 0.0, %v2418
        %v2420 = vpop.f32.mrb[0].mxu0
        %2421 = vmatprep.mubr.f32.mxu0 0.0
        %2422 = vmatmul.mubr.f32.gmra.mrb[0].mxu0 %v2126
        %v2423 = vpop.f32.mrb[0].mxu0
        %v2424 = vadd.f32 0.0, %v2423
        %v2425 = vpop.f32.mrb[0].mxu0
        %2426 = vmatprep.mubr.f32.mxu0 0.0
        %2427 = vmatmul.mubr.f32.gmra.mrb[0].mxu0 %v2128
        %v2428 = vpop.f32.mrb[0].mxu0
        %v2429 = vadd.f32 0.0, %v2428
        %v2430 = vpop.f32.mrb[0].mxu0
        %2431 = vmatprep.mubr.f32.mxu0 0.0
        %2432 = vmatmul.mubr.f32.gmra.mrb[0].mxu0 %v2130
        %v2433 = vpop.f32.mrb[0].mxu0
        %v2434 = vadd.f32 0.0, %v2433
        %v2435 = vpop.f32.mrb[0].mxu0
        %2436 = vdwg.mxu0
        %v2437 = vld [vmem:[#allocation4] sm:$0xff]
        %v2438 = vld [vmem:[#allocation4 + $0x8] sm:$0xff]
        %v2439 = vld [vmem:[#allocation4 + $0x10] sm:$0xff]
        %v2440 = vld [vmem:[#allocation4 + $0x18] sm:$0xff]
        %v2441 = vld [vmem:[#allocation4 + $0x20] sm:$0xff]
        %v2442 = vld [vmem:[#allocation4 + $0x28] sm:$0xff]
        %v2443 = vld [vmem:[#allocation4 + $0x30] sm:$0xff]
        %v2444 = vld [vmem:[#allocation4 + $0x38] sm:$0xff]
        %v2445 = vld [vmem:[#allocation4 + $0x40] sm:$0xff]
        %v2446 = vld [vmem:[#allocation4 + $0x48] sm:$0xff]
        %v2447 = vld [vmem:[#allocation4 + $0x50] sm:$0xff]
        %v2448 = vld [vmem:[#allocation4 + $0x58] sm:$0xff]
        %v2449 = vld [vmem:[#allocation4 + $0x60] sm:$0xff]
        %v2450 = vld [vmem:[#allocation4 + $0x68] sm:$0xff]
        %v2451 = vld [vmem:[#allocation4 + $0x70] sm:$0xff]
        %v2452 = vld [vmem:[#allocation4 + $0x78] sm:$0xff]
        %2454 = vset.pattern.permute.xlu0 0
        %2455 = vperm.xlu0 %2454, %v1972
        %v2456 = vpop.permute.xlu0 %2455
        %2459 = vset.pattern.permute.xlu0 0
        %2460 = vperm.xlu0 %2459, %v1974
        %v2461 = vpop.permute.xlu0 %2460
        %2464 = vset.pattern.permute.xlu0 0
        %2465 = vperm.xlu0 %2464, %v1976
        %v2466 = vpop.permute.xlu0 %2465
        %2469 = vset.pattern.permute.xlu0 0
        %2470 = vperm.xlu0 %2469, %v1978
        %v2471 = vpop.permute.xlu0 %2470
        %2474 = vset.pattern.permute.xlu0 0
        %2475 = vperm.xlu0 %2474, %v1980
        %v2476 = vpop.permute.xlu0 %2475
        %2479 = vset.pattern.permute.xlu0 0
        %2480 = vperm.xlu0 %2479, %v1982
        %v2481 = vpop.permute.xlu0 %2480
        %2484 = vset.pattern.permute.xlu0 0
        %2485 = vperm.xlu0 %2484, %v1984
        %v2486 = vpop.permute.xlu0 %2485
        %2489 = vset.pattern.permute.xlu0 0
        %2490 = vperm.xlu0 %2489, %v1986
        %v2491 = vpop.permute.xlu0 %2490
        %2494 = vset.pattern.permute.xlu0 0
        %2495 = vperm.xlu0 %2494, %v1988
        %v2496 = vpop.permute.xlu0 %2495
        %2499 = vset.pattern.permute.xlu0 0
        %2500 = vperm.xlu0 %2499, %v1990
        %v2501 = vpop.permute.xlu0 %2500
        %2504 = vset.pattern.permute.xlu0 0
        %2505 = vperm.xlu0 %2504, %v1992
        %v2506 = vpop.permute.xlu0 %2505
        %2509 = vset.pattern.permute.xlu0 0
        %2510 = vperm.xlu0 %2509, %v1994
        %v2511 = vpop.permute.xlu0 %2510
        %2514 = vset.pattern.permute.xlu0 0
        %2515 = vperm.xlu0 %2514, %v1996
        %v2516 = vpop.permute.xlu0 %2515
        %2519 = vset.pattern.permute.xlu0 0
        %2520 = vperm.xlu0 %2519, %v1998
        %v2521 = vpop.permute.xlu0 %2520
        %2524 = vset.pattern.permute.xlu0 0
        %2525 = vperm.xlu0 %2524, %v2000
        %v2526 = vpop.permute.xlu0 %2525
        %2529 = vset.pattern.permute.xlu0 0
        %2530 = vperm.xlu0 %2529, %v2002
        %v2531 = vpop.permute.xlu0 %2530
        %v2533 = vmul.f32 %v2456, %v2437
        %v2534 = vmul.f32 %v2461, %v2438
        %v2535 = vmul.f32 %v2466, %v2439
        %v2536 = vmul.f32 %v2471, %v2440
        %v2537 = vmul.f32 %v2476, %v2441
        %v2538 = vmul.f32 %v2481, %v2442
        %v2539 = vmul.f32 %v2486, %v2443
        %v2540 = vmul.f32 %v2491, %v2444
        %v2541 = vmul.f32 %v2496, %v2445
        %v2542 = vmul.f32 %v2501, %v2446
        %v2543 = vmul.f32 %v2506, %v2447
        %v2544 = vmul.f32 %v2511, %v2448
        %v2545 = vmul.f32 %v2516, %v2449
        %v2546 = vmul.f32 %v2521, %v2450
        %v2547 = vmul.f32 %v2526, %v2451
        %v2548 = vmul.f32 %v2531, %v2452
        %2565 = vrot.lane.b32.xlu0 %v2359, 8
        %v2566 = vpop.permute.xlu0 %2565
        %2567 = vrot.lane.b32.xlu0 %v2364, 8
        %v2568 = vpop.permute.xlu0 %2567
        %2569 = vrot.lane.b32.xlu0 %v2369, 8
        %v2570 = vpop.permute.xlu0 %2569
        %2571 = vrot.lane.b32.xlu0 %v2374, 8
        %v2572 = vpop.permute.xlu0 %2571
        %2573 = vrot.lane.b32.xlu0 %v2379, 8
        %v2574 = vpop.permute.xlu0 %2573
        %2575 = vrot.lane.b32.xlu0 %v2384, 8
        %v2576 = vpop.permute.xlu0 %2575
        %2577 = vrot.lane.b32.xlu0 %v2389, 8
        %v2578 = vpop.permute.xlu0 %2577
        %2579 = vrot.lane.b32.xlu0 %v2394, 8
        %v2580 = vpop.permute.xlu0 %2579
        %2581 = vrot.lane.b32.xlu0 %v2399, 8
        %v2582 = vpop.permute.xlu0 %2581
        %2583 = vrot.lane.b32.xlu0 %v2404, 8
        %v2584 = vpop.permute.xlu0 %2583
        %2585 = vrot.lane.b32.xlu0 %v2409, 8
        %v2586 = vpop.permute.xlu0 %2585
        %2587 = vrot.lane.b32.xlu0 %v2414, 8
        %v2588 = vpop.permute.xlu0 %2587
        %2589 = vrot.lane.b32.xlu0 %v2419, 8
        %v2590 = vpop.permute.xlu0 %2589
        %2591 = vrot.lane.b32.xlu0 %v2424, 8
        %v2592 = vpop.permute.xlu0 %2591
        %2593 = vrot.lane.b32.xlu0 %v2429, 8
        %v2594 = vpop.permute.xlu0 %2593
        %2595 = vrot.lane.b32.xlu0 %v2434, 8
        %v2596 = vpop.permute.xlu0 %2595
        %v2613 = vadd.f32 %v2533, %v2566
        %v2614 = vadd.f32 %v2534, %v2568
        %v2615 = vadd.f32 %v2535, %v2570
        %v2616 = vadd.f32 %v2536, %v2572
        %v2617 = vadd.f32 %v2537, %v2574
        %v2618 = vadd.f32 %v2538, %v2576
        %v2619 = vadd.f32 %v2539, %v2578
        %v2620 = vadd.f32 %v2540, %v2580
        %v2621 = vadd.f32 %v2541, %v2582
        %v2622 = vadd.f32 %v2542, %v2584
        %v2623 = vadd.f32 %v2543, %v2586
        %v2624 = vadd.f32 %v2544, %v2588
        %v2625 = vadd.f32 %v2545, %v2590
        %v2626 = vadd.f32 %v2546, %v2592
        %v2627 = vadd.f32 %v2547, %v2594
        %v2628 = vadd.f32 %v2548, %v2596
        %vm2629 = vcmask 130112
        %2630 = vst.msk [vmem:[#allocation4] sm:$0xff] %vm2629, %v2613
        %2631 = vst.msk [vmem:[#allocation4 + $0x8] sm:$0xff] %vm2629, %v2614
        %2632 = vst.msk [vmem:[#allocation4 + $0x10] sm:$0xff] %vm2629, %v2615
        %2633 = vst.msk [vmem:[#allocation4 + $0x18] sm:$0xff] %vm2629, %v2616
        %2634 = vst.msk [vmem:[#allocation4 + $0x20] sm:$0xff] %vm2629, %v2617
        %2635 = vst.msk [vmem:[#allocation4 + $0x28] sm:$0xff] %vm2629, %v2618
        %2636 = vst.msk [vmem:[#allocation4 + $0x30] sm:$0xff] %vm2629, %v2619
        %2637 = vst.msk [vmem:[#allocation4 + $0x38] sm:$0xff] %vm2629, %v2620
        %2638 = vst.msk [vmem:[#allocation4 + $0x40] sm:$0xff] %vm2629, %v2621
        %2639 = vst.msk [vmem:[#allocation4 + $0x48] sm:$0xff] %vm2629, %v2622
        %2640 = vst.msk [vmem:[#allocation4 + $0x50] sm:$0xff] %vm2629, %v2623
        %2641 = vst.msk [vmem:[#allocation4 + $0x58] sm:$0xff] %vm2629, %v2624
        %2642 = vst.msk [vmem:[#allocation4 + $0x60] sm:$0xff] %vm2629, %v2625
        %2643 = vst.msk [vmem:[#allocation4 + $0x68] sm:$0xff] %vm2629, %v2626
        %2644 = vst.msk [vmem:[#allocation4 + $0x70] sm:$0xff] %vm2629, %v2627
        %2645 = vst.msk [vmem:[#allocation4 + $0x78] sm:$0xff] %vm2629, %v2628
        %2646 = vst.msk [vmem:[%s1890] sm:$0xff] %vm1182, %v1939
        %2647 = vst.msk [vmem:[%s1890 + $0x8] sm:$0xff] %vm1182, %v1940
        %2648 = vst.msk [vmem:[%s1890 + $0x10] sm:$0xff] %vm1182, %v1941
        %2649 = vst.msk [vmem:[%s1890 + $0x18] sm:$0xff] %vm1182, %v1942
        %2650 = vst.msk [vmem:[%s1890 + $0x20] sm:$0xff] %vm1182, %v1943
        %2651 = vst.msk [vmem:[%s1890 + $0x28] sm:$0xff] %vm1182, %v1944
        %2652 = vst.msk [vmem:[%s1890 + $0x30] sm:$0xff] %vm1182, %v1945
        %2653 = vst.msk [vmem:[%s1890 + $0x38] sm:$0xff] %vm1182, %v1946
        %2654 = vst.msk [vmem:[%s1890 + $0x40] sm:$0xff] %vm1182, %v1947
        %2655 = vst.msk [vmem:[%s1890 + $0x48] sm:$0xff] %vm1182, %v1948
        %2656 = vst.msk [vmem:[%s1890 + $0x50] sm:$0xff] %vm1182, %v1949
        %2657 = vst.msk [vmem:[%s1890 + $0x58] sm:$0xff] %vm1182, %v1950
        %2658 = vst.msk [vmem:[%s1890 + $0x60] sm:$0xff] %vm1182, %v1951
        %2659 = vst.msk [vmem:[%s1890 + $0x68] sm:$0xff] %vm1182, %v1952
        %2660 = vst.msk [vmem:[%s1890 + $0x70] sm:$0xff] %vm1182, %v1953
        %2661 = vst.msk [vmem:[%s1890 + $0x78] sm:$0xff] %vm1182, %v1954
        %v2662 = vld [vmem:[%s357] sm:$0xff]
        %v2663 = vld [vmem:[%s357 + $0x8] sm:$0xff]
        %v2664 = vld [vmem:[%s357 + $0x10] sm:$0xff]
        %v2665 = vld [vmem:[%s357 + $0x18] sm:$0xff]
        %v2666 = vld [vmem:[%s357 + $0x20] sm:$0xff]
        %v2667 = vld [vmem:[%s357 + $0x28] sm:$0xff]
        %v2668 = vld [vmem:[%s357 + $0x30] sm:$0xff]
        %v2669 = vld [vmem:[%s357 + $0x38] sm:$0xff]
        %v2670 = vld [vmem:[%s357 + $0x40] sm:$0xff]
        %v2671 = vld [vmem:[%s357 + $0x48] sm:$0xff]
        %v2672 = vld [vmem:[%s357 + $0x50] sm:$0xff]
        %v2673 = vld [vmem:[%s357 + $0x58] sm:$0xff]
        %v2674 = vld [vmem:[%s357 + $0x60] sm:$0xff]
        %v2675 = vld [vmem:[%s357 + $0x68] sm:$0xff]
        %v2676 = vld [vmem:[%s357 + $0x70] sm:$0xff]
        %v2677 = vld [vmem:[%s357 + $0x78] sm:$0xff]
        %v2678 = vmul.f32 %v2662, 2.828427
        %v2679 = vmul.f32 %v2663, 2.828427
        %v2680 = vmul.f32 %v2664, 2.828427
        %v2681 = vmul.f32 %v2665, 2.828427
        %v2682 = vmul.f32 %v2666, 2.828427
        %v2683 = vmul.f32 %v2667, 2.828427
        %v2684 = vmul.f32 %v2668, 2.828427
        %v2685 = vmul.f32 %v2669, 2.828427
        %v2686 = vmul.f32 %v2670, 2.828427
        %v2687 = vmul.f32 %v2671, 2.828427
        %v2688 = vmul.f32 %v2672, 2.828427
        %v2689 = vmul.f32 %v2673, 2.828427
        %v2690 = vmul.f32 %v2674, 2.828427
        %v2691 = vmul.f32 %v2675, 2.828427
        %v2692 = vmul.f32 %v2676, 2.828427
        %v2693 = vmul.f32 %v2677, 2.828427
        %v2694 = vld [vmem:[%s367] sm:$0xff]
        %v2695 = vld [vmem:[%s367 + $0x8] sm:$0xff]
        %v2696 = vld [vmem:[%s367 + $0x10] sm:$0xff]
        %v2697 = vld [vmem:[%s367 + $0x18] sm:$0xff]
        %v2698 = vld [vmem:[%s367 + $0x20] sm:$0xff]
        %v2699 = vld [vmem:[%s367 + $0x28] sm:$0xff]
        %v2700 = vld [vmem:[%s367 + $0x30] sm:$0xff]
        %v2701 = vld [vmem:[%s367 + $0x38] sm:$0xff]
        %v2702 = vld [vmem:[%s367 + $0x40] sm:$0xff]
        %v2703 = vld [vmem:[%s367 + $0x48] sm:$0xff]
        %v2704 = vld [vmem:[%s367 + $0x50] sm:$0xff]
        %v2705 = vld [vmem:[%s367 + $0x58] sm:$0xff]
        %v2706 = vld [vmem:[%s367 + $0x60] sm:$0xff]
        %v2707 = vld [vmem:[%s367 + $0x68] sm:$0xff]
        %v2708 = vld [vmem:[%s367 + $0x70] sm:$0xff]
        %v2709 = vld [vmem:[%s367 + $0x78] sm:$0xff]
        %v2710 = vld [vmem:[%s377] sm:$0xff]
        %v2711 = vld [vmem:[%s377 + $0x8] sm:$0xff]
        %v2712 = vld [vmem:[%s377 + $0x10] sm:$0xff]
        %v2713 = vld [vmem:[%s377 + $0x18] sm:$0xff]
        %v2714 = vld [vmem:[%s377 + $0x20] sm:$0xff]
        %v2715 = vld [vmem:[%s377 + $0x28] sm:$0xff]
        %v2716 = vld [vmem:[%s377 + $0x30] sm:$0xff]
        %v2717 = vld [vmem:[%s377 + $0x38] sm:$0xff]
        %v2718 = vld [vmem:[%s377 + $0x40] sm:$0xff]
        %v2719 = vld [vmem:[%s377 + $0x48] sm:$0xff]
        %v2720 = vld [vmem:[%s377 + $0x50] sm:$0xff]
        %v2721 = vld [vmem:[%s377 + $0x58] sm:$0xff]
        %v2722 = vld [vmem:[%s377 + $0x60] sm:$0xff]
        %v2723 = vld [vmem:[%s377 + $0x68] sm:$0xff]
        %v2724 = vld [vmem:[%s377 + $0x70] sm:$0xff]
        %v2725 = vld [vmem:[%s377 + $0x78] sm:$0xff]
        %s2726 = scalar_lea.vmem %s293, 256 [#allocation5]
        %v2727 = vld [vmem:[%s2726] sm:$0xff]
        %v2728 = vld [vmem:[%s2726 + $0x8] sm:$0xff]
        %v2729 = vld [vmem:[%s2726 + $0x10] sm:$0xff]
        %v2730 = vld [vmem:[%s2726 + $0x18] sm:$0xff]
        %v2731 = vld [vmem:[%s2726 + $0x20] sm:$0xff]
        %v2732 = vld [vmem:[%s2726 + $0x28] sm:$0xff]
        %v2733 = vld [vmem:[%s2726 + $0x30] sm:$0xff]
        %v2734 = vld [vmem:[%s2726 + $0x38] sm:$0xff]
        %v2735 = vld [vmem:[%s2726 + $0x40] sm:$0xff]
        %v2736 = vld [vmem:[%s2726 + $0x48] sm:$0xff]
        %v2737 = vld [vmem:[%s2726 + $0x50] sm:$0xff]
        %v2738 = vld [vmem:[%s2726 + $0x58] sm:$0xff]
        %v2739 = vld [vmem:[%s2726 + $0x60] sm:$0xff]
        %v2740 = vld [vmem:[%s2726 + $0x68] sm:$0xff]
        %v2741 = vld [vmem:[%s2726 + $0x70] sm:$0xff]
        %v2742 = vld [vmem:[%s2726 + $0x78] sm:$0xff]
        %2759 = vrot.lane.b32.xlu0 %v2678, 112
        %v2760 = vpop.permute.xlu0 %2759
        %2761 = vrot.lane.b32.xlu0 %v2679, 112
        %v2762 = vpop.permute.xlu0 %2761
        %2763 = vrot.lane.b32.xlu0 %v2680, 112
        %v2764 = vpop.permute.xlu0 %2763
        %2765 = vrot.lane.b32.xlu0 %v2681, 112
        %v2766 = vpop.permute.xlu0 %2765
        %2767 = vrot.lane.b32.xlu0 %v2682, 112
        %v2768 = vpop.permute.xlu0 %2767
        %2769 = vrot.lane.b32.xlu0 %v2683, 112
        %v2770 = vpop.permute.xlu0 %2769
        %2771 = vrot.lane.b32.xlu0 %v2684, 112
        %v2772 = vpop.permute.xlu0 %2771
        %2773 = vrot.lane.b32.xlu0 %v2685, 112
        %v2774 = vpop.permute.xlu0 %2773
        %2775 = vrot.lane.b32.xlu0 %v2686, 112
        %v2776 = vpop.permute.xlu0 %2775
        %2777 = vrot.lane.b32.xlu0 %v2687, 112
        %v2778 = vpop.permute.xlu0 %2777
        %2779 = vrot.lane.b32.xlu0 %v2688, 112
        %v2780 = vpop.permute.xlu0 %2779
        %2781 = vrot.lane.b32.xlu0 %v2689, 112
        %v2782 = vpop.permute.xlu0 %2781
        %2783 = vrot.lane.b32.xlu0 %v2690, 112
        %v2784 = vpop.permute.xlu0 %2783
        %2785 = vrot.lane.b32.xlu0 %v2691, 112
        %v2786 = vpop.permute.xlu0 %2785
        %2787 = vrot.lane.b32.xlu0 %v2692, 112
        %v2788 = vpop.permute.xlu0 %2787
        %2789 = vrot.lane.b32.xlu0 %v2693, 112
        %v2790 = vpop.permute.xlu0 %2789
        %2807 = vrot.lane.b32.xlu0 %v2694, 112
        %v2808 = vpop.permute.xlu0 %2807
        %2809 = vrot.lane.b32.xlu0 %v2695, 112
        %v2810 = vpop.permute.xlu0 %2809
        %2811 = vrot.lane.b32.xlu0 %v2696, 112
        %v2812 = vpop.permute.xlu0 %2811
        %2813 = vrot.lane.b32.xlu0 %v2697, 112
        %v2814 = vpop.permute.xlu0 %2813
        %2815 = vrot.lane.b32.xlu0 %v2698, 112
        %v2816 = vpop.permute.xlu0 %2815
        %2817 = vrot.lane.b32.xlu0 %v2699, 112
        %v2818 = vpop.permute.xlu0 %2817
        %2819 = vrot.lane.b32.xlu0 %v2700, 112
        %v2820 = vpop.permute.xlu0 %2819
        %2821 = vrot.lane.b32.xlu0 %v2701, 112
        %v2822 = vpop.permute.xlu0 %2821
        %2823 = vrot.lane.b32.xlu0 %v2702, 112
        %v2824 = vpop.permute.xlu0 %2823
        %2825 = vrot.lane.b32.xlu0 %v2703, 112
        %v2826 = vpop.permute.xlu0 %2825
        %2827 = vrot.lane.b32.xlu0 %v2704, 112
        %v2828 = vpop.permute.xlu0 %2827
        %2829 = vrot.lane.b32.xlu0 %v2705, 112
        %v2830 = vpop.permute.xlu0 %2829
        %2831 = vrot.lane.b32.xlu0 %v2706, 112
        %v2832 = vpop.permute.xlu0 %2831
        %2833 = vrot.lane.b32.xlu0 %v2707, 112
        %v2834 = vpop.permute.xlu0 %2833
        %2835 = vrot.lane.b32.xlu0 %v2708, 112
        %v2836 = vpop.permute.xlu0 %2835
        %2837 = vrot.lane.b32.xlu0 %v2709, 112
        %v2838 = vpop.permute.xlu0 %2837
        %v2839 = vsel %vm620, %v2760, 0
        %v2841 = vsel %vm620, %v2762, 0
        %v2843 = vsel %vm620, %v2764, 0
        %v2845 = vsel %vm620, %v2766, 0
        %v2847 = vsel %vm620, %v2768, 0
        %v2849 = vsel %vm620, %v2770, 0
        %v2851 = vsel %vm620, %v2772, 0
        %v2853 = vsel %vm620, %v2774, 0
        %v2855 = vsel %vm620, %v2776, 0
        %v2857 = vsel %vm620, %v2778, 0
        %v2859 = vsel %vm620, %v2780, 0
        %v2861 = vsel %vm620, %v2782, 0
        %v2863 = vsel %vm620, %v2784, 0
        %v2865 = vsel %vm620, %v2786, 0
        %v2867 = vsel %vm620, %v2788, 0
        %v2869 = vsel %vm620, %v2790, 0
        %v2871 = vsel %vm620, %v2808, 0
        %v2873 = vsel %vm620, %v2810, 0
        %v2875 = vsel %vm620, %v2812, 0
        %v2877 = vsel %vm620, %v2814, 0
        %v2879 = vsel %vm620, %v2816, 0
        %v2881 = vsel %vm620, %v2818, 0
        %v2883 = vsel %vm620, %v2820, 0
        %v2885 = vsel %vm620, %v2822, 0
        %v2887 = vsel %vm620, %v2824, 0
        %v2889 = vsel %vm620, %v2826, 0
        %v2891 = vsel %vm620, %v2828, 0
        %v2893 = vsel %vm620, %v2830, 0
        %v2895 = vsel %vm620, %v2832, 0
        %v2897 = vsel %vm620, %v2834, 0
        %v2899 = vsel %vm620, %v2836, 0
        %v2901 = vsel %vm620, %v2838, 0
        %2903 = vmatprep.subr.mxu0 0.0
        %2904 = vmatpush1.xpose.msra.mxu0 %v2871
        %2905 = vmatprep.subr.mxu0 0.0
        %2906 = vmatpush1.xpose.msra.mxu0 %v2873
        %2907 = vmatprep.subr.mxu0 0.0
        %2908 = vmatpush1.xpose.msra.mxu0 %v2875
        %2909 = vmatprep.subr.mxu0 0.0
        %2910 = vmatpush1.xpose.msra.mxu0 %v2877
        %2911 = vmatprep.subr.mxu0 0.0
        %2912 = vmatpush1.xpose.msra.mxu0 %v2879
        %2913 = vmatprep.subr.mxu0 0.0
        %2914 = vmatpush1.xpose.msra.mxu0 %v2881
        %2915 = vmatprep.subr.mxu0 0.0
        %2916 = vmatpush1.xpose.msra.mxu0 %v2883
        %2917 = vmatprep.subr.mxu0 0.0
        %2918 = vmatpush1.xpose.msra.mxu0 %v2885
        %2919 = vmatprep.subr.mxu0 0.0
        %2920 = vmatpush1.xpose.msra.mxu0 %v2887
        %2921 = vmatprep.subr.mxu0 0.0
        %2922 = vmatpush1.xpose.msra.mxu0 %v2889
        %2923 = vmatprep.subr.mxu0 0.0
        %2924 = vmatpush1.xpose.msra.mxu0 %v2891
        %2925 = vmatprep.subr.mxu0 0.0
        %2926 = vmatpush1.xpose.msra.mxu0 %v2893
        %2927 = vmatprep.subr.mxu0 0.0
        %2928 = vmatpush1.xpose.msra.mxu0 %v2895
        %2929 = vmatprep.subr.mxu0 0.0
        %2930 = vmatpush1.xpose.msra.mxu0 %v2897
        %2931 = vmatprep.subr.mxu0 0.0
        %2932 = vmatpush1.xpose.msra.mxu0 %v2899
        %2933 = vmatprep.subr.mxu0 0.0
        %2934 = vmatpush1.xpose.msra.mxu0 %v2901
        %2935 = vmatprep.subr.mxu0 0.0
        %2936 = vmatpush1.xpose.msra.mxu0 0.0
        %2937 = vmatprep.subr.mxu0 0.0
        %2938 = vmatpush1.xpose.msra.mxu0 0.0
        %2939 = vmatprep.subr.mxu0 0.0
        %2940 = vmatpush1.xpose.msra.mxu0 0.0
        %2941 = vmatprep.subr.mxu0 0.0
        %2942 = vmatpush1.xpose.msra.mxu0 0.0
        %2943 = vmatprep.subr.mxu0 0.0
        %2944 = vmatpush1.xpose.msra.mxu0 0.0
        %2945 = vmatprep.subr.mxu0 0.0
        %2946 = vmatpush1.xpose.msra.mxu0 0.0
        %2947 = vmatprep.subr.mxu0 0.0
        %2948 = vmatpush1.xpose.msra.mxu0 0.0
        %2949 = vmatprep.subr.mxu0 0.0
        %2950 = vmatpush1.xpose.msra.mxu0 0.0
        %2951 = vmatprep.subr.mxu0 0.0
        %2952 = vmatpush1.xpose.msra.mxu0 0.0
        %2953 = vmatprep.subr.mxu0 0.0
        %2954 = vmatpush1.xpose.msra.mxu0 0.0
        %2955 = vmatprep.subr.mxu0 0.0
        %2956 = vmatpush1.xpose.msra.mxu0 0.0
        %2957 = vmatprep.subr.mxu0 0.0
        %2958 = vmatpush1.xpose.msra.mxu0 0.0
        %2959 = vmatprep.subr.mxu0 0.0
        %2960 = vmatpush1.xpose.msra.mxu0 0.0
        %2961 = vmatprep.subr.mxu0 0.0
        %2962 = vmatpush1.xpose.msra.mxu0 0.0
        %2963 = vmatprep.subr.mxu0 0.0
        %2964 = vmatpush1.xpose.msra.mxu0 0.0
        %2965 = vmatprep.subr.mxu0 0.0
        %2966 = vmatpush1.xpose.msra.mxu0 0.0
        %2967 = vmatprep.mubr.f32.mxu0 0.0
        %2968 = vmatmul.mubr.f32.gmra.mrb[0].mxu0 %v2839
        %v2969 = vpop.f32.mrb[0].mxu0
        %v2970 = vadd.f32 %v2727, %v2969
        %v2971 = vpop.f32.mrb[0].mxu0
        %2972 = vmatprep.mubr.f32.mxu0 0.0
        %2973 = vmatmul.mubr.f32.gmra.mrb[0].mxu0 %v2841
        %v2974 = vpop.f32.mrb[0].mxu0
        %v2975 = vadd.f32 %v2728, %v2974
        %v2976 = vpop.f32.mrb[0].mxu0
        %2977 = vmatprep.mubr.f32.mxu0 0.0
        %2978 = vmatmul.mubr.f32.gmra.mrb[0].mxu0 %v2843
        %v2979 = vpop.f32.mrb[0].mxu0
        %v2980 = vadd.f32 %v2729, %v2979
        %v2981 = vpop.f32.mrb[0].mxu0
        %2982 = vmatprep.mubr.f32.mxu0 0.0
        %2983 = vmatmul.mubr.f32.gmra.mrb[0].mxu0 %v2845
        %v2984 = vpop.f32.mrb[0].mxu0
        %v2985 = vadd.f32 %v2730, %v2984
        %v2986 = vpop.f32.mrb[0].mxu0
        %2987 = vmatprep.mubr.f32.mxu0 0.0
        %2988 = vmatmul.mubr.f32.gmra.mrb[0].mxu0 %v2847
        %v2989 = vpop.f32.mrb[0].mxu0
        %v2990 = vadd.f32 %v2731, %v2989
        %v2991 = vpop.f32.mrb[0].mxu0
        %2992 = vmatprep.mubr.f32.mxu0 0.0
        %2993 = vmatmul.mubr.f32.gmra.mrb[0].mxu0 %v2849
        %v2994 = vpop.f32.mrb[0].mxu0
        %v2995 = vadd.f32 %v2732, %v2994
        %v2996 = vpop.f32.mrb[0].mxu0
        %2997 = vmatprep.mubr.f32.mxu0 0.0
        %2998 = vmatmul.mubr.f32.gmra.mrb[0].mxu0 %v2851
        %v2999 = vpop.f32.mrb[0].mxu0
        %v3000 = vadd.f32 %v2733, %v2999
        %v3001 = vpop.f32.mrb[0].mxu0
        %3002 = vmatprep.mubr.f32.mxu0 0.0
        %3003 = vmatmul.mubr.f32.gmra.mrb[0].mxu0 %v2853
        %v3004 = vpop.f32.mrb[0].mxu0
        %v3005 = vadd.f32 %v2734, %v3004
        %v3006 = vpop.f32.mrb[0].mxu0
        %3007 = vmatprep.mubr.f32.mxu0 0.0
        %3008 = vmatmul.mubr.f32.gmra.mrb[0].mxu0 %v2855
        %v3009 = vpop.f32.mrb[0].mxu0
        %v3010 = vadd.f32 %v2735, %v3009
        %v3011 = vpop.f32.mrb[0].mxu0
        %3012 = vmatprep.mubr.f32.mxu0 0.0
        %3013 = vmatmul.mubr.f32.gmra.mrb[0].mxu0 %v2857
        %v3014 = vpop.f32.mrb[0].mxu0
        %v3015 = vadd.f32 %v2736, %v3014
        %v3016 = vpop.f32.mrb[0].mxu0
        %3017 = vmatprep.mubr.f32.mxu0 0.0
        %3018 = vmatmul.mubr.f32.gmra.mrb[0].mxu0 %v2859
        %v3019 = vpop.f32.mrb[0].mxu0
        %v3020 = vadd.f32 %v2737, %v3019
        %v3021 = vpop.f32.mrb[0].mxu0
        %3022 = vmatprep.mubr.f32.mxu0 0.0
        %3023 = vmatmul.mubr.f32.gmra.mrb[0].mxu0 %v2861
        %v3024 = vpop.f32.mrb[0].mxu0
        %v3025 = vadd.f32 %v2738, %v3024
        %v3026 = vpop.f32.mrb[0].mxu0
        %3027 = vmatprep.mubr.f32.mxu0 0.0
        %3028 = vmatmul.mubr.f32.gmra.mrb[0].mxu0 %v2863
        %v3029 = vpop.f32.mrb[0].mxu0
        %v3030 = vadd.f32 %v2739, %v3029
        %v3031 = vpop.f32.mrb[0].mxu0
        %3032 = vmatprep.mubr.f32.mxu0 0.0
        %3033 = vmatmul.mubr.f32.gmra.mrb[0].mxu0 %v2865
        %v3034 = vpop.f32.mrb[0].mxu0
        %v3035 = vadd.f32 %v2740, %v3034
        %v3036 = vpop.f32.mrb[0].mxu0
        %3037 = vmatprep.mubr.f32.mxu0 0.0
        %3038 = vmatmul.mubr.f32.gmra.mrb[0].mxu0 %v2867
        %v3039 = vpop.f32.mrb[0].mxu0
        %v3040 = vadd.f32 %v2741, %v3039
        %v3041 = vpop.f32.mrb[0].mxu0
        %3042 = vmatprep.mubr.f32.mxu0 0.0
        %3043 = vmatmul.mubr.f32.gmra.mrb[0].mxu0 %v2869
        %v3044 = vpop.f32.mrb[0].mxu0
        %v3045 = vadd.f32 %v2742, %v3044
        %v3046 = vpop.f32.mrb[0].mxu0
        %3047 = vdwg.mxu0
        %s3048 = scalar_lea.vmem [#allocation2], 256
        %v3049 = vld [vmem:[%s3048] sm:$0xff]
        %v3050 = vld [vmem:[%s3048 + $0x8] sm:$0xff]
        %v3051 = vld [vmem:[%s3048 + $0x10] sm:$0xff]
        %v3052 = vld [vmem:[%s3048 + $0x18] sm:$0xff]
        %v3053 = vld [vmem:[%s3048 + $0x20] sm:$0xff]
        %v3054 = vld [vmem:[%s3048 + $0x28] sm:$0xff]
        %v3055 = vld [vmem:[%s3048 + $0x30] sm:$0xff]
        %v3056 = vld [vmem:[%s3048 + $0x38] sm:$0xff]
        %v3057 = vld [vmem:[%s3048 + $0x40] sm:$0xff]
        %v3058 = vld [vmem:[%s3048 + $0x48] sm:$0xff]
        %v3059 = vld [vmem:[%s3048 + $0x50] sm:$0xff]
        %v3060 = vld [vmem:[%s3048 + $0x58] sm:$0xff]
        %v3061 = vld [vmem:[%s3048 + $0x60] sm:$0xff]
        %v3062 = vld [vmem:[%s3048 + $0x68] sm:$0xff]
        %v3063 = vld [vmem:[%s3048 + $0x70] sm:$0xff]
        %v3064 = vld [vmem:[%s3048 + $0x78] sm:$0xff]
        %3065 = vmax.xlane.f32.xlu0 %v2970
        %v3066 = vpop.xlane.xlu0 %3065
        %3067 = vmax.xlane.f32.xlu0 %v2975
        %v3068 = vpop.xlane.xlu0 %3067
        %3069 = vmax.xlane.f32.xlu0 %v2980
        %v3070 = vpop.xlane.xlu0 %3069
        %3071 = vmax.xlane.f32.xlu0 %v2985
        %v3072 = vpop.xlane.xlu0 %3071
        %3073 = vmax.xlane.f32.xlu0 %v2990
        %v3074 = vpop.xlane.xlu0 %3073
        %3075 = vmax.xlane.f32.xlu0 %v2995
        %v3076 = vpop.xlane.xlu0 %3075
        %3077 = vmax.xlane.f32.xlu0 %v3000
        %v3078 = vpop.xlane.xlu0 %3077
        %3079 = vmax.xlane.f32.xlu0 %v3005
        %v3080 = vpop.xlane.xlu0 %3079
        %3081 = vmax.xlane.f32.xlu0 %v3010
        %v3082 = vpop.xlane.xlu0 %3081
        %3083 = vmax.xlane.f32.xlu0 %v3015
        %v3084 = vpop.xlane.xlu0 %3083
        %3085 = vmax.xlane.f32.xlu0 %v3020
        %v3086 = vpop.xlane.xlu0 %3085
        %3087 = vmax.xlane.f32.xlu0 %v3025
        %v3088 = vpop.xlane.xlu0 %3087
        %3089 = vmax.xlane.f32.xlu0 %v3030
        %v3090 = vpop.xlane.xlu0 %3089
        %3091 = vmax.xlane.f32.xlu0 %v3035
        %v3092 = vpop.xlane.xlu0 %3091
        %3093 = vmax.xlane.f32.xlu0 %v3040
        %v3094 = vpop.xlane.xlu0 %3093
        %3095 = vmax.xlane.f32.xlu0 %v3045
        %v3096 = vpop.xlane.xlu0 %3095
        %v3097 = vmax.f32 %v3049, %v3066
        %v3098 = vmax.f32 %v3050, %v3068
        %v3099 = vmax.f32 %v3051, %v3070
        %v3100 = vmax.f32 %v3052, %v3072
        %v3101 = vmax.f32 %v3053, %v3074
        %v3102 = vmax.f32 %v3054, %v3076
        %v3103 = vmax.f32 %v3055, %v3078
        %v3104 = vmax.f32 %v3056, %v3080
        %v3105 = vmax.f32 %v3057, %v3082
        %v3106 = vmax.f32 %v3058, %v3084
        %v3107 = vmax.f32 %v3059, %v3086
        %v3108 = vmax.f32 %v3060, %v3088
        %v3109 = vmax.f32 %v3061, %v3090
        %v3110 = vmax.f32 %v3062, %v3092
        %v3111 = vmax.f32 %v3063, %v3094
        %v3112 = vmax.f32 %v3064, %v3096
        %v3113 = vsub.f32 %v3049, %v3097
        %v3114 = vsub.f32 %v3050, %v3098
        %v3115 = vsub.f32 %v3051, %v3099
        %v3116 = vsub.f32 %v3052, %v3100
        %v3117 = vsub.f32 %v3053, %v3101
        %v3118 = vsub.f32 %v3054, %v3102
        %v3119 = vsub.f32 %v3055, %v3103
        %v3120 = vsub.f32 %v3056, %v3104
        %v3121 = vsub.f32 %v3057, %v3105
        %v3122 = vsub.f32 %v3058, %v3106
        %v3123 = vsub.f32 %v3059, %v3107
        %v3124 = vsub.f32 %v3060, %v3108
        %v3125 = vsub.f32 %v3061, %v3109
        %v3126 = vsub.f32 %v3062, %v3110
        %v3127 = vsub.f32 %v3063, %v3111
        %v3128 = vsub.f32 %v3064, %v3112
        %v3129 = vmul.f32 %v3113, 1.442695
        %v3130 = vpow.pop %v3129
        %v3131 = vmul.f32 %v3114, 1.442695
        %v3132 = vpow.pop %v3131
        %v3133 = vmul.f32 %v3115, 1.442695
        %v3134 = vpow.pop %v3133
        %v3135 = vmul.f32 %v3116, 1.442695
        %v3136 = vpow.pop %v3135
        %v3137 = vmul.f32 %v3117, 1.442695
        %v3138 = vpow.pop %v3137
        %v3139 = vmul.f32 %v3118, 1.442695
        %v3140 = vpow.pop %v3139
        %v3141 = vmul.f32 %v3119, 1.442695
        %v3142 = vpow.pop %v3141
        %v3143 = vmul.f32 %v3120, 1.442695
        %v3144 = vpow.pop %v3143
        %v3145 = vmul.f32 %v3121, 1.442695
        %v3146 = vpow.pop %v3145
        %v3147 = vmul.f32 %v3122, 1.442695
        %v3148 = vpow.pop %v3147
        %v3149 = vmul.f32 %v3123, 1.442695
        %v3150 = vpow.pop %v3149
        %v3151 = vmul.f32 %v3124, 1.442695
        %v3152 = vpow.pop %v3151
        %v3153 = vmul.f32 %v3125, 1.442695
        %v3154 = vpow.pop %v3153
        %v3155 = vmul.f32 %v3126, 1.442695
        %v3156 = vpow.pop %v3155
        %v3157 = vmul.f32 %v3127, 1.442695
        %v3158 = vpow.pop %v3157
        %v3159 = vmul.f32 %v3128, 1.442695
        %v3160 = vpow.pop %v3159
        %3162 = vset.pattern.permute.xlu0 0
        %3163 = vperm.xlu0 %3162, %v3097
        %v3164 = vpop.permute.xlu0 %3163
        %3167 = vset.pattern.permute.xlu0 0
        %3168 = vperm.xlu0 %3167, %v3098
        %v3169 = vpop.permute.xlu0 %3168
        %3172 = vset.pattern.permute.xlu0 0
        %3173 = vperm.xlu0 %3172, %v3099
        %v3174 = vpop.permute.xlu0 %3173
        %3177 = vset.pattern.permute.xlu0 0
        %3178 = vperm.xlu0 %3177, %v3100
        %v3179 = vpop.permute.xlu0 %3178
        %3182 = vset.pattern.permute.xlu0 0
        %3183 = vperm.xlu0 %3182, %v3101
        %v3184 = vpop.permute.xlu0 %3183
        %3187 = vset.pattern.permute.xlu0 0
        %3188 = vperm.xlu0 %3187, %v3102
        %v3189 = vpop.permute.xlu0 %3188
        %3192 = vset.pattern.permute.xlu0 0
        %3193 = vperm.xlu0 %3192, %v3103
        %v3194 = vpop.permute.xlu0 %3193
        %3197 = vset.pattern.permute.xlu0 0
        %3198 = vperm.xlu0 %3197, %v3104
        %v3199 = vpop.permute.xlu0 %3198
        %3202 = vset.pattern.permute.xlu0 0
        %3203 = vperm.xlu0 %3202, %v3105
        %v3204 = vpop.permute.xlu0 %3203
        %3207 = vset.pattern.permute.xlu0 0
        %3208 = vperm.xlu0 %3207, %v3106
        %v3209 = vpop.permute.xlu0 %3208
        %3212 = vset.pattern.permute.xlu0 0
        %3213 = vperm.xlu0 %3212, %v3107
        %v3214 = vpop.permute.xlu0 %3213
        %3217 = vset.pattern.permute.xlu0 0
        %3218 = vperm.xlu0 %3217, %v3108
        %v3219 = vpop.permute.xlu0 %3218
        %3222 = vset.pattern.permute.xlu0 0
        %3223 = vperm.xlu0 %3222, %v3109
        %v3224 = vpop.permute.xlu0 %3223
        %3227 = vset.pattern.permute.xlu0 0
        %3228 = vperm.xlu0 %3227, %v3110
        %v3229 = vpop.permute.xlu0 %3228
        %3232 = vset.pattern.permute.xlu0 0
        %3233 = vperm.xlu0 %3232, %v3111
        %v3234 = vpop.permute.xlu0 %3233
        %3237 = vset.pattern.permute.xlu0 0
        %3238 = vperm.xlu0 %3237, %v3112
        %v3239 = vpop.permute.xlu0 %3238
        %v3241 = vsub.f32 %v2970, %v3164
        %v3242 = vsub.f32 %v2975, %v3169
        %v3243 = vsub.f32 %v2980, %v3174
        %v3244 = vsub.f32 %v2985, %v3179
        %v3245 = vsub.f32 %v2990, %v3184
        %v3246 = vsub.f32 %v2995, %v3189
        %v3247 = vsub.f32 %v3000, %v3194
        %v3248 = vsub.f32 %v3005, %v3199
        %v3249 = vsub.f32 %v3010, %v3204
        %v3250 = vsub.f32 %v3015, %v3209
        %v3251 = vsub.f32 %v3020, %v3214
        %v3252 = vsub.f32 %v3025, %v3219
        %v3253 = vsub.f32 %v3030, %v3224
        %v3254 = vsub.f32 %v3035, %v3229
        %v3255 = vsub.f32 %v3040, %v3234
        %v3256 = vsub.f32 %v3045, %v3239
        %v3257 = vmul.f32 %v3241, 1.442695
        %v3258 = vpow.pop %v3257
        %v3259 = vmul.f32 %v3242, 1.442695
        %v3260 = vpow.pop %v3259
        %v3261 = vmul.f32 %v3243, 1.442695
        %v3262 = vpow.pop %v3261
        %v3263 = vmul.f32 %v3244, 1.442695
        %v3264 = vpow.pop %v3263
        %v3265 = vmul.f32 %v3245, 1.442695
        %v3266 = vpow.pop %v3265
        %v3267 = vmul.f32 %v3246, 1.442695
        %v3268 = vpow.pop %v3267
        %v3269 = vmul.f32 %v3247, 1.442695
        %v3270 = vpow.pop %v3269
        %v3271 = vmul.f32 %v3248, 1.442695
        %v3272 = vpow.pop %v3271
        %v3273 = vmul.f32 %v3249, 1.442695
        %v3274 = vpow.pop %v3273
        %v3275 = vmul.f32 %v3250, 1.442695
        %v3276 = vpow.pop %v3275
        %v3277 = vmul.f32 %v3251, 1.442695
        %v3278 = vpow.pop %v3277
        %v3279 = vmul.f32 %v3252, 1.442695
        %v3280 = vpow.pop %v3279
        %v3281 = vmul.f32 %v3253, 1.442695
        %v3282 = vpow.pop %v3281
        %v3283 = vmul.f32 %v3254, 1.442695
        %v3284 = vpow.pop %v3283
        %v3285 = vmul.f32 %v3255, 1.442695
        %v3286 = vpow.pop %v3285
        %v3287 = vmul.f32 %v3256, 1.442695
        %v3288 = vpow.pop %v3287
        %s3289 = scalar_lea.vmem [#allocation3], 256
        %v3290 = vld [vmem:[%s3289] sm:$0xff]
        %v3291 = vld [vmem:[%s3289 + $0x8] sm:$0xff]
        %v3292 = vld [vmem:[%s3289 + $0x10] sm:$0xff]
        %v3293 = vld [vmem:[%s3289 + $0x18] sm:$0xff]
        %v3294 = vld [vmem:[%s3289 + $0x20] sm:$0xff]
        %v3295 = vld [vmem:[%s3289 + $0x28] sm:$0xff]
        %v3296 = vld [vmem:[%s3289 + $0x30] sm:$0xff]
        %v3297 = vld [vmem:[%s3289 + $0x38] sm:$0xff]
        %v3298 = vld [vmem:[%s3289 + $0x40] sm:$0xff]
        %v3299 = vld [vmem:[%s3289 + $0x48] sm:$0xff]
        %v3300 = vld [vmem:[%s3289 + $0x50] sm:$0xff]
        %v3301 = vld [vmem:[%s3289 + $0x58] sm:$0xff]
        %v3302 = vld [vmem:[%s3289 + $0x60] sm:$0xff]
        %v3303 = vld [vmem:[%s3289 + $0x68] sm:$0xff]
        %v3304 = vld [vmem:[%s3289 + $0x70] sm:$0xff]
        %v3305 = vld [vmem:[%s3289 + $0x78] sm:$0xff]
        %v3306 = vmul.f32 %v3130, %v3290
        %v3307 = vmul.f32 %v3132, %v3291
        %v3308 = vmul.f32 %v3134, %v3292
        %v3309 = vmul.f32 %v3136, %v3293
        %v3310 = vmul.f32 %v3138, %v3294
        %v3311 = vmul.f32 %v3140, %v3295
        %v3312 = vmul.f32 %v3142, %v3296
        %v3313 = vmul.f32 %v3144, %v3297
        %v3314 = vmul.f32 %v3146, %v3298
        %v3315 = vmul.f32 %v3148, %v3299
        %v3316 = vmul.f32 %v3150, %v3300
        %v3317 = vmul.f32 %v3152, %v3301
        %v3318 = vmul.f32 %v3154, %v3302
        %v3319 = vmul.f32 %v3156, %v3303
        %v3320 = vmul.f32 %v3158, %v3304
        %v3321 = vmul.f32 %v3160, %v3305
        %3322 = vadd.xlane.f32.xlu0 %v3258
        %v3323 = vpop.xlane.xlu0 %3322
        %3324 = vadd.xlane.f32.xlu0 %v3260
        %v3325 = vpop.xlane.xlu0 %3324
        %3326 = vadd.xlane.f32.xlu0 %v3262
        %v3327 = vpop.xlane.xlu0 %3326
        %3328 = vadd.xlane.f32.xlu0 %v3264
        %v3329 = vpop.xlane.xlu0 %3328
        %3330 = vadd.xlane.f32.xlu0 %v3266
        %v3331 = vpop.xlane.xlu0 %3330
        %3332 = vadd.xlane.f32.xlu0 %v3268
        %v3333 = vpop.xlane.xlu0 %3332
        %3334 = vadd.xlane.f32.xlu0 %v3270
        %v3335 = vpop.xlane.xlu0 %3334
        %3336 = vadd.xlane.f32.xlu0 %v3272
        %v3337 = vpop.xlane.xlu0 %3336
        %3338 = vadd.xlane.f32.xlu0 %v3274
        %v3339 = vpop.xlane.xlu0 %3338
        %3340 = vadd.xlane.f32.xlu0 %v3276
        %v3341 = vpop.xlane.xlu0 %3340
        %3342 = vadd.xlane.f32.xlu0 %v3278
        %v3343 = vpop.xlane.xlu0 %3342
        %3344 = vadd.xlane.f32.xlu0 %v3280
        %v3345 = vpop.xlane.xlu0 %3344
        %3346 = vadd.xlane.f32.xlu0 %v3282
        %v3347 = vpop.xlane.xlu0 %3346
        %3348 = vadd.xlane.f32.xlu0 %v3284
        %v3349 = vpop.xlane.xlu0 %3348
        %3350 = vadd.xlane.f32.xlu0 %v3286
        %v3351 = vpop.xlane.xlu0 %3350
        %3352 = vadd.xlane.f32.xlu0 %v3288
        %v3353 = vpop.xlane.xlu0 %3352
        %v3354 = vadd.f32 %v3306, %v3323
        %v3355 = vadd.f32 %v3307, %v3325
        %v3356 = vadd.f32 %v3308, %v3327
        %v3357 = vadd.f32 %v3309, %v3329
        %v3358 = vadd.f32 %v3310, %v3331
        %v3359 = vadd.f32 %v3311, %v3333
        %v3360 = vadd.f32 %v3312, %v3335
        %v3361 = vadd.f32 %v3313, %v3337
        %v3362 = vadd.f32 %v3314, %v3339
        %v3363 = vadd.f32 %v3315, %v3341
        %v3364 = vadd.f32 %v3316, %v3343
        %v3365 = vadd.f32 %v3317, %v3345
        %v3366 = vadd.f32 %v3318, %v3347
        %v3367 = vadd.f32 %v3319, %v3349
        %v3368 = vadd.f32 %v3320, %v3351
        %v3369 = vadd.f32 %v3321, %v3353
        %3370 = vst.msk [vmem:[%s3289] sm:$0xff] %vm1182, %v3354
        %3371 = vst.msk [vmem:[%s3289 + $0x8] sm:$0xff] %vm1182, %v3355
        %3372 = vst.msk [vmem:[%s3289 + $0x10] sm:$0xff] %vm1182, %v3356
        %3373 = vst.msk [vmem:[%s3289 + $0x18] sm:$0xff] %vm1182, %v3357
        %3374 = vst.msk [vmem:[%s3289 + $0x20] sm:$0xff] %vm1182, %v3358
        %3375 = vst.msk [vmem:[%s3289 + $0x28] sm:$0xff] %vm1182, %v3359
        %3376 = vst.msk [vmem:[%s3289 + $0x30] sm:$0xff] %vm1182, %v3360
        %3377 = vst.msk [vmem:[%s3289 + $0x38] sm:$0xff] %vm1182, %v3361
        %3378 = vst.msk [vmem:[%s3289 + $0x40] sm:$0xff] %vm1182, %v3362
        %3379 = vst.msk [vmem:[%s3289 + $0x48] sm:$0xff] %vm1182, %v3363
        %3380 = vst.msk [vmem:[%s3289 + $0x50] sm:$0xff] %vm1182, %v3364
        %3381 = vst.msk [vmem:[%s3289 + $0x58] sm:$0xff] %vm1182, %v3365
        %3382 = vst.msk [vmem:[%s3289 + $0x60] sm:$0xff] %vm1182, %v3366
        %3383 = vst.msk [vmem:[%s3289 + $0x68] sm:$0xff] %vm1182, %v3367
        %3384 = vst.msk [vmem:[%s3289 + $0x70] sm:$0xff] %vm1182, %v3368
        %3385 = vst.msk [vmem:[%s3289 + $0x78] sm:$0xff] %vm1182, %v3369
        %3402 = vrot.lane.b32.xlu0 %v2710, 112
        %v3403 = vpop.permute.xlu0 %3402
        %3404 = vrot.lane.b32.xlu0 %v2711, 112
        %v3405 = vpop.permute.xlu0 %3404
        %3406 = vrot.lane.b32.xlu0 %v2712, 112
        %v3407 = vpop.permute.xlu0 %3406
        %3408 = vrot.lane.b32.xlu0 %v2713, 112
        %v3409 = vpop.permute.xlu0 %3408
        %3410 = vrot.lane.b32.xlu0 %v2714, 112
        %v3411 = vpop.permute.xlu0 %3410
        %3412 = vrot.lane.b32.xlu0 %v2715, 112
        %v3413 = vpop.permute.xlu0 %3412
        %3414 = vrot.lane.b32.xlu0 %v2716, 112
        %v3415 = vpop.permute.xlu0 %3414
        %3416 = vrot.lane.b32.xlu0 %v2717, 112
        %v3417 = vpop.permute.xlu0 %3416
        %3418 = vrot.lane.b32.xlu0 %v2718, 112
        %v3419 = vpop.permute.xlu0 %3418
        %3420 = vrot.lane.b32.xlu0 %v2719, 112
        %v3421 = vpop.permute.xlu0 %3420
        %3422 = vrot.lane.b32.xlu0 %v2720, 112
        %v3423 = vpop.permute.xlu0 %3422
        %3424 = vrot.lane.b32.xlu0 %v2721, 112
        %v3425 = vpop.permute.xlu0 %3424
        %3426 = vrot.lane.b32.xlu0 %v2722, 112
        %v3427 = vpop.permute.xlu0 %3426
        %3428 = vrot.lane.b32.xlu0 %v2723, 112
        %v3429 = vpop.permute.xlu0 %3428
        %3430 = vrot.lane.b32.xlu0 %v2724, 112
        %v3431 = vpop.permute.xlu0 %3430
        %3432 = vrot.lane.b32.xlu0 %v2725, 112
        %v3433 = vpop.permute.xlu0 %3432
        %3450 = vmatprep.subr.mxu0 0.0
        %3451 = vmatpush1.msra.mxu0 %v3403
        %3452 = vmatprep.subr.mxu0 0.0
        %3453 = vmatpush1.msra.mxu0 %v3405
        %3454 = vmatprep.subr.mxu0 0.0
        %3455 = vmatpush1.msra.mxu0 %v3407
        %3456 = vmatprep.subr.mxu0 0.0
        %3457 = vmatpush1.msra.mxu0 %v3409
        %3458 = vmatprep.subr.mxu0 0.0
        %3459 = vmatpush1.msra.mxu0 %v3411
        %3460 = vmatprep.subr.mxu0 0.0
        %3461 = vmatpush1.msra.mxu0 %v3413
        %3462 = vmatprep.subr.mxu0 0.0
        %3463 = vmatpush1.msra.mxu0 %v3415
        %3464 = vmatprep.subr.mxu0 0.0
        %3465 = vmatpush1.msra.mxu0 %v3417
        %3466 = vmatprep.subr.mxu0 0.0
        %3467 = vmatpush1.msra.mxu0 %v3419
        %3468 = vmatprep.subr.mxu0 0.0
        %3469 = vmatpush1.msra.mxu0 %v3421
        %3470 = vmatprep.subr.mxu0 0.0
        %3471 = vmatpush1.msra.mxu0 %v3423
        %3472 = vmatprep.subr.mxu0 0.0
        %3473 = vmatpush1.msra.mxu0 %v3425
        %3474 = vmatprep.subr.mxu0 0.0
        %3475 = vmatpush1.msra.mxu0 %v3427
        %3476 = vmatprep.subr.mxu0 0.0
        %3477 = vmatpush1.msra.mxu0 %v3429
        %3478 = vmatprep.subr.mxu0 0.0
        %3479 = vmatpush1.msra.mxu0 %v3431
        %3480 = vmatprep.subr.mxu0 0.0
        %3481 = vmatpush1.msra.mxu0 %v3433
        %3482 = vmatprep.subr.mxu0 0.0
        %3483 = vmatpush1.msra.mxu0 0.0
        %3484 = vmatprep.subr.mxu0 0.0
        %3485 = vmatpush1.msra.mxu0 0.0
        %3486 = vmatprep.subr.mxu0 0.0
        %3487 = vmatpush1.msra.mxu0 0.0
        %3488 = vmatprep.subr.mxu0 0.0
        %3489 = vmatpush1.msra.mxu0 0.0
        %3490 = vmatprep.subr.mxu0 0.0
        %3491 = vmatpush1.msra.mxu0 0.0
        %3492 = vmatprep.subr.mxu0 0.0
        %3493 = vmatpush1.msra.mxu0 0.0
        %3494 = vmatprep.subr.mxu0 0.0
        %3495 = vmatpush1.msra.mxu0 0.0
        %3496 = vmatprep.subr.mxu0 0.0
        %3497 = vmatpush1.msra.mxu0 0.0
        %3498 = vmatprep.subr.mxu0 0.0
        %3499 = vmatpush1.msra.mxu0 0.0
        %3500 = vmatprep.subr.mxu0 0.0
        %3501 = vmatpush1.msra.mxu0 0.0
        %3502 = vmatprep.subr.mxu0 0.0
        %3503 = vmatpush1.msra.mxu0 0.0
        %3504 = vmatprep.subr.mxu0 0.0
        %3505 = vmatpush1.msra.mxu0 0.0
        %3506 = vmatprep.subr.mxu0 0.0
        %3507 = vmatpush1.msra.mxu0 0.0
        %3508 = vmatprep.subr.mxu0 0.0
        %3509 = vmatpush1.msra.mxu0 0.0
        %3510 = vmatprep.subr.mxu0 0.0
        %3511 = vmatpush1.msra.mxu0 0.0
        %3512 = vmatprep.subr.mxu0 0.0
        %3513 = vmatpush1.msra.mxu0 0.0
        %3514 = vmatprep.mubr.f32.mxu0 0.0
        %3515 = vmatmul.mubr.f32.gmra.mrb[0].mxu0 %v3258
        %v3516 = vpop.f32.mrb[0].mxu0
        %v3517 = vadd.f32 0.0, %v3516
        %v3518 = vpop.f32.mrb[0].mxu0
        %3519 = vmatprep.mubr.f32.mxu0 0.0
        %3520 = vmatmul.mubr.f32.gmra.mrb[0].mxu0 %v3260
        %v3521 = vpop.f32.mrb[0].mxu0
        %v3522 = vadd.f32 0.0, %v3521
        %v3523 = vpop.f32.mrb[0].mxu0
        %3524 = vmatprep.mubr.f32.mxu0 0.0
        %3525 = vmatmul.mubr.f32.gmra.mrb[0].mxu0 %v3262
        %v3526 = vpop.f32.mrb[0].mxu0
        %v3527 = vadd.f32 0.0, %v3526
        %v3528 = vpop.f32.mrb[0].mxu0
        %3529 = vmatprep.mubr.f32.mxu0 0.0
        %3530 = vmatmul.mubr.f32.gmra.mrb[0].mxu0 %v3264
        %v3531 = vpop.f32.mrb[0].mxu0
        %v3532 = vadd.f32 0.0, %v3531
        %v3533 = vpop.f32.mrb[0].mxu0
        %3534 = vmatprep.mubr.f32.mxu0 0.0
        %3535 = vmatmul.mubr.f32.gmra.mrb[0].mxu0 %v3266
        %v3536 = vpop.f32.mrb[0].mxu0
        %v3537 = vadd.f32 0.0, %v3536
        %v3538 = vpop.f32.mrb[0].mxu0
        %3539 = vmatprep.mubr.f32.mxu0 0.0
        %3540 = vmatmul.mubr.f32.gmra.mrb[0].mxu0 %v3268
        %v3541 = vpop.f32.mrb[0].mxu0
        %v3542 = vadd.f32 0.0, %v3541
        %v3543 = vpop.f32.mrb[0].mxu0
        %3544 = vmatprep.mubr.f32.mxu0 0.0
        %3545 = vmatmul.mubr.f32.gmra.mrb[0].mxu0 %v3270
        %v3546 = vpop.f32.mrb[0].mxu0
        %v3547 = vadd.f32 0.0, %v3546
        %v3548 = vpop.f32.mrb[0].mxu0
        %3549 = vmatprep.mubr.f32.mxu0 0.0
        %3550 = vmatmul.mubr.f32.gmra.mrb[0].mxu0 %v3272
        %v3551 = vpop.f32.mrb[0].mxu0
        %v3552 = vadd.f32 0.0, %v3551
        %v3553 = vpop.f32.mrb[0].mxu0
        %3554 = vmatprep.mubr.f32.mxu0 0.0
        %3555 = vmatmul.mubr.f32.gmra.mrb[0].mxu0 %v3274
        %v3556 = vpop.f32.mrb[0].mxu0
        %v3557 = vadd.f32 0.0, %v3556
        %v3558 = vpop.f32.mrb[0].mxu0
        %3559 = vmatprep.mubr.f32.mxu0 0.0
        %3560 = vmatmul.mubr.f32.gmra.mrb[0].mxu0 %v3276
        %v3561 = vpop.f32.mrb[0].mxu0
        %v3562 = vadd.f32 0.0, %v3561
        %v3563 = vpop.f32.mrb[0].mxu0
        %3564 = vmatprep.mubr.f32.mxu0 0.0
        %3565 = vmatmul.mubr.f32.gmra.mrb[0].mxu0 %v3278
        %v3566 = vpop.f32.mrb[0].mxu0
        %v3567 = vadd.f32 0.0, %v3566
        %v3568 = vpop.f32.mrb[0].mxu0
        %3569 = vmatprep.mubr.f32.mxu0 0.0
        %3570 = vmatmul.mubr.f32.gmra.mrb[0].mxu0 %v3280
        %v3571 = vpop.f32.mrb[0].mxu0
        %v3572 = vadd.f32 0.0, %v3571
        %v3573 = vpop.f32.mrb[0].mxu0
        %3574 = vmatprep.mubr.f32.mxu0 0.0
        %3575 = vmatmul.mubr.f32.gmra.mrb[0].mxu0 %v3282
        %v3576 = vpop.f32.mrb[0].mxu0
        %v3577 = vadd.f32 0.0, %v3576
        %v3578 = vpop.f32.mrb[0].mxu0
        %3579 = vmatprep.mubr.f32.mxu0 0.0
        %3580 = vmatmul.mubr.f32.gmra.mrb[0].mxu0 %v3284
        %v3581 = vpop.f32.mrb[0].mxu0
        %v3582 = vadd.f32 0.0, %v3581
        %v3583 = vpop.f32.mrb[0].mxu0
        %3584 = vmatprep.mubr.f32.mxu0 0.0
        %3585 = vmatmul.mubr.f32.gmra.mrb[0].mxu0 %v3286
        %v3586 = vpop.f32.mrb[0].mxu0
        %v3587 = vadd.f32 0.0, %v3586
        %v3588 = vpop.f32.mrb[0].mxu0
        %3589 = vmatprep.mubr.f32.mxu0 0.0
        %3590 = vmatmul.mubr.f32.gmra.mrb[0].mxu0 %v3288
        %v3591 = vpop.f32.mrb[0].mxu0
        %v3592 = vadd.f32 0.0, %v3591
        %v3593 = vpop.f32.mrb[0].mxu0
        %3594 = vdwg.mxu0
        %v3595 = vld [vmem:[#allocation4] sm:$0xff]
        %v3596 = vld [vmem:[#allocation4 + $0x8] sm:$0xff]
        %v3597 = vld [vmem:[#allocation4 + $0x10] sm:$0xff]
        %v3598 = vld [vmem:[#allocation4 + $0x18] sm:$0xff]
        %v3599 = vld [vmem:[#allocation4 + $0x20] sm:$0xff]
        %v3600 = vld [vmem:[#allocation4 + $0x28] sm:$0xff]
        %v3601 = vld [vmem:[#allocation4 + $0x30] sm:$0xff]
        %v3602 = vld [vmem:[#allocation4 + $0x38] sm:$0xff]
        %v3603 = vld [vmem:[#allocation4 + $0x40] sm:$0xff]
        %v3604 = vld [vmem:[#allocation4 + $0x48] sm:$0xff]
        %v3605 = vld [vmem:[#allocation4 + $0x50] sm:$0xff]
        %v3606 = vld [vmem:[#allocation4 + $0x58] sm:$0xff]
        %v3607 = vld [vmem:[#allocation4 + $0x60] sm:$0xff]
        %v3608 = vld [vmem:[#allocation4 + $0x68] sm:$0xff]
        %v3609 = vld [vmem:[#allocation4 + $0x70] sm:$0xff]
        %v3610 = vld [vmem:[#allocation4 + $0x78] sm:$0xff]
        %3612 = vset.pattern.permute.xlu0 0
        %3613 = vperm.xlu0 %3612, %v3130
        %v3614 = vpop.permute.xlu0 %3613
        %3617 = vset.pattern.permute.xlu0 0
        %3618 = vperm.xlu0 %3617, %v3132
        %v3619 = vpop.permute.xlu0 %3618
        %3622 = vset.pattern.permute.xlu0 0
        %3623 = vperm.xlu0 %3622, %v3134
        %v3624 = vpop.permute.xlu0 %3623
        %3627 = vset.pattern.permute.xlu0 0
        %3628 = vperm.xlu0 %3627, %v3136
        %v3629 = vpop.permute.xlu0 %3628
        %3632 = vset.pattern.permute.xlu0 0
        %3633 = vperm.xlu0 %3632, %v3138
        %v3634 = vpop.permute.xlu0 %3633
        %3637 = vset.pattern.permute.xlu0 0
        %3638 = vperm.xlu0 %3637, %v3140
        %v3639 = vpop.permute.xlu0 %3638
        %3642 = vset.pattern.permute.xlu0 0
        %3643 = vperm.xlu0 %3642, %v3142
        %v3644 = vpop.permute.xlu0 %3643
        %3647 = vset.pattern.permute.xlu0 0
        %3648 = vperm.xlu0 %3647, %v3144
        %v3649 = vpop.permute.xlu0 %3648
        %3652 = vset.pattern.permute.xlu0 0
        %3653 = vperm.xlu0 %3652, %v3146
        %v3654 = vpop.permute.xlu0 %3653
        %3657 = vset.pattern.permute.xlu0 0
        %3658 = vperm.xlu0 %3657, %v3148
        %v3659 = vpop.permute.xlu0 %3658
        %3662 = vset.pattern.permute.xlu0 0
        %3663 = vperm.xlu0 %3662, %v3150
        %v3664 = vpop.permute.xlu0 %3663
        %3667 = vset.pattern.permute.xlu0 0
        %3668 = vperm.xlu0 %3667, %v3152
        %v3669 = vpop.permute.xlu0 %3668
        %3672 = vset.pattern.permute.xlu0 0
        %3673 = vperm.xlu0 %3672, %v3154
        %v3674 = vpop.permute.xlu0 %3673
        %3677 = vset.pattern.permute.xlu0 0
        %3678 = vperm.xlu0 %3677, %v3156
        %v3679 = vpop.permute.xlu0 %3678
        %3682 = vset.pattern.permute.xlu0 0
        %3683 = vperm.xlu0 %3682, %v3158
        %v3684 = vpop.permute.xlu0 %3683
        %3687 = vset.pattern.permute.xlu0 0
        %3688 = vperm.xlu0 %3687, %v3160
        %v3689 = vpop.permute.xlu0 %3688
        %v3691 = vmul.f32 %v3614, %v3595
        %v3692 = vmul.f32 %v3619, %v3596
        %v3693 = vmul.f32 %v3624, %v3597
        %v3694 = vmul.f32 %v3629, %v3598
        %v3695 = vmul.f32 %v3634, %v3599
        %v3696 = vmul.f32 %v3639, %v3600
        %v3697 = vmul.f32 %v3644, %v3601
        %v3698 = vmul.f32 %v3649, %v3602
        %v3699 = vmul.f32 %v3654, %v3603
        %v3700 = vmul.f32 %v3659, %v3604
        %v3701 = vmul.f32 %v3664, %v3605
        %v3702 = vmul.f32 %v3669, %v3606
        %v3703 = vmul.f32 %v3674, %v3607
        %v3704 = vmul.f32 %v3679, %v3608
        %v3705 = vmul.f32 %v3684, %v3609
        %v3706 = vmul.f32 %v3689, %v3610
        %3723 = vrot.lane.b32.xlu0 %v3517, 16
        %v3724 = vpop.permute.xlu0 %3723
        %3725 = vrot.lane.b32.xlu0 %v3522, 16
        %v3726 = vpop.permute.xlu0 %3725
        %3727 = vrot.lane.b32.xlu0 %v3527, 16
        %v3728 = vpop.permute.xlu0 %3727
        %3729 = vrot.lane.b32.xlu0 %v3532, 16
        %v3730 = vpop.permute.xlu0 %3729
        %3731 = vrot.lane.b32.xlu0 %v3537, 16
        %v3732 = vpop.permute.xlu0 %3731
        %3733 = vrot.lane.b32.xlu0 %v3542, 16
        %v3734 = vpop.permute.xlu0 %3733
        %3735 = vrot.lane.b32.xlu0 %v3547, 16
        %v3736 = vpop.permute.xlu0 %3735
        %3737 = vrot.lane.b32.xlu0 %v3552, 16
        %v3738 = vpop.permute.xlu0 %3737
        %3739 = vrot.lane.b32.xlu0 %v3557, 16
        %v3740 = vpop.permute.xlu0 %3739
        %3741 = vrot.lane.b32.xlu0 %v3562, 16
        %v3742 = vpop.permute.xlu0 %3741
        %3743 = vrot.lane.b32.xlu0 %v3567, 16
        %v3744 = vpop.permute.xlu0 %3743
        %3745 = vrot.lane.b32.xlu0 %v3572, 16
        %v3746 = vpop.permute.xlu0 %3745
        %3747 = vrot.lane.b32.xlu0 %v3577, 16
        %v3748 = vpop.permute.xlu0 %3747
        %3749 = vrot.lane.b32.xlu0 %v3582, 16
        %v3750 = vpop.permute.xlu0 %3749
        %3751 = vrot.lane.b32.xlu0 %v3587, 16
        %v3752 = vpop.permute.xlu0 %3751
        %3753 = vrot.lane.b32.xlu0 %v3592, 16
        %v3754 = vpop.permute.xlu0 %3753
        %v3771 = vadd.f32 %v3691, %v3724
        %v3772 = vadd.f32 %v3692, %v3726
        %v3773 = vadd.f32 %v3693, %v3728
        %v3774 = vadd.f32 %v3694, %v3730
        %v3775 = vadd.f32 %v3695, %v3732
        %v3776 = vadd.f32 %v3696, %v3734
        %v3777 = vadd.f32 %v3697, %v3736
        %v3778 = vadd.f32 %v3698, %v3738
        %v3779 = vadd.f32 %v3699, %v3740
        %v3780 = vadd.f32 %v3700, %v3742
        %v3781 = vadd.f32 %v3701, %v3744
        %v3782 = vadd.f32 %v3702, %v3746
        %v3783 = vadd.f32 %v3703, %v3748
        %v3784 = vadd.f32 %v3704, %v3750
        %v3785 = vadd.f32 %v3705, %v3752
        %v3786 = vadd.f32 %v3706, %v3754
        %vm3787 = vcmask 195712
        %3788 = vst.msk [vmem:[#allocation4] sm:$0xff] %vm3787, %v3771
        %3789 = vst.msk [vmem:[#allocation4 + $0x8] sm:$0xff] %vm3787, %v3772
        %3790 = vst.msk [vmem:[#allocation4 + $0x10] sm:$0xff] %vm3787, %v3773
        %3791 = vst.msk [vmem:[#allocation4 + $0x18] sm:$0xff] %vm3787, %v3774
        %3792 = vst.msk [vmem:[#allocation4 + $0x20] sm:$0xff] %vm3787, %v3775
        %3793 = vst.msk [vmem:[#allocation4 + $0x28] sm:$0xff] %vm3787, %v3776
        %3794 = vst.msk [vmem:[#allocation4 + $0x30] sm:$0xff] %vm3787, %v3777
        %3795 = vst.msk [vmem:[#allocation4 + $0x38] sm:$0xff] %vm3787, %v3778
        %3796 = vst.msk [vmem:[#allocation4 + $0x40] sm:$0xff] %vm3787, %v3779
        %3797 = vst.msk [vmem:[#allocation4 + $0x48] sm:$0xff] %vm3787, %v3780
        %3798 = vst.msk [vmem:[#allocation4 + $0x50] sm:$0xff] %vm3787, %v3781
        %3799 = vst.msk [vmem:[#allocation4 + $0x58] sm:$0xff] %vm3787, %v3782
        %3800 = vst.msk [vmem:[#allocation4 + $0x60] sm:$0xff] %vm3787, %v3783
        %3801 = vst.msk [vmem:[#allocation4 + $0x68] sm:$0xff] %vm3787, %v3784
        %3802 = vst.msk [vmem:[#allocation4 + $0x70] sm:$0xff] %vm3787, %v3785
        %3803 = vst.msk [vmem:[#allocation4 + $0x78] sm:$0xff] %vm3787, %v3786
        %3804 = vst.msk [vmem:[%s3048] sm:$0xff] %vm1182, %v3097
        %3805 = vst.msk [vmem:[%s3048 + $0x8] sm:$0xff] %vm1182, %v3098
        %3806 = vst.msk [vmem:[%s3048 + $0x10] sm:$0xff] %vm1182, %v3099
        %3807 = vst.msk [vmem:[%s3048 + $0x18] sm:$0xff] %vm1182, %v3100
        %3808 = vst.msk [vmem:[%s3048 + $0x20] sm:$0xff] %vm1182, %v3101
        %3809 = vst.msk [vmem:[%s3048 + $0x28] sm:$0xff] %vm1182, %v3102
        %3810 = vst.msk [vmem:[%s3048 + $0x30] sm:$0xff] %vm1182, %v3103
        %3811 = vst.msk [vmem:[%s3048 + $0x38] sm:$0xff] %vm1182, %v3104
        %3812 = vst.msk [vmem:[%s3048 + $0x40] sm:$0xff] %vm1182, %v3105
        %3813 = vst.msk [vmem:[%s3048 + $0x48] sm:$0xff] %vm1182, %v3106
        %3814 = vst.msk [vmem:[%s3048 + $0x50] sm:$0xff] %vm1182, %v3107
        %3815 = vst.msk [vmem:[%s3048 + $0x58] sm:$0xff] %vm1182, %v3108
        %3816 = vst.msk [vmem:[%s3048 + $0x60] sm:$0xff] %vm1182, %v3109
        %3817 = vst.msk [vmem:[%s3048 + $0x68] sm:$0xff] %vm1182, %v3110
        %3818 = vst.msk [vmem:[%s3048 + $0x70] sm:$0xff] %vm1182, %v3111
        %3819 = vst.msk [vmem:[%s3048 + $0x78] sm:$0xff] %vm1182, %v3112
        %v3820 = vld [vmem:[%s357] sm:$0xff]
        %v3821 = vld [vmem:[%s357 + $0x8] sm:$0xff]
        %v3822 = vld [vmem:[%s357 + $0x10] sm:$0xff]
        %v3823 = vld [vmem:[%s357 + $0x18] sm:$0xff]
        %v3824 = vld [vmem:[%s357 + $0x20] sm:$0xff]
        %v3825 = vld [vmem:[%s357 + $0x28] sm:$0xff]
        %v3826 = vld [vmem:[%s357 + $0x30] sm:$0xff]
        %v3827 = vld [vmem:[%s357 + $0x38] sm:$0xff]
        %v3828 = vld [vmem:[%s357 + $0x40] sm:$0xff]
        %v3829 = vld [vmem:[%s357 + $0x48] sm:$0xff]
        %v3830 = vld [vmem:[%s357 + $0x50] sm:$0xff]
        %v3831 = vld [vmem:[%s357 + $0x58] sm:$0xff]
        %v3832 = vld [vmem:[%s357 + $0x60] sm:$0xff]
        %v3833 = vld [vmem:[%s357 + $0x68] sm:$0xff]
        %v3834 = vld [vmem:[%s357 + $0x70] sm:$0xff]
        %v3835 = vld [vmem:[%s357 + $0x78] sm:$0xff]
        %v3836 = vmul.f32 %v3820, 2.828427
        %v3837 = vmul.f32 %v3821, 2.828427
        %v3838 = vmul.f32 %v3822, 2.828427
        %v3839 = vmul.f32 %v3823, 2.828427
        %v3840 = vmul.f32 %v3824, 2.828427
        %v3841 = vmul.f32 %v3825, 2.828427
        %v3842 = vmul.f32 %v3826, 2.828427
        %v3843 = vmul.f32 %v3827, 2.828427
        %v3844 = vmul.f32 %v3828, 2.828427
        %v3845 = vmul.f32 %v3829, 2.828427
        %v3846 = vmul.f32 %v3830, 2.828427
        %v3847 = vmul.f32 %v3831, 2.828427
        %v3848 = vmul.f32 %v3832, 2.828427
        %v3849 = vmul.f32 %v3833, 2.828427
        %v3850 = vmul.f32 %v3834, 2.828427
        %v3851 = vmul.f32 %v3835, 2.828427
        %v3852 = vld [vmem:[%s367] sm:$0xff]
        %v3853 = vld [vmem:[%s367 + $0x8] sm:$0xff]
        %v3854 = vld [vmem:[%s367 + $0x10] sm:$0xff]
        %v3855 = vld [vmem:[%s367 + $0x18] sm:$0xff]
        %v3856 = vld [vmem:[%s367 + $0x20] sm:$0xff]
        %v3857 = vld [vmem:[%s367 + $0x28] sm:$0xff]
        %v3858 = vld [vmem:[%s367 + $0x30] sm:$0xff]
        %v3859 = vld [vmem:[%s367 + $0x38] sm:$0xff]
        %v3860 = vld [vmem:[%s367 + $0x40] sm:$0xff]
        %v3861 = vld [vmem:[%s367 + $0x48] sm:$0xff]
        %v3862 = vld [vmem:[%s367 + $0x50] sm:$0xff]
        %v3863 = vld [vmem:[%s367 + $0x58] sm:$0xff]
        %v3864 = vld [vmem:[%s367 + $0x60] sm:$0xff]
        %v3865 = vld [vmem:[%s367 + $0x68] sm:$0xff]
        %v3866 = vld [vmem:[%s367 + $0x70] sm:$0xff]
        %v3867 = vld [vmem:[%s367 + $0x78] sm:$0xff]
        %v3868 = vld [vmem:[%s377] sm:$0xff]
        %v3869 = vld [vmem:[%s377 + $0x8] sm:$0xff]
        %v3870 = vld [vmem:[%s377 + $0x10] sm:$0xff]
        %v3871 = vld [vmem:[%s377 + $0x18] sm:$0xff]
        %v3872 = vld [vmem:[%s377 + $0x20] sm:$0xff]
        %v3873 = vld [vmem:[%s377 + $0x28] sm:$0xff]
        %v3874 = vld [vmem:[%s377 + $0x30] sm:$0xff]
        %v3875 = vld [vmem:[%s377 + $0x38] sm:$0xff]
        %v3876 = vld [vmem:[%s377 + $0x40] sm:$0xff]
        %v3877 = vld [vmem:[%s377 + $0x48] sm:$0xff]
        %v3878 = vld [vmem:[%s377 + $0x50] sm:$0xff]
        %v3879 = vld [vmem:[%s377 + $0x58] sm:$0xff]
        %v3880 = vld [vmem:[%s377 + $0x60] sm:$0xff]
        %v3881 = vld [vmem:[%s377 + $0x68] sm:$0xff]
        %v3882 = vld [vmem:[%s377 + $0x70] sm:$0xff]
        %v3883 = vld [vmem:[%s377 + $0x78] sm:$0xff]
        %s3884 = scalar_lea.vmem %s293, 384 [#allocation5]
        %v3885 = vld [vmem:[%s3884] sm:$0xff]
        %v3886 = vld [vmem:[%s3884 + $0x8] sm:$0xff]
        %v3887 = vld [vmem:[%s3884 + $0x10] sm:$0xff]
        %v3888 = vld [vmem:[%s3884 + $0x18] sm:$0xff]
        %v3889 = vld [vmem:[%s3884 + $0x20] sm:$0xff]
        %v3890 = vld [vmem:[%s3884 + $0x28] sm:$0xff]
        %v3891 = vld [vmem:[%s3884 + $0x30] sm:$0xff]
        %v3892 = vld [vmem:[%s3884 + $0x38] sm:$0xff]
        %v3893 = vld [vmem:[%s3884 + $0x40] sm:$0xff]
        %v3894 = vld [vmem:[%s3884 + $0x48] sm:$0xff]
        %v3895 = vld [vmem:[%s3884 + $0x50] sm:$0xff]
        %v3896 = vld [vmem:[%s3884 + $0x58] sm:$0xff]
        %v3897 = vld [vmem:[%s3884 + $0x60] sm:$0xff]
        %v3898 = vld [vmem:[%s3884 + $0x68] sm:$0xff]
        %v3899 = vld [vmem:[%s3884 + $0x70] sm:$0xff]
        %v3900 = vld [vmem:[%s3884 + $0x78] sm:$0xff]
        %3917 = vrot.lane.b32.xlu0 %v3836, 104
        %v3918 = vpop.permute.xlu0 %3917
        %3919 = vrot.lane.b32.xlu0 %v3837, 104
        %v3920 = vpop.permute.xlu0 %3919
        %3921 = vrot.lane.b32.xlu0 %v3838, 104
        %v3922 = vpop.permute.xlu0 %3921
        %3923 = vrot.lane.b32.xlu0 %v3839, 104
        %v3924 = vpop.permute.xlu0 %3923
        %3925 = vrot.lane.b32.xlu0 %v3840, 104
        %v3926 = vpop.permute.xlu0 %3925
        %3927 = vrot.lane.b32.xlu0 %v3841, 104
        %v3928 = vpop.permute.xlu0 %3927
        %3929 = vrot.lane.b32.xlu0 %v3842, 104
        %v3930 = vpop.permute.xlu0 %3929
        %3931 = vrot.lane.b32.xlu0 %v3843, 104
        %v3932 = vpop.permute.xlu0 %3931
        %3933 = vrot.lane.b32.xlu0 %v3844, 104
        %v3934 = vpop.permute.xlu0 %3933
        %3935 = vrot.lane.b32.xlu0 %v3845, 104
        %v3936 = vpop.permute.xlu0 %3935
        %3937 = vrot.lane.b32.xlu0 %v3846, 104
        %v3938 = vpop.permute.xlu0 %3937
        %3939 = vrot.lane.b32.xlu0 %v3847, 104
        %v3940 = vpop.permute.xlu0 %3939
        %3941 = vrot.lane.b32.xlu0 %v3848, 104
        %v3942 = vpop.permute.xlu0 %3941
        %3943 = vrot.lane.b32.xlu0 %v3849, 104
        %v3944 = vpop.permute.xlu0 %3943
        %3945 = vrot.lane.b32.xlu0 %v3850, 104
        %v3946 = vpop.permute.xlu0 %3945
        %3947 = vrot.lane.b32.xlu0 %v3851, 104
        %v3948 = vpop.permute.xlu0 %3947
        %3965 = vrot.lane.b32.xlu0 %v3852, 104
        %v3966 = vpop.permute.xlu0 %3965
        %3967 = vrot.lane.b32.xlu0 %v3853, 104
        %v3968 = vpop.permute.xlu0 %3967
        %3969 = vrot.lane.b32.xlu0 %v3854, 104
        %v3970 = vpop.permute.xlu0 %3969
        %3971 = vrot.lane.b32.xlu0 %v3855, 104
        %v3972 = vpop.permute.xlu0 %3971
        %3973 = vrot.lane.b32.xlu0 %v3856, 104
        %v3974 = vpop.permute.xlu0 %3973
        %3975 = vrot.lane.b32.xlu0 %v3857, 104
        %v3976 = vpop.permute.xlu0 %3975
        %3977 = vrot.lane.b32.xlu0 %v3858, 104
        %v3978 = vpop.permute.xlu0 %3977
        %3979 = vrot.lane.b32.xlu0 %v3859, 104
        %v3980 = vpop.permute.xlu0 %3979
        %3981 = vrot.lane.b32.xlu0 %v3860, 104
        %v3982 = vpop.permute.xlu0 %3981
        %3983 = vrot.lane.b32.xlu0 %v3861, 104
        %v3984 = vpop.permute.xlu0 %3983
        %3985 = vrot.lane.b32.xlu0 %v3862, 104
        %v3986 = vpop.permute.xlu0 %3985
        %3987 = vrot.lane.b32.xlu0 %v3863, 104
        %v3988 = vpop.permute.xlu0 %3987
        %3989 = vrot.lane.b32.xlu0 %v3864, 104
        %v3990 = vpop.permute.xlu0 %3989
        %3991 = vrot.lane.b32.xlu0 %v3865, 104
        %v3992 = vpop.permute.xlu0 %3991
        %3993 = vrot.lane.b32.xlu0 %v3866, 104
        %v3994 = vpop.permute.xlu0 %3993
        %3995 = vrot.lane.b32.xlu0 %v3867, 104
        %v3996 = vpop.permute.xlu0 %3995
        %v3997 = vsel %vm620, %v3918, 0
        %v3999 = vsel %vm620, %v3920, 0
        %v4001 = vsel %vm620, %v3922, 0
        %v4003 = vsel %vm620, %v3924, 0
        %v4005 = vsel %vm620, %v3926, 0
        %v4007 = vsel %vm620, %v3928, 0
        %v4009 = vsel %vm620, %v3930, 0
        %v4011 = vsel %vm620, %v3932, 0
        %v4013 = vsel %vm620, %v3934, 0
        %v4015 = vsel %vm620, %v3936, 0
        %v4017 = vsel %vm620, %v3938, 0
        %v4019 = vsel %vm620, %v3940, 0
        %v4021 = vsel %vm620, %v3942, 0
        %v4023 = vsel %vm620, %v3944, 0
        %v4025 = vsel %vm620, %v3946, 0
        %v4027 = vsel %vm620, %v3948, 0
        %v4029 = vsel %vm620, %v3966, 0
        %v4031 = vsel %vm620, %v3968, 0
        %v4033 = vsel %vm620, %v3970, 0
        %v4035 = vsel %vm620, %v3972, 0
        %v4037 = vsel %vm620, %v3974, 0
        %v4039 = vsel %vm620, %v3976, 0
        %v4041 = vsel %vm620, %v3978, 0
        %v4043 = vsel %vm620, %v3980, 0
        %v4045 = vsel %vm620, %v3982, 0
        %v4047 = vsel %vm620, %v3984, 0
        %v4049 = vsel %vm620, %v3986, 0
        %v4051 = vsel %vm620, %v3988, 0
        %v4053 = vsel %vm620, %v3990, 0
        %v4055 = vsel %vm620, %v3992, 0
        %v4057 = vsel %vm620, %v3994, 0
        %v4059 = vsel %vm620, %v3996, 0
        %4061 = vmatprep.subr.mxu0 0.0
        %4062 = vmatpush1.xpose.msra.mxu0 %v4029
        %4063 = vmatprep.subr.mxu0 0.0
        %4064 = vmatpush1.xpose.msra.mxu0 %v4031
        %4065 = vmatprep.subr.mxu0 0.0
        %4066 = vmatpush1.xpose.msra.mxu0 %v4033
        %4067 = vmatprep.subr.mxu0 0.0
        %4068 = vmatpush1.xpose.msra.mxu0 %v4035
        %4069 = vmatprep.subr.mxu0 0.0
        %4070 = vmatpush1.xpose.msra.mxu0 %v4037
        %4071 = vmatprep.subr.mxu0 0.0
        %4072 = vmatpush1.xpose.msra.mxu0 %v4039
        %4073 = vmatprep.subr.mxu0 0.0
        %4074 = vmatpush1.xpose.msra.mxu0 %v4041
        %4075 = vmatprep.subr.mxu0 0.0
        %4076 = vmatpush1.xpose.msra.mxu0 %v4043
        %4077 = vmatprep.subr.mxu0 0.0
        %4078 = vmatpush1.xpose.msra.mxu0 %v4045
        %4079 = vmatprep.subr.mxu0 0.0
        %4080 = vmatpush1.xpose.msra.mxu0 %v4047
        %4081 = vmatprep.subr.mxu0 0.0
        %4082 = vmatpush1.xpose.msra.mxu0 %v4049
        %4083 = vmatprep.subr.mxu0 0.0
        %4084 = vmatpush1.xpose.msra.mxu0 %v4051
        %4085 = vmatprep.subr.mxu0 0.0
        %4086 = vmatpush1.xpose.msra.mxu0 %v4053
        %4087 = vmatprep.subr.mxu0 0.0
        %4088 = vmatpush1.xpose.msra.mxu0 %v4055
        %4089 = vmatprep.subr.mxu0 0.0
        %4090 = vmatpush1.xpose.msra.mxu0 %v4057
        %4091 = vmatprep.subr.mxu0 0.0
        %4092 = vmatpush1.xpose.msra.mxu0 %v4059
        %4093 = vmatprep.subr.mxu0 0.0
        %4094 = vmatpush1.xpose.msra.mxu0 0.0
        %4095 = vmatprep.subr.mxu0 0.0
        %4096 = vmatpush1.xpose.msra.mxu0 0.0
        %4097 = vmatprep.subr.mxu0 0.0
        %4098 = vmatpush1.xpose.msra.mxu0 0.0
        %4099 = vmatprep.subr.mxu0 0.0
        %4100 = vmatpush1.xpose.msra.mxu0 0.0
        %4101 = vmatprep.subr.mxu0 0.0
        %4102 = vmatpush1.xpose.msra.mxu0 0.0
        %4103 = vmatprep.subr.mxu0 0.0
        %4104 = vmatpush1.xpose.msra.mxu0 0.0
        %4105 = vmatprep.subr.mxu0 0.0
        %4106 = vmatpush1.xpose.msra.mxu0 0.0
        %4107 = vmatprep.subr.mxu0 0.0
        %4108 = vmatpush1.xpose.msra.mxu0 0.0
        %4109 = vmatprep.subr.mxu0 0.0
        %4110 = vmatpush1.xpose.msra.mxu0 0.0
        %4111 = vmatprep.subr.mxu0 0.0
        %4112 = vmatpush1.xpose.msra.mxu0 0.0
        %4113 = vmatprep.subr.mxu0 0.0
        %4114 = vmatpush1.xpose.msra.mxu0 0.0
        %4115 = vmatprep.subr.mxu0 0.0
        %4116 = vmatpush1.xpose.msra.mxu0 0.0
        %4117 = vmatprep.subr.mxu0 0.0
        %4118 = vmatpush1.xpose.msra.mxu0 0.0
        %4119 = vmatprep.subr.mxu0 0.0
        %4120 = vmatpush1.xpose.msra.mxu0 0.0
        %4121 = vmatprep.subr.mxu0 0.0
        %4122 = vmatpush1.xpose.msra.mxu0 0.0
        %4123 = vmatprep.subr.mxu0 0.0
        %4124 = vmatpush1.xpose.msra.mxu0 0.0
        %4125 = vmatprep.mubr.f32.mxu0 0.0
        %4126 = vmatmul.mubr.f32.gmra.mrb[0].mxu0 %v3997
        %v4127 = vpop.f32.mrb[0].mxu0
        %v4128 = vadd.f32 %v3885, %v4127
        %v4129 = vpop.f32.mrb[0].mxu0
        %4130 = vmatprep.mubr.f32.mxu0 0.0
        %4131 = vmatmul.mubr.f32.gmra.mrb[0].mxu0 %v3999
        %v4132 = vpop.f32.mrb[0].mxu0
        %v4133 = vadd.f32 %v3886, %v4132
        %v4134 = vpop.f32.mrb[0].mxu0
        %4135 = vmatprep.mubr.f32.mxu0 0.0
        %4136 = vmatmul.mubr.f32.gmra.mrb[0].mxu0 %v4001
        %v4137 = vpop.f32.mrb[0].mxu0
        %v4138 = vadd.f32 %v3887, %v4137
        %v4139 = vpop.f32.mrb[0].mxu0
        %4140 = vmatprep.mubr.f32.mxu0 0.0
        %4141 = vmatmul.mubr.f32.gmra.mrb[0].mxu0 %v4003
        %v4142 = vpop.f32.mrb[0].mxu0
        %v4143 = vadd.f32 %v3888, %v4142
        %v4144 = vpop.f32.mrb[0].mxu0
        %4145 = vmatprep.mubr.f32.mxu0 0.0
        %4146 = vmatmul.mubr.f32.gmra.mrb[0].mxu0 %v4005
        %v4147 = vpop.f32.mrb[0].mxu0
        %v4148 = vadd.f32 %v3889, %v4147
        %v4149 = vpop.f32.mrb[0].mxu0
        %4150 = vmatprep.mubr.f32.mxu0 0.0
        %4151 = vmatmul.mubr.f32.gmra.mrb[0].mxu0 %v4007
        %v4152 = vpop.f32.mrb[0].mxu0
        %v4153 = vadd.f32 %v3890, %v4152
        %v4154 = vpop.f32.mrb[0].mxu0
        %4155 = vmatprep.mubr.f32.mxu0 0.0
        %4156 = vmatmul.mubr.f32.gmra.mrb[0].mxu0 %v4009
        %v4157 = vpop.f32.mrb[0].mxu0
        %v4158 = vadd.f32 %v3891, %v4157
        %v4159 = vpop.f32.mrb[0].mxu0
        %4160 = vmatprep.mubr.f32.mxu0 0.0
        %4161 = vmatmul.mubr.f32.gmra.mrb[0].mxu0 %v4011
        %v4162 = vpop.f32.mrb[0].mxu0
        %v4163 = vadd.f32 %v3892, %v4162
        %v4164 = vpop.f32.mrb[0].mxu0
        %4165 = vmatprep.mubr.f32.mxu0 0.0
        %4166 = vmatmul.mubr.f32.gmra.mrb[0].mxu0 %v4013
        %v4167 = vpop.f32.mrb[0].mxu0
        %v4168 = vadd.f32 %v3893, %v4167
        %v4169 = vpop.f32.mrb[0].mxu0
        %4170 = vmatprep.mubr.f32.mxu0 0.0
        %4171 = vmatmul.mubr.f32.gmra.mrb[0].mxu0 %v4015
        %v4172 = vpop.f32.mrb[0].mxu0
        %v4173 = vadd.f32 %v3894, %v4172
        %v4174 = vpop.f32.mrb[0].mxu0
        %4175 = vmatprep.mubr.f32.mxu0 0.0
        %4176 = vmatmul.mubr.f32.gmra.mrb[0].mxu0 %v4017
        %v4177 = vpop.f32.mrb[0].mxu0
        %v4178 = vadd.f32 %v3895, %v4177
        %v4179 = vpop.f32.mrb[0].mxu0
        %4180 = vmatprep.mubr.f32.mxu0 0.0
        %4181 = vmatmul.mubr.f32.gmra.mrb[0].mxu0 %v4019
        %v4182 = vpop.f32.mrb[0].mxu0
        %v4183 = vadd.f32 %v3896, %v4182
        %v4184 = vpop.f32.mrb[0].mxu0
        %4185 = vmatprep.mubr.f32.mxu0 0.0
        %4186 = vmatmul.mubr.f32.gmra.mrb[0].mxu0 %v4021
        %v4187 = vpop.f32.mrb[0].mxu0
        %v4188 = vadd.f32 %v3897, %v4187
        %v4189 = vpop.f32.mrb[0].mxu0
        %4190 = vmatprep.mubr.f32.mxu0 0.0
        %4191 = vmatmul.mubr.f32.gmra.mrb[0].mxu0 %v4023
        %v4192 = vpop.f32.mrb[0].mxu0
        %v4193 = vadd.f32 %v3898, %v4192
        %v4194 = vpop.f32.mrb[0].mxu0
        %4195 = vmatprep.mubr.f32.mxu0 0.0
        %4196 = vmatmul.mubr.f32.gmra.mrb[0].mxu0 %v4025
        %v4197 = vpop.f32.mrb[0].mxu0
        %v4198 = vadd.f32 %v3899, %v4197
        %v4199 = vpop.f32.mrb[0].mxu0
        %4200 = vmatprep.mubr.f32.mxu0 0.0
        %4201 = vmatmul.mubr.f32.gmra.mrb[0].mxu0 %v4027
        %v4202 = vpop.f32.mrb[0].mxu0
        %v4203 = vadd.f32 %v3900, %v4202
        %v4204 = vpop.f32.mrb[0].mxu0
        %4205 = vdwg.mxu0
        %s4206 = scalar_lea.vmem [#allocation2], 384
        %v4207 = vld [vmem:[%s4206] sm:$0xff]
        %v4208 = vld [vmem:[%s4206 + $0x8] sm:$0xff]
        %v4209 = vld [vmem:[%s4206 + $0x10] sm:$0xff]
        %v4210 = vld [vmem:[%s4206 + $0x18] sm:$0xff]
        %v4211 = vld [vmem:[%s4206 + $0x20] sm:$0xff]
        %v4212 = vld [vmem:[%s4206 + $0x28] sm:$0xff]
        %v4213 = vld [vmem:[%s4206 + $0x30] sm:$0xff]
        %v4214 = vld [vmem:[%s4206 + $0x38] sm:$0xff]
        %v4215 = vld [vmem:[%s4206 + $0x40] sm:$0xff]
        %v4216 = vld [vmem:[%s4206 + $0x48] sm:$0xff]
        %v4217 = vld [vmem:[%s4206 + $0x50] sm:$0xff]
        %v4218 = vld [vmem:[%s4206 + $0x58] sm:$0xff]
        %v4219 = vld [vmem:[%s4206 + $0x60] sm:$0xff]
        %v4220 = vld [vmem:[%s4206 + $0x68] sm:$0xff]
        %v4221 = vld [vmem:[%s4206 + $0x70] sm:$0xff]
        %v4222 = vld [vmem:[%s4206 + $0x78] sm:$0xff]
        %4223 = vmax.xlane.f32.xlu0 %v4128
        %v4224 = vpop.xlane.xlu0 %4223
        %4225 = vmax.xlane.f32.xlu0 %v4133
        %v4226 = vpop.xlane.xlu0 %4225
        %4227 = vmax.xlane.f32.xlu0 %v4138
        %v4228 = vpop.xlane.xlu0 %4227
        %4229 = vmax.xlane.f32.xlu0 %v4143
        %v4230 = vpop.xlane.xlu0 %4229
        %4231 = vmax.xlane.f32.xlu0 %v4148
        %v4232 = vpop.xlane.xlu0 %4231
        %4233 = vmax.xlane.f32.xlu0 %v4153
        %v4234 = vpop.xlane.xlu0 %4233
        %4235 = vmax.xlane.f32.xlu0 %v4158
        %v4236 = vpop.xlane.xlu0 %4235
        %4237 = vmax.xlane.f32.xlu0 %v4163
        %v4238 = vpop.xlane.xlu0 %4237
        %4239 = vmax.xlane.f32.xlu0 %v4168
        %v4240 = vpop.xlane.xlu0 %4239
        %4241 = vmax.xlane.f32.xlu0 %v4173
        %v4242 = vpop.xlane.xlu0 %4241
        %4243 = vmax.xlane.f32.xlu0 %v4178
        %v4244 = vpop.xlane.xlu0 %4243
        %4245 = vmax.xlane.f32.xlu0 %v4183
        %v4246 = vpop.xlane.xlu0 %4245
        %4247 = vmax.xlane.f32.xlu0 %v4188
        %v4248 = vpop.xlane.xlu0 %4247
        %4249 = vmax.xlane.f32.xlu0 %v4193
        %v4250 = vpop.xlane.xlu0 %4249
        %4251 = vmax.xlane.f32.xlu0 %v4198
        %v4252 = vpop.xlane.xlu0 %4251
        %4253 = vmax.xlane.f32.xlu0 %v4203
        %v4254 = vpop.xlane.xlu0 %4253
        %v4255 = vmax.f32 %v4207, %v4224
        %v4256 = vmax.f32 %v4208, %v4226
        %v4257 = vmax.f32 %v4209, %v4228
        %v4258 = vmax.f32 %v4210, %v4230
        %v4259 = vmax.f32 %v4211, %v4232
        %v4260 = vmax.f32 %v4212, %v4234
        %v4261 = vmax.f32 %v4213, %v4236
        %v4262 = vmax.f32 %v4214, %v4238
        %v4263 = vmax.f32 %v4215, %v4240
        %v4264 = vmax.f32 %v4216, %v4242
        %v4265 = vmax.f32 %v4217, %v4244
        %v4266 = vmax.f32 %v4218, %v4246
        %v4267 = vmax.f32 %v4219, %v4248
        %v4268 = vmax.f32 %v4220, %v4250
        %v4269 = vmax.f32 %v4221, %v4252
        %v4270 = vmax.f32 %v4222, %v4254
        %v4271 = vsub.f32 %v4207, %v4255
        %v4272 = vsub.f32 %v4208, %v4256
        %v4273 = vsub.f32 %v4209, %v4257
        %v4274 = vsub.f32 %v4210, %v4258
        %v4275 = vsub.f32 %v4211, %v4259
        %v4276 = vsub.f32 %v4212, %v4260
        %v4277 = vsub.f32 %v4213, %v4261
        %v4278 = vsub.f32 %v4214, %v4262
        %v4279 = vsub.f32 %v4215, %v4263
        %v4280 = vsub.f32 %v4216, %v4264
        %v4281 = vsub.f32 %v4217, %v4265
        %v4282 = vsub.f32 %v4218, %v4266
        %v4283 = vsub.f32 %v4219, %v4267
        %v4284 = vsub.f32 %v4220, %v4268
        %v4285 = vsub.f32 %v4221, %v4269
        %v4286 = vsub.f32 %v4222, %v4270
        %v4287 = vmul.f32 %v4271, 1.442695
        %v4288 = vpow.pop %v4287
        %v4289 = vmul.f32 %v4272, 1.442695
        %v4290 = vpow.pop %v4289
        %v4291 = vmul.f32 %v4273, 1.442695
        %v4292 = vpow.pop %v4291
        %v4293 = vmul.f32 %v4274, 1.442695
        %v4294 = vpow.pop %v4293
        %v4295 = vmul.f32 %v4275, 1.442695
        %v4296 = vpow.pop %v4295
        %v4297 = vmul.f32 %v4276, 1.442695
        %v4298 = vpow.pop %v4297
        %v4299 = vmul.f32 %v4277, 1.442695
        %v4300 = vpow.pop %v4299
        %v4301 = vmul.f32 %v4278, 1.442695
        %v4302 = vpow.pop %v4301
        %v4303 = vmul.f32 %v4279, 1.442695
        %v4304 = vpow.pop %v4303
        %v4305 = vmul.f32 %v4280, 1.442695
        %v4306 = vpow.pop %v4305
        %v4307 = vmul.f32 %v4281, 1.442695
        %v4308 = vpow.pop %v4307
        %v4309 = vmul.f32 %v4282, 1.442695
        %v4310 = vpow.pop %v4309
        %v4311 = vmul.f32 %v4283, 1.442695
        %v4312 = vpow.pop %v4311
        %v4313 = vmul.f32 %v4284, 1.442695
        %v4314 = vpow.pop %v4313
        %v4315 = vmul.f32 %v4285, 1.442695
        %v4316 = vpow.pop %v4315
        %v4317 = vmul.f32 %v4286, 1.442695
        %v4318 = vpow.pop %v4317
        %4320 = vset.pattern.permute.xlu0 0
        %4321 = vperm.xlu0 %4320, %v4255
        %v4322 = vpop.permute.xlu0 %4321
        %4325 = vset.pattern.permute.xlu0 0
        %4326 = vperm.xlu0 %4325, %v4256
        %v4327 = vpop.permute.xlu0 %4326
        %4330 = vset.pattern.permute.xlu0 0
        %4331 = vperm.xlu0 %4330, %v4257
        %v4332 = vpop.permute.xlu0 %4331
        %4335 = vset.pattern.permute.xlu0 0
        %4336 = vperm.xlu0 %4335, %v4258
        %v4337 = vpop.permute.xlu0 %4336
        %4340 = vset.pattern.permute.xlu0 0
        %4341 = vperm.xlu0 %4340, %v4259
        %v4342 = vpop.permute.xlu0 %4341
        %4345 = vset.pattern.permute.xlu0 0
        %4346 = vperm.xlu0 %4345, %v4260
        %v4347 = vpop.permute.xlu0 %4346
        %4350 = vset.pattern.permute.xlu0 0
        %4351 = vperm.xlu0 %4350, %v4261
        %v4352 = vpop.permute.xlu0 %4351
        %4355 = vset.pattern.permute.xlu0 0
        %4356 = vperm.xlu0 %4355, %v4262
        %v4357 = vpop.permute.xlu0 %4356
        %4360 = vset.pattern.permute.xlu0 0
        %4361 = vperm.xlu0 %4360, %v4263
        %v4362 = vpop.permute.xlu0 %4361
        %4365 = vset.pattern.permute.xlu0 0
        %4366 = vperm.xlu0 %4365, %v4264
        %v4367 = vpop.permute.xlu0 %4366
        %4370 = vset.pattern.permute.xlu0 0
        %4371 = vperm.xlu0 %4370, %v4265
        %v4372 = vpop.permute.xlu0 %4371
        %4375 = vset.pattern.permute.xlu0 0
        %4376 = vperm.xlu0 %4375, %v4266
        %v4377 = vpop.permute.xlu0 %4376
        %4380 = vset.pattern.permute.xlu0 0
        %4381 = vperm.xlu0 %4380, %v4267
        %v4382 = vpop.permute.xlu0 %4381
        %4385 = vset.pattern.permute.xlu0 0
        %4386 = vperm.xlu0 %4385, %v4268
        %v4387 = vpop.permute.xlu0 %4386
        %4390 = vset.pattern.permute.xlu0 0
        %4391 = vperm.xlu0 %4390, %v4269
        %v4392 = vpop.permute.xlu0 %4391
        %4395 = vset.pattern.permute.xlu0 0
        %4396 = vperm.xlu0 %4395, %v4270
        %v4397 = vpop.permute.xlu0 %4396
        %v4399 = vsub.f32 %v4128, %v4322
        %v4400 = vsub.f32 %v4133, %v4327
        %v4401 = vsub.f32 %v4138, %v4332
        %v4402 = vsub.f32 %v4143, %v4337
        %v4403 = vsub.f32 %v4148, %v4342
        %v4404 = vsub.f32 %v4153, %v4347
        %v4405 = vsub.f32 %v4158, %v4352
        %v4406 = vsub.f32 %v4163, %v4357
        %v4407 = vsub.f32 %v4168, %v4362
        %v4408 = vsub.f32 %v4173, %v4367
        %v4409 = vsub.f32 %v4178, %v4372
        %v4410 = vsub.f32 %v4183, %v4377
        %v4411 = vsub.f32 %v4188, %v4382
        %v4412 = vsub.f32 %v4193, %v4387
        %v4413 = vsub.f32 %v4198, %v4392
        %v4414 = vsub.f32 %v4203, %v4397
        %v4415 = vmul.f32 %v4399, 1.442695
        %v4416 = vpow.pop %v4415
        %v4417 = vmul.f32 %v4400, 1.442695
        %v4418 = vpow.pop %v4417
        %v4419 = vmul.f32 %v4401, 1.442695
        %v4420 = vpow.pop %v4419
        %v4421 = vmul.f32 %v4402, 1.442695
        %v4422 = vpow.pop %v4421
        %v4423 = vmul.f32 %v4403, 1.442695
        %v4424 = vpow.pop %v4423
        %v4425 = vmul.f32 %v4404, 1.442695
        %v4426 = vpow.pop %v4425
        %v4427 = vmul.f32 %v4405, 1.442695
        %v4428 = vpow.pop %v4427
        %v4429 = vmul.f32 %v4406, 1.442695
        %v4430 = vpow.pop %v4429
        %v4431 = vmul.f32 %v4407, 1.442695
        %v4432 = vpow.pop %v4431
        %v4433 = vmul.f32 %v4408, 1.442695
        %v4434 = vpow.pop %v4433
        %v4435 = vmul.f32 %v4409, 1.442695
        %v4436 = vpow.pop %v4435
        %v4437 = vmul.f32 %v4410, 1.442695
        %v4438 = vpow.pop %v4437
        %v4439 = vmul.f32 %v4411, 1.442695
        %v4440 = vpow.pop %v4439
        %v4441 = vmul.f32 %v4412, 1.442695
        %v4442 = vpow.pop %v4441
        %v4443 = vmul.f32 %v4413, 1.442695
        %v4444 = vpow.pop %v4443
        %v4445 = vmul.f32 %v4414, 1.442695
        %v4446 = vpow.pop %v4445
        %s4447 = scalar_lea.vmem [#allocation3], 384
        %v4448 = vld [vmem:[%s4447] sm:$0xff]
        %v4449 = vld [vmem:[%s4447 + $0x8] sm:$0xff]
        %v4450 = vld [vmem:[%s4447 + $0x10] sm:$0xff]
        %v4451 = vld [vmem:[%s4447 + $0x18] sm:$0xff]
        %v4452 = vld [vmem:[%s4447 + $0x20] sm:$0xff]
        %v4453 = vld [vmem:[%s4447 + $0x28] sm:$0xff]
        %v4454 = vld [vmem:[%s4447 + $0x30] sm:$0xff]
        %v4455 = vld [vmem:[%s4447 + $0x38] sm:$0xff]
        %v4456 = vld [vmem:[%s4447 + $0x40] sm:$0xff]
        %v4457 = vld [vmem:[%s4447 + $0x48] sm:$0xff]
        %v4458 = vld [vmem:[%s4447 + $0x50] sm:$0xff]
        %v4459 = vld [vmem:[%s4447 + $0x58] sm:$0xff]
        %v4460 = vld [vmem:[%s4447 + $0x60] sm:$0xff]
        %v4461 = vld [vmem:[%s4447 + $0x68] sm:$0xff]
        %v4462 = vld [vmem:[%s4447 + $0x70] sm:$0xff]
        %v4463 = vld [vmem:[%s4447 + $0x78] sm:$0xff]
        %v4464 = vmul.f32 %v4288, %v4448
        %v4465 = vmul.f32 %v4290, %v4449
        %v4466 = vmul.f32 %v4292, %v4450
        %v4467 = vmul.f32 %v4294, %v4451
        %v4468 = vmul.f32 %v4296, %v4452
        %v4469 = vmul.f32 %v4298, %v4453
        %v4470 = vmul.f32 %v4300, %v4454
        %v4471 = vmul.f32 %v4302, %v4455
        %v4472 = vmul.f32 %v4304, %v4456
        %v4473 = vmul.f32 %v4306, %v4457
        %v4474 = vmul.f32 %v4308, %v4458
        %v4475 = vmul.f32 %v4310, %v4459
        %v4476 = vmul.f32 %v4312, %v4460
        %v4477 = vmul.f32 %v4314, %v4461
        %v4478 = vmul.f32 %v4316, %v4462
        %v4479 = vmul.f32 %v4318, %v4463
        %4480 = vadd.xlane.f32.xlu0 %v4416
        %v4481 = vpop.xlane.xlu0 %4480
        %4482 = vadd.xlane.f32.xlu0 %v4418
        %v4483 = vpop.xlane.xlu0 %4482
        %4484 = vadd.xlane.f32.xlu0 %v4420
        %v4485 = vpop.xlane.xlu0 %4484
        %4486 = vadd.xlane.f32.xlu0 %v4422
        %v4487 = vpop.xlane.xlu0 %4486
        %4488 = vadd.xlane.f32.xlu0 %v4424
        %v4489 = vpop.xlane.xlu0 %4488
        %4490 = vadd.xlane.f32.xlu0 %v4426
        %v4491 = vpop.xlane.xlu0 %4490
        %4492 = vadd.xlane.f32.xlu0 %v4428
        %v4493 = vpop.xlane.xlu0 %4492
        %4494 = vadd.xlane.f32.xlu0 %v4430
        %v4495 = vpop.xlane.xlu0 %4494
        %4496 = vadd.xlane.f32.xlu0 %v4432
        %v4497 = vpop.xlane.xlu0 %4496
        %4498 = vadd.xlane.f32.xlu0 %v4434
        %v4499 = vpop.xlane.xlu0 %4498
        %4500 = vadd.xlane.f32.xlu0 %v4436
        %v4501 = vpop.xlane.xlu0 %4500
        %4502 = vadd.xlane.f32.xlu0 %v4438
        %v4503 = vpop.xlane.xlu0 %4502
        %4504 = vadd.xlane.f32.xlu0 %v4440
        %v4505 = vpop.xlane.xlu0 %4504
        %4506 = vadd.xlane.f32.xlu0 %v4442
        %v4507 = vpop.xlane.xlu0 %4506
        %4508 = vadd.xlane.f32.xlu0 %v4444
        %v4509 = vpop.xlane.xlu0 %4508
        %4510 = vadd.xlane.f32.xlu0 %v4446
        %v4511 = vpop.xlane.xlu0 %4510
        %v4512 = vadd.f32 %v4464, %v4481
        %v4513 = vadd.f32 %v4465, %v4483
        %v4514 = vadd.f32 %v4466, %v4485
        %v4515 = vadd.f32 %v4467, %v4487
        %v4516 = vadd.f32 %v4468, %v4489
        %v4517 = vadd.f32 %v4469, %v4491
        %v4518 = vadd.f32 %v4470, %v4493
        %v4519 = vadd.f32 %v4471, %v4495
        %v4520 = vadd.f32 %v4472, %v4497
        %v4521 = vadd.f32 %v4473, %v4499
        %v4522 = vadd.f32 %v4474, %v4501
        %v4523 = vadd.f32 %v4475, %v4503
        %v4524 = vadd.f32 %v4476, %v4505
        %v4525 = vadd.f32 %v4477, %v4507
        %v4526 = vadd.f32 %v4478, %v4509
        %v4527 = vadd.f32 %v4479, %v4511
        %4528 = vst.msk [vmem:[%s4447] sm:$0xff] %vm1182, %v4512
        %4529 = vst.msk [vmem:[%s4447 + $0x8] sm:$0xff] %vm1182, %v4513
        %4530 = vst.msk [vmem:[%s4447 + $0x10] sm:$0xff] %vm1182, %v4514
        %4531 = vst.msk [vmem:[%s4447 + $0x18] sm:$0xff] %vm1182, %v4515
        %4532 = vst.msk [vmem:[%s4447 + $0x20] sm:$0xff] %vm1182, %v4516
        %4533 = vst.msk [vmem:[%s4447 + $0x28] sm:$0xff] %vm1182, %v4517
        %4534 = vst.msk [vmem:[%s4447 + $0x30] sm:$0xff] %vm1182, %v4518
        %4535 = vst.msk [vmem:[%s4447 + $0x38] sm:$0xff] %vm1182, %v4519
        %4536 = vst.msk [vmem:[%s4447 + $0x40] sm:$0xff] %vm1182, %v4520
        %4537 = vst.msk [vmem:[%s4447 + $0x48] sm:$0xff] %vm1182, %v4521
        %4538 = vst.msk [vmem:[%s4447 + $0x50] sm:$0xff] %vm1182, %v4522
        %4539 = vst.msk [vmem:[%s4447 + $0x58] sm:$0xff] %vm1182, %v4523
        %4540 = vst.msk [vmem:[%s4447 + $0x60] sm:$0xff] %vm1182, %v4524
        %4541 = vst.msk [vmem:[%s4447 + $0x68] sm:$0xff] %vm1182, %v4525
        %4542 = vst.msk [vmem:[%s4447 + $0x70] sm:$0xff] %vm1182, %v4526
        %4543 = vst.msk [vmem:[%s4447 + $0x78] sm:$0xff] %vm1182, %v4527
        %4560 = vrot.lane.b32.xlu0 %v3868, 104
        %v4561 = vpop.permute.xlu0 %4560
        %4562 = vrot.lane.b32.xlu0 %v3869, 104
        %v4563 = vpop.permute.xlu0 %4562
        %4564 = vrot.lane.b32.xlu0 %v3870, 104
        %v4565 = vpop.permute.xlu0 %4564
        %4566 = vrot.lane.b32.xlu0 %v3871, 104
        %v4567 = vpop.permute.xlu0 %4566
        %4568 = vrot.lane.b32.xlu0 %v3872, 104
        %v4569 = vpop.permute.xlu0 %4568
        %4570 = vrot.lane.b32.xlu0 %v3873, 104
        %v4571 = vpop.permute.xlu0 %4570
        %4572 = vrot.lane.b32.xlu0 %v3874, 104
        %v4573 = vpop.permute.xlu0 %4572
        %4574 = vrot.lane.b32.xlu0 %v3875, 104
        %v4575 = vpop.permute.xlu0 %4574
        %4576 = vrot.lane.b32.xlu0 %v3876, 104
        %v4577 = vpop.permute.xlu0 %4576
        %4578 = vrot.lane.b32.xlu0 %v3877, 104
        %v4579 = vpop.permute.xlu0 %4578
        %4580 = vrot.lane.b32.xlu0 %v3878, 104
        %v4581 = vpop.permute.xlu0 %4580
        %4582 = vrot.lane.b32.xlu0 %v3879, 104
        %v4583 = vpop.permute.xlu0 %4582
        %4584 = vrot.lane.b32.xlu0 %v3880, 104
        %v4585 = vpop.permute.xlu0 %4584
        %4586 = vrot.lane.b32.xlu0 %v3881, 104
        %v4587 = vpop.permute.xlu0 %4586
        %4588 = vrot.lane.b32.xlu0 %v3882, 104
        %v4589 = vpop.permute.xlu0 %4588
        %4590 = vrot.lane.b32.xlu0 %v3883, 104
        %v4591 = vpop.permute.xlu0 %4590
        %4608 = vmatprep.subr.mxu0 0.0
        %4609 = vmatpush1.msra.mxu0 %v4561
        %4610 = vmatprep.subr.mxu0 0.0
        %4611 = vmatpush1.msra.mxu0 %v4563
        %4612 = vmatprep.subr.mxu0 0.0
        %4613 = vmatpush1.msra.mxu0 %v4565
        %4614 = vmatprep.subr.mxu0 0.0
        %4615 = vmatpush1.msra.mxu0 %v4567
        %4616 = vmatprep.subr.mxu0 0.0
        %4617 = vmatpush1.msra.mxu0 %v4569
        %4618 = vmatprep.subr.mxu0 0.0
        %4619 = vmatpush1.msra.mxu0 %v4571
        %4620 = vmatprep.subr.mxu0 0.0
        %4621 = vmatpush1.msra.mxu0 %v4573
        %4622 = vmatprep.subr.mxu0 0.0
        %4623 = vmatpush1.msra.mxu0 %v4575
        %4624 = vmatprep.subr.mxu0 0.0
        %4625 = vmatpush1.msra.mxu0 %v4577
        %4626 = vmatprep.subr.mxu0 0.0
        %4627 = vmatpush1.msra.mxu0 %v4579
        %4628 = vmatprep.subr.mxu0 0.0
        %4629 = vmatpush1.msra.mxu0 %v4581
        %4630 = vmatprep.subr.mxu0 0.0
        %4631 = vmatpush1.msra.mxu0 %v4583
        %4632 = vmatprep.subr.mxu0 0.0
        %4633 = vmatpush1.msra.mxu0 %v4585
        %4634 = vmatprep.subr.mxu0 0.0
        %4635 = vmatpush1.msra.mxu0 %v4587
        %4636 = vmatprep.subr.mxu0 0.0
        %4637 = vmatpush1.msra.mxu0 %v4589
        %4638 = vmatprep.subr.mxu0 0.0
        %4639 = vmatpush1.msra.mxu0 %v4591
        %4640 = vmatprep.subr.mxu0 0.0
        %4641 = vmatpush1.msra.mxu0 0.0
        %4642 = vmatprep.subr.mxu0 0.0
        %4643 = vmatpush1.msra.mxu0 0.0
        %4644 = vmatprep.subr.mxu0 0.0
        %4645 = vmatpush1.msra.mxu0 0.0
        %4646 = vmatprep.subr.mxu0 0.0
        %4647 = vmatpush1.msra.mxu0 0.0
        %4648 = vmatprep.subr.mxu0 0.0
        %4649 = vmatpush1.msra.mxu0 0.0
        %4650 = vmatprep.subr.mxu0 0.0
        %4651 = vmatpush1.msra.mxu0 0.0
        %4652 = vmatprep.subr.mxu0 0.0
        %4653 = vmatpush1.msra.mxu0 0.0
        %4654 = vmatprep.subr.mxu0 0.0
        %4655 = vmatpush1.msra.mxu0 0.0
        %4656 = vmatprep.subr.mxu0 0.0
        %4657 = vmatpush1.msra.mxu0 0.0
        %4658 = vmatprep.subr.mxu0 0.0
        %4659 = vmatpush1.msra.mxu0 0.0
        %4660 = vmatprep.subr.mxu0 0.0
        %4661 = vmatpush1.msra.mxu0 0.0
        %4662 = vmatprep.subr.mxu0 0.0
        %4663 = vmatpush1.msra.mxu0 0.0
        %4664 = vmatprep.subr.mxu0 0.0
        %4665 = vmatpush1.msra.mxu0 0.0
        %4666 = vmatprep.subr.mxu0 0.0
        %4667 = vmatpush1.msra.mxu0 0.0
        %4668 = vmatprep.subr.mxu0 0.0
        %4669 = vmatpush1.msra.mxu0 0.0
        %4670 = vmatprep.subr.mxu0 0.0
        %4671 = vmatpush1.msra.mxu0 0.0
        %4672 = vmatprep.mubr.f32.mxu0 0.0
        %4673 = vmatmul.mubr.f32.gmra.mrb[0].mxu0 %v4416
        %v4674 = vpop.f32.mrb[0].mxu0
        %v4675 = vadd.f32 0.0, %v4674
        %v4676 = vpop.f32.mrb[0].mxu0
        %4677 = vmatprep.mubr.f32.mxu0 0.0
        %4678 = vmatmul.mubr.f32.gmra.mrb[0].mxu0 %v4418
        %v4679 = vpop.f32.mrb[0].mxu0
        %v4680 = vadd.f32 0.0, %v4679
        %v4681 = vpop.f32.mrb[0].mxu0
        %4682 = vmatprep.mubr.f32.mxu0 0.0
        %4683 = vmatmul.mubr.f32.gmra.mrb[0].mxu0 %v4420
        %v4684 = vpop.f32.mrb[0].mxu0
        %v4685 = vadd.f32 0.0, %v4684
        %v4686 = vpop.f32.mrb[0].mxu0
        %4687 = vmatprep.mubr.f32.mxu0 0.0
        %4688 = vmatmul.mubr.f32.gmra.mrb[0].mxu0 %v4422
        %v4689 = vpop.f32.mrb[0].mxu0
        %v4690 = vadd.f32 0.0, %v4689
        %v4691 = vpop.f32.mrb[0].mxu0
        %4692 = vmatprep.mubr.f32.mxu0 0.0
        %4693 = vmatmul.mubr.f32.gmra.mrb[0].mxu0 %v4424
        %v4694 = vpop.f32.mrb[0].mxu0
        %v4695 = vadd.f32 0.0, %v4694
        %v4696 = vpop.f32.mrb[0].mxu0
        %4697 = vmatprep.mubr.f32.mxu0 0.0
        %4698 = vmatmul.mubr.f32.gmra.mrb[0].mxu0 %v4426
        %v4699 = vpop.f32.mrb[0].mxu0
        %v4700 = vadd.f32 0.0, %v4699
        %v4701 = vpop.f32.mrb[0].mxu0
        %4702 = vmatprep.mubr.f32.mxu0 0.0
        %4703 = vmatmul.mubr.f32.gmra.mrb[0].mxu0 %v4428
        %v4704 = vpop.f32.mrb[0].mxu0
        %v4705 = vadd.f32 0.0, %v4704
        %v4706 = vpop.f32.mrb[0].mxu0
        %4707 = vmatprep.mubr.f32.mxu0 0.0
        %4708 = vmatmul.mubr.f32.gmra.mrb[0].mxu0 %v4430
        %v4709 = vpop.f32.mrb[0].mxu0
        %v4710 = vadd.f32 0.0, %v4709
        %v4711 = vpop.f32.mrb[0].mxu0
        %4712 = vmatprep.mubr.f32.mxu0 0.0
        %4713 = vmatmul.mubr.f32.gmra.mrb[0].mxu0 %v4432
        %v4714 = vpop.f32.mrb[0].mxu0
        %v4715 = vadd.f32 0.0, %v4714
        %v4716 = vpop.f32.mrb[0].mxu0
        %4717 = vmatprep.mubr.f32.mxu0 0.0
        %4718 = vmatmul.mubr.f32.gmra.mrb[0].mxu0 %v4434
        %v4719 = vpop.f32.mrb[0].mxu0
        %v4720 = vadd.f32 0.0, %v4719
        %v4721 = vpop.f32.mrb[0].mxu0
        %4722 = vmatprep.mubr.f32.mxu0 0.0
        %4723 = vmatmul.mubr.f32.gmra.mrb[0].mxu0 %v4436
        %v4724 = vpop.f32.mrb[0].mxu0
        %v4725 = vadd.f32 0.0, %v4724
        %v4726 = vpop.f32.mrb[0].mxu0
        %4727 = vmatprep.mubr.f32.mxu0 0.0
        %4728 = vmatmul.mubr.f32.gmra.mrb[0].mxu0 %v4438
        %v4729 = vpop.f32.mrb[0].mxu0
        %v4730 = vadd.f32 0.0, %v4729
        %v4731 = vpop.f32.mrb[0].mxu0
        %4732 = vmatprep.mubr.f32.mxu0 0.0
        %4733 = vmatmul.mubr.f32.gmra.mrb[0].mxu0 %v4440
        %v4734 = vpop.f32.mrb[0].mxu0
        %v4735 = vadd.f32 0.0, %v4734
        %v4736 = vpop.f32.mrb[0].mxu0
        %4737 = vmatprep.mubr.f32.mxu0 0.0
        %4738 = vmatmul.mubr.f32.gmra.mrb[0].mxu0 %v4442
        %v4739 = vpop.f32.mrb[0].mxu0
        %v4740 = vadd.f32 0.0, %v4739
        %v4741 = vpop.f32.mrb[0].mxu0
        %4742 = vmatprep.mubr.f32.mxu0 0.0
        %4743 = vmatmul.mubr.f32.gmra.mrb[0].mxu0 %v4444
        %v4744 = vpop.f32.mrb[0].mxu0
        %v4745 = vadd.f32 0.0, %v4744
        %v4746 = vpop.f32.mrb[0].mxu0
        %4747 = vmatprep.mubr.f32.mxu0 0.0
        %4748 = vmatmul.mubr.f32.gmra.mrb[0].mxu0 %v4446
        %v4749 = vpop.f32.mrb[0].mxu0
        %v4750 = vadd.f32 0.0, %v4749
        %v4751 = vpop.f32.mrb[0].mxu0
        %4752 = vdwg.mxu0
        %v4753 = vld [vmem:[#allocation4] sm:$0xff]
        %v4754 = vld [vmem:[#allocation4 + $0x8] sm:$0xff]
        %v4755 = vld [vmem:[#allocation4 + $0x10] sm:$0xff]
        %v4756 = vld [vmem:[#allocation4 + $0x18] sm:$0xff]
        %v4757 = vld [vmem:[#allocation4 + $0x20] sm:$0xff]
        %v4758 = vld [vmem:[#allocation4 + $0x28] sm:$0xff]
        %v4759 = vld [vmem:[#allocation4 + $0x30] sm:$0xff]
        %v4760 = vld [vmem:[#allocation4 + $0x38] sm:$0xff]
        %v4761 = vld [vmem:[#allocation4 + $0x40] sm:$0xff]
        %v4762 = vld [vmem:[#allocation4 + $0x48] sm:$0xff]
        %v4763 = vld [vmem:[#allocation4 + $0x50] sm:$0xff]
        %v4764 = vld [vmem:[#allocation4 + $0x58] sm:$0xff]
        %v4765 = vld [vmem:[#allocation4 + $0x60] sm:$0xff]
        %v4766 = vld [vmem:[#allocation4 + $0x68] sm:$0xff]
        %v4767 = vld [vmem:[#allocation4 + $0x70] sm:$0xff]
        %v4768 = vld [vmem:[#allocation4 + $0x78] sm:$0xff]
        %4770 = vset.pattern.permute.xlu0 0
        %4771 = vperm.xlu0 %4770, %v4288
        %v4772 = vpop.permute.xlu0 %4771
        %4775 = vset.pattern.permute.xlu0 0
        %4776 = vperm.xlu0 %4775, %v4290
        %v4777 = vpop.permute.xlu0 %4776
        %4780 = vset.pattern.permute.xlu0 0
        %4781 = vperm.xlu0 %4780, %v4292
        %v4782 = vpop.permute.xlu0 %4781
        %4785 = vset.pattern.permute.xlu0 0
        %4786 = vperm.xlu0 %4785, %v4294
        %v4787 = vpop.permute.xlu0 %4786
        %4790 = vset.pattern.permute.xlu0 0
        %4791 = vperm.xlu0 %4790, %v4296
        %v4792 = vpop.permute.xlu0 %4791
        %4795 = vset.pattern.permute.xlu0 0
        %4796 = vperm.xlu0 %4795, %v4298
        %v4797 = vpop.permute.xlu0 %4796
        %4800 = vset.pattern.permute.xlu0 0
        %4801 = vperm.xlu0 %4800, %v4300
        %v4802 = vpop.permute.xlu0 %4801
        %4805 = vset.pattern.permute.xlu0 0
        %4806 = vperm.xlu0 %4805, %v4302
        %v4807 = vpop.permute.xlu0 %4806
        %4810 = vset.pattern.permute.xlu0 0
        %4811 = vperm.xlu0 %4810, %v4304
        %v4812 = vpop.permute.xlu0 %4811
        %4815 = vset.pattern.permute.xlu0 0
        %4816 = vperm.xlu0 %4815, %v4306
        %v4817 = vpop.permute.xlu0 %4816
        %4820 = vset.pattern.permute.xlu0 0
        %4821 = vperm.xlu0 %4820, %v4308
        %v4822 = vpop.permute.xlu0 %4821
        %4825 = vset.pattern.permute.xlu0 0
        %4826 = vperm.xlu0 %4825, %v4310
        %v4827 = vpop.permute.xlu0 %4826
        %4830 = vset.pattern.permute.xlu0 0
        %4831 = vperm.xlu0 %4830, %v4312
        %v4832 = vpop.permute.xlu0 %4831
        %4835 = vset.pattern.permute.xlu0 0
        %4836 = vperm.xlu0 %4835, %v4314
        %v4837 = vpop.permute.xlu0 %4836
        %4840 = vset.pattern.permute.xlu0 0
        %4841 = vperm.xlu0 %4840, %v4316
        %v4842 = vpop.permute.xlu0 %4841
        %4845 = vset.pattern.permute.xlu0 0
        %4846 = vperm.xlu0 %4845, %v4318
        %v4847 = vpop.permute.xlu0 %4846
        %v4849 = vmul.f32 %v4772, %v4753
        %v4850 = vmul.f32 %v4777, %v4754
        %v4851 = vmul.f32 %v4782, %v4755
        %v4852 = vmul.f32 %v4787, %v4756
        %v4853 = vmul.f32 %v4792, %v4757
        %v4854 = vmul.f32 %v4797, %v4758
        %v4855 = vmul.f32 %v4802, %v4759
        %v4856 = vmul.f32 %v4807, %v4760
        %v4857 = vmul.f32 %v4812, %v4761
        %v4858 = vmul.f32 %v4817, %v4762
        %v4859 = vmul.f32 %v4822, %v4763
        %v4860 = vmul.f32 %v4827, %v4764
        %v4861 = vmul.f32 %v4832, %v4765
        %v4862 = vmul.f32 %v4837, %v4766
        %v4863 = vmul.f32 %v4842, %v4767
        %v4864 = vmul.f32 %v4847, %v4768
        %4881 = vrot.lane.b32.xlu0 %v4675, 24
        %v4882 = vpop.permute.xlu0 %4881
        %4883 = vrot.lane.b32.xlu0 %v4680, 24
        %v4884 = vpop.permute.xlu0 %4883
        %4885 = vrot.lane.b32.xlu0 %v4685, 24
        %v4886 = vpop.permute.xlu0 %4885
        %4887 = vrot.lane.b32.xlu0 %v4690, 24
        %v4888 = vpop.permute.xlu0 %4887
        %4889 = vrot.lane.b32.xlu0 %v4695, 24
        %v4890 = vpop.permute.xlu0 %4889
        %4891 = vrot.lane.b32.xlu0 %v4700, 24
        %v4892 = vpop.permute.xlu0 %4891
        %4893 = vrot.lane.b32.xlu0 %v4705, 24
        %v4894 = vpop.permute.xlu0 %4893
        %4895 = vrot.lane.b32.xlu0 %v4710, 24
        %v4896 = vpop.permute.xlu0 %4895
        %4897 = vrot.lane.b32.xlu0 %v4715, 24
        %v4898 = vpop.permute.xlu0 %4897
        %4899 = vrot.lane.b32.xlu0 %v4720, 24
        %v4900 = vpop.permute.xlu0 %4899
        %4901 = vrot.lane.b32.xlu0 %v4725, 24
        %v4902 = vpop.permute.xlu0 %4901
        %4903 = vrot.lane.b32.xlu0 %v4730, 24
        %v4904 = vpop.permute.xlu0 %4903
        %4905 = vrot.lane.b32.xlu0 %v4735, 24
        %v4906 = vpop.permute.xlu0 %4905
        %4907 = vrot.lane.b32.xlu0 %v4740, 24
        %v4908 = vpop.permute.xlu0 %4907
        %4909 = vrot.lane.b32.xlu0 %v4745, 24
        %v4910 = vpop.permute.xlu0 %4909
        %4911 = vrot.lane.b32.xlu0 %v4750, 24
        %v4912 = vpop.permute.xlu0 %4911
        %v4929 = vadd.f32 %v4849, %v4882
        %v4930 = vadd.f32 %v4850, %v4884
        %v4931 = vadd.f32 %v4851, %v4886
        %v4932 = vadd.f32 %v4852, %v4888
        %v4933 = vadd.f32 %v4853, %v4890
        %v4934 = vadd.f32 %v4854, %v4892
        %v4935 = vadd.f32 %v4855, %v4894
        %v4936 = vadd.f32 %v4856, %v4896
        %v4937 = vadd.f32 %v4857, %v4898
        %v4938 = vadd.f32 %v4858, %v4900
        %v4939 = vadd.f32 %v4859, %v4902
        %v4940 = vadd.f32 %v4860, %v4904
        %v4941 = vadd.f32 %v4861, %v4906
        %v4942 = vadd.f32 %v4862, %v4908
        %v4943 = vadd.f32 %v4863, %v4910
        %v4944 = vadd.f32 %v4864, %v4912
        %vm4945 = vcmask 261312
        %4946 = vst.msk [vmem:[#allocation4] sm:$0xff] %vm4945, %v4929
        %4947 = vst.msk [vmem:[#allocation4 + $0x8] sm:$0xff] %vm4945, %v4930
        %4948 = vst.msk [vmem:[#allocation4 + $0x10] sm:$0xff] %vm4945, %v4931
        %4949 = vst.msk [vmem:[#allocation4 + $0x18] sm:$0xff] %vm4945, %v4932
        %4950 = vst.msk [vmem:[#allocation4 + $0x20] sm:$0xff] %vm4945, %v4933
        %4951 = vst.msk [vmem:[#allocation4 + $0x28] sm:$0xff] %vm4945, %v4934
        %4952 = vst.msk [vmem:[#allocation4 + $0x30] sm:$0xff] %vm4945, %v4935
        %4953 = vst.msk [vmem:[#allocation4 + $0x38] sm:$0xff] %vm4945, %v4936
        %4954 = vst.msk [vmem:[#allocation4 + $0x40] sm:$0xff] %vm4945, %v4937
        %4955 = vst.msk [vmem:[#allocation4 + $0x48] sm:$0xff] %vm4945, %v4938
        %4956 = vst.msk [vmem:[#allocation4 + $0x50] sm:$0xff] %vm4945, %v4939
        %4957 = vst.msk [vmem:[#allocation4 + $0x58] sm:$0xff] %vm4945, %v4940
        %4958 = vst.msk [vmem:[#allocation4 + $0x60] sm:$0xff] %vm4945, %v4941
        %4959 = vst.msk [vmem:[#allocation4 + $0x68] sm:$0xff] %vm4945, %v4942
        %4960 = vst.msk [vmem:[#allocation4 + $0x70] sm:$0xff] %vm4945, %v4943
        %4961 = vst.msk [vmem:[#allocation4 + $0x78] sm:$0xff] %vm4945, %v4944
        %4962 = vst.msk [vmem:[%s4206] sm:$0xff] %vm1182, %v4255
        %4963 = vst.msk [vmem:[%s4206 + $0x8] sm:$0xff] %vm1182, %v4256
        %4964 = vst.msk [vmem:[%s4206 + $0x10] sm:$0xff] %vm1182, %v4257
        %4965 = vst.msk [vmem:[%s4206 + $0x18] sm:$0xff] %vm1182, %v4258
        %4966 = vst.msk [vmem:[%s4206 + $0x20] sm:$0xff] %vm1182, %v4259
        %4967 = vst.msk [vmem:[%s4206 + $0x28] sm:$0xff] %vm1182, %v4260
        %4968 = vst.msk [vmem:[%s4206 + $0x30] sm:$0xff] %vm1182, %v4261
        %4969 = vst.msk [vmem:[%s4206 + $0x38] sm:$0xff] %vm1182, %v4262
        %4970 = vst.msk [vmem:[%s4206 + $0x40] sm:$0xff] %vm1182, %v4263
        %4971 = vst.msk [vmem:[%s4206 + $0x48] sm:$0xff] %vm1182, %v4264
        %4972 = vst.msk [vmem:[%s4206 + $0x50] sm:$0xff] %vm1182, %v4265
        %4973 = vst.msk [vmem:[%s4206 + $0x58] sm:$0xff] %vm1182, %v4266
        %4974 = vst.msk [vmem:[%s4206 + $0x60] sm:$0xff] %vm1182, %v4267
        %4975 = vst.msk [vmem:[%s4206 + $0x68] sm:$0xff] %vm1182, %v4268
        %4976 = vst.msk [vmem:[%s4206 + $0x70] sm:$0xff] %vm1182, %v4269
        %4977 = vst.msk [vmem:[%s4206 + $0x78] sm:$0xff] %vm1182, %v4270
        %p4978 = scmp.eq.s32.totalorder %s25, 1
        // Predicated region
        $region45: #{tpu_custom_call.1} parent=35 // pred_check
          %p4979 = pneg %p4978
        $region46: #{tpu_custom_call.1} parent=35 // pred_check_branch
          %4981 = sbr.rel (%p4979) target = $region48
        $region47: #{tpu_custom_call.1} parent=35 // pred_region
          %v4982 = vld [vmem:[#allocation3] sm:$0xff]
          %v4983 = vld [vmem:[#allocation3 + $0x8] sm:$0xff]
          %v4984 = vld [vmem:[#allocation3 + $0x10] sm:$0xff]
          %v4985 = vld [vmem:[#allocation3 + $0x18] sm:$0xff]
          %v4986 = vld [vmem:[#allocation3 + $0x20] sm:$0xff]
          %v4987 = vld [vmem:[#allocation3 + $0x28] sm:$0xff]
          %v4988 = vld [vmem:[#allocation3 + $0x30] sm:$0xff]
          %v4989 = vld [vmem:[#allocation3 + $0x38] sm:$0xff]
          %v4990 = vld [vmem:[#allocation3 + $0x40] sm:$0xff]
          %v4991 = vld [vmem:[#allocation3 + $0x48] sm:$0xff]
          %v4992 = vld [vmem:[#allocation3 + $0x50] sm:$0xff]
          %v4993 = vld [vmem:[#allocation3 + $0x58] sm:$0xff]
          %v4994 = vld [vmem:[#allocation3 + $0x60] sm:$0xff]
          %v4995 = vld [vmem:[#allocation3 + $0x68] sm:$0xff]
          %v4996 = vld [vmem:[#allocation3 + $0x70] sm:$0xff]
          %v4997 = vld [vmem:[#allocation3 + $0x78] sm:$0xff]
          %v4998 = vrcp.pop %v4982
          %v4999 = vmul.f32 1.0, %v4998
          %v5000 = vrcp.pop %v4983
          %v5001 = vmul.f32 1.0, %v5000
          %v5002 = vrcp.pop %v4984
          %v5003 = vmul.f32 1.0, %v5002
          %v5004 = vrcp.pop %v4985
          %v5005 = vmul.f32 1.0, %v5004
          %v5006 = vrcp.pop %v4986
          %v5007 = vmul.f32 1.0, %v5006
          %v5008 = vrcp.pop %v4987
          %v5009 = vmul.f32 1.0, %v5008
          %v5010 = vrcp.pop %v4988
          %v5011 = vmul.f32 1.0, %v5010
          %v5012 = vrcp.pop %v4989
          %v5013 = vmul.f32 1.0, %v5012
          %v5014 = vrcp.pop %v4990
          %v5015 = vmul.f32 1.0, %v5014
          %v5016 = vrcp.pop %v4991
          %v5017 = vmul.f32 1.0, %v5016
          %v5018 = vrcp.pop %v4992
          %v5019 = vmul.f32 1.0, %v5018
          %v5020 = vrcp.pop %v4993
          %v5021 = vmul.f32 1.0, %v5020
          %v5022 = vrcp.pop %v4994
          %v5023 = vmul.f32 1.0, %v5022
          %v5024 = vrcp.pop %v4995
          %v5025 = vmul.f32 1.0, %v5024
          %v5026 = vrcp.pop %v4996
          %v5027 = vmul.f32 1.0, %v5026
          %v5028 = vrcp.pop %v4997
          %v5029 = vmul.f32 1.0, %v5028
          %v5030 = vld [vmem:[#allocation4] sm:$0xff]
          %v5031 = vld [vmem:[#allocation4 + $0x8] sm:$0xff]
          %v5032 = vld [vmem:[#allocation4 + $0x10] sm:$0xff]
          %v5033 = vld [vmem:[#allocation4 + $0x18] sm:$0xff]
          %v5034 = vld [vmem:[#allocation4 + $0x20] sm:$0xff]
          %v5035 = vld [vmem:[#allocation4 + $0x28] sm:$0xff]
          %v5036 = vld [vmem:[#allocation4 + $0x30] sm:$0xff]
          %v5037 = vld [vmem:[#allocation4 + $0x38] sm:$0xff]
          %v5038 = vld [vmem:[#allocation4 + $0x40] sm:$0xff]
          %v5039 = vld [vmem:[#allocation4 + $0x48] sm:$0xff]
          %v5040 = vld [vmem:[#allocation4 + $0x50] sm:$0xff]
          %v5041 = vld [vmem:[#allocation4 + $0x58] sm:$0xff]
          %v5042 = vld [vmem:[#allocation4 + $0x60] sm:$0xff]
          %v5043 = vld [vmem:[#allocation4 + $0x68] sm:$0xff]
          %v5044 = vld [vmem:[#allocation4 + $0x70] sm:$0xff]
          %v5045 = vld [vmem:[#allocation4 + $0x78] sm:$0xff]
          %5047 = vset.pattern.permute.xlu0 0
          %5048 = vperm.xlu0 %5047, %v4999
          %v5049 = vpop.permute.xlu0 %5048
          %5052 = vset.pattern.permute.xlu0 0
          %5053 = vperm.xlu0 %5052, %v5001
          %v5054 = vpop.permute.xlu0 %5053
          %5057 = vset.pattern.permute.xlu0 0
          %5058 = vperm.xlu0 %5057, %v5003
          %v5059 = vpop.permute.xlu0 %5058
          %5062 = vset.pattern.permute.xlu0 0
          %5063 = vperm.xlu0 %5062, %v5005
          %v5064 = vpop.permute.xlu0 %5063
          %5067 = vset.pattern.permute.xlu0 0
          %5068 = vperm.xlu0 %5067, %v5007
          %v5069 = vpop.permute.xlu0 %5068
          %5072 = vset.pattern.permute.xlu0 0
          %5073 = vperm.xlu0 %5072, %v5009
          %v5074 = vpop.permute.xlu0 %5073
          %5077 = vset.pattern.permute.xlu0 0
          %5078 = vperm.xlu0 %5077, %v5011
          %v5079 = vpop.permute.xlu0 %5078
          %5082 = vset.pattern.permute.xlu0 0
          %5083 = vperm.xlu0 %5082, %v5013
          %v5084 = vpop.permute.xlu0 %5083
          %5087 = vset.pattern.permute.xlu0 0
          %5088 = vperm.xlu0 %5087, %v5015
          %v5089 = vpop.permute.xlu0 %5088
          %5092 = vset.pattern.permute.xlu0 0
          %5093 = vperm.xlu0 %5092, %v5017
          %v5094 = vpop.permute.xlu0 %5093
          %5097 = vset.pattern.permute.xlu0 0
          %5098 = vperm.xlu0 %5097, %v5019
          %v5099 = vpop.permute.xlu0 %5098
          %5102 = vset.pattern.permute.xlu0 0
          %5103 = vperm.xlu0 %5102, %v5021
          %v5104 = vpop.permute.xlu0 %5103
          %5107 = vset.pattern.permute.xlu0 0
          %5108 = vperm.xlu0 %5107, %v5023
          %v5109 = vpop.permute.xlu0 %5108
          %5112 = vset.pattern.permute.xlu0 0
          %5113 = vperm.xlu0 %5112, %v5025
          %v5114 = vpop.permute.xlu0 %5113
          %5117 = vset.pattern.permute.xlu0 0
          %5118 = vperm.xlu0 %5117, %v5027
          %v5119 = vpop.permute.xlu0 %5118
          %5122 = vset.pattern.permute.xlu0 0
          %5123 = vperm.xlu0 %5122, %v5029
          %v5124 = vpop.permute.xlu0 %5123
          %v5126 = vmul.f32 %v5030, %v5049
          %v5127 = vmul.f32 %v5031, %v5054
          %v5128 = vmul.f32 %v5032, %v5059
          %v5129 = vmul.f32 %v5033, %v5064
          %v5130 = vmul.f32 %v5034, %v5069
          %v5131 = vmul.f32 %v5035, %v5074
          %v5132 = vmul.f32 %v5036, %v5079
          %v5133 = vmul.f32 %v5037, %v5084
          %v5134 = vmul.f32 %v5038, %v5089
          %v5135 = vmul.f32 %v5039, %v5094
          %v5136 = vmul.f32 %v5040, %v5099
          %v5137 = vmul.f32 %v5041, %v5104
          %v5138 = vmul.f32 %v5042, %v5109
          %v5139 = vmul.f32 %v5043, %v5114
          %v5140 = vmul.f32 %v5044, %v5119
          %v5141 = vmul.f32 %v5045, %v5124
          %v5142 = vld [vmem:[%s2131] sm:$0xff]
          %v5143 = vld [vmem:[%s2131 + $0x8] sm:$0xff]
          %v5144 = vld [vmem:[%s2131 + $0x10] sm:$0xff]
          %v5145 = vld [vmem:[%s2131 + $0x18] sm:$0xff]
          %v5146 = vld [vmem:[%s2131 + $0x20] sm:$0xff]
          %v5147 = vld [vmem:[%s2131 + $0x28] sm:$0xff]
          %v5148 = vld [vmem:[%s2131 + $0x30] sm:$0xff]
          %v5149 = vld [vmem:[%s2131 + $0x38] sm:$0xff]
          %v5150 = vld [vmem:[%s2131 + $0x40] sm:$0xff]
          %v5151 = vld [vmem:[%s2131 + $0x48] sm:$0xff]
          %v5152 = vld [vmem:[%s2131 + $0x50] sm:$0xff]
          %v5153 = vld [vmem:[%s2131 + $0x58] sm:$0xff]
          %v5154 = vld [vmem:[%s2131 + $0x60] sm:$0xff]
          %v5155 = vld [vmem:[%s2131 + $0x68] sm:$0xff]
          %v5156 = vld [vmem:[%s2131 + $0x70] sm:$0xff]
          %v5157 = vld [vmem:[%s2131 + $0x78] sm:$0xff]
          %v5158 = vrcp.pop %v5142
          %v5159 = vmul.f32 1.0, %v5158
          %v5160 = vrcp.pop %v5143
          %v5161 = vmul.f32 1.0, %v5160
          %v5162 = vrcp.pop %v5144
          %v5163 = vmul.f32 1.0, %v5162
          %v5164 = vrcp.pop %v5145
          %v5165 = vmul.f32 1.0, %v5164
          %v5166 = vrcp.pop %v5146
          %v5167 = vmul.f32 1.0, %v5166
          %v5168 = vrcp.pop %v5147
          %v5169 = vmul.f32 1.0, %v5168
          %v5170 = vrcp.pop %v5148
          %v5171 = vmul.f32 1.0, %v5170
          %v5172 = vrcp.pop %v5149
          %v5173 = vmul.f32 1.0, %v5172
          %v5174 = vrcp.pop %v5150
          %v5175 = vmul.f32 1.0, %v5174
          %v5176 = vrcp.pop %v5151
          %v5177 = vmul.f32 1.0, %v5176
          %v5178 = vrcp.pop %v5152
          %v5179 = vmul.f32 1.0, %v5178
          %v5180 = vrcp.pop %v5153
          %v5181 = vmul.f32 1.0, %v5180
          %v5182 = vrcp.pop %v5154
          %v5183 = vmul.f32 1.0, %v5182
          %v5184 = vrcp.pop %v5155
          %v5185 = vmul.f32 1.0, %v5184
          %v5186 = vrcp.pop %v5156
          %v5187 = vmul.f32 1.0, %v5186
          %v5188 = vrcp.pop %v5157
          %v5189 = vmul.f32 1.0, %v5188
          %5191 = vset.pattern.permute.xlu0 0
          %5192 = vperm.xlu0 %5191, %v5159
          %v5193 = vpop.permute.xlu0 %5192
          %5196 = vset.pattern.permute.xlu0 0
          %5197 = vperm.xlu0 %5196, %v5161
          %v5198 = vpop.permute.xlu0 %5197
          %5201 = vset.pattern.permute.xlu0 0
          %5202 = vperm.xlu0 %5201, %v5163
          %v5203 = vpop.permute.xlu0 %5202
          %5206 = vset.pattern.permute.xlu0 0
          %5207 = vperm.xlu0 %5206, %v5165
          %v5208 = vpop.permute.xlu0 %5207
          %5211 = vset.pattern.permute.xlu0 0
          %5212 = vperm.xlu0 %5211, %v5167
          %v5213 = vpop.permute.xlu0 %5212
          %5216 = vset.pattern.permute.xlu0 0
          %5217 = vperm.xlu0 %5216, %v5169
          %v5218 = vpop.permute.xlu0 %5217
          %5221 = vset.pattern.permute.xlu0 0
          %5222 = vperm.xlu0 %5221, %v5171
          %v5223 = vpop.permute.xlu0 %5222
          %5226 = vset.pattern.permute.xlu0 0
          %5227 = vperm.xlu0 %5226, %v5173
          %v5228 = vpop.permute.xlu0 %5227
          %5231 = vset.pattern.permute.xlu0 0
          %5232 = vperm.xlu0 %5231, %v5175
          %v5233 = vpop.permute.xlu0 %5232
          %5236 = vset.pattern.permute.xlu0 0
          %5237 = vperm.xlu0 %5236, %v5177
          %v5238 = vpop.permute.xlu0 %5237
          %5241 = vset.pattern.permute.xlu0 0
          %5242 = vperm.xlu0 %5241, %v5179
          %v5243 = vpop.permute.xlu0 %5242
          %5246 = vset.pattern.permute.xlu0 0
          %5247 = vperm.xlu0 %5246, %v5181
          %v5248 = vpop.permute.xlu0 %5247
          %5251 = vset.pattern.permute.xlu0 0
          %5252 = vperm.xlu0 %5251, %v5183
          %v5253 = vpop.permute.xlu0 %5252
          %5256 = vset.pattern.permute.xlu0 0
          %5257 = vperm.xlu0 %5256, %v5185
          %v5258 = vpop.permute.xlu0 %5257
          %5261 = vset.pattern.permute.xlu0 0
          %5262 = vperm.xlu0 %5261, %v5187
          %v5263 = vpop.permute.xlu0 %5262
          %5266 = vset.pattern.permute.xlu0 0
          %5267 = vperm.xlu0 %5266, %v5189
          %v5268 = vpop.permute.xlu0 %5267
          %v5270 = vmul.f32 %v5030, %v5193
          %v5271 = vmul.f32 %v5031, %v5198
          %v5272 = vmul.f32 %v5032, %v5203
          %v5273 = vmul.f32 %v5033, %v5208
          %v5274 = vmul.f32 %v5034, %v5213
          %v5275 = vmul.f32 %v5035, %v5218
          %v5276 = vmul.f32 %v5036, %v5223
          %v5277 = vmul.f32 %v5037, %v5228
          %v5278 = vmul.f32 %v5038, %v5233
          %v5279 = vmul.f32 %v5039, %v5238
          %v5280 = vmul.f32 %v5040, %v5243
          %v5281 = vmul.f32 %v5041, %v5248
          %v5282 = vmul.f32 %v5042, %v5253
          %v5283 = vmul.f32 %v5043, %v5258
          %v5284 = vmul.f32 %v5044, %v5263
          %v5285 = vmul.f32 %v5045, %v5268
          %v5286 = vld [vmem:[%s3289] sm:$0xff]
          %v5287 = vld [vmem:[%s3289 + $0x8] sm:$0xff]
          %v5288 = vld [vmem:[%s3289 + $0x10] sm:$0xff]
          %v5289 = vld [vmem:[%s3289 + $0x18] sm:$0xff]
          %v5290 = vld [vmem:[%s3289 + $0x20] sm:$0xff]
          %v5291 = vld [vmem:[%s3289 + $0x28] sm:$0xff]
          %v5292 = vld [vmem:[%s3289 + $0x30] sm:$0xff]
          %v5293 = vld [vmem:[%s3289 + $0x38] sm:$0xff]
          %v5294 = vld [vmem:[%s3289 + $0x40] sm:$0xff]
          %v5295 = vld [vmem:[%s3289 + $0x48] sm:$0xff]
          %v5296 = vld [vmem:[%s3289 + $0x50] sm:$0xff]
          %v5297 = vld [vmem:[%s3289 + $0x58] sm:$0xff]
          %v5298 = vld [vmem:[%s3289 + $0x60] sm:$0xff]
          %v5299 = vld [vmem:[%s3289 + $0x68] sm:$0xff]
          %v5300 = vld [vmem:[%s3289 + $0x70] sm:$0xff]
          %v5301 = vld [vmem:[%s3289 + $0x78] sm:$0xff]
          %v5302 = vrcp.pop %v5286
          %v5303 = vmul.f32 1.0, %v5302
          %v5304 = vrcp.pop %v5287
          %v5305 = vmul.f32 1.0, %v5304
          %v5306 = vrcp.pop %v5288
          %v5307 = vmul.f32 1.0, %v5306
          %v5308 = vrcp.pop %v5289
          %v5309 = vmul.f32 1.0, %v5308
          %v5310 = vrcp.pop %v5290
          %v5311 = vmul.f32 1.0, %v5310
          %v5312 = vrcp.pop %v5291
          %v5313 = vmul.f32 1.0, %v5312
          %v5314 = vrcp.pop %v5292
          %v5315 = vmul.f32 1.0, %v5314
          %v5316 = vrcp.pop %v5293
          %v5317 = vmul.f32 1.0, %v5316
          %v5318 = vrcp.pop %v5294
          %v5319 = vmul.f32 1.0, %v5318
          %v5320 = vrcp.pop %v5295
          %v5321 = vmul.f32 1.0, %v5320
          %v5322 = vrcp.pop %v5296
          %v5323 = vmul.f32 1.0, %v5322
          %v5324 = vrcp.pop %v5297
          %v5325 = vmul.f32 1.0, %v5324
          %v5326 = vrcp.pop %v5298
          %v5327 = vmul.f32 1.0, %v5326
          %v5328 = vrcp.pop %v5299
          %v5329 = vmul.f32 1.0, %v5328
          %v5330 = vrcp.pop %v5300
          %v5331 = vmul.f32 1.0, %v5330
          %v5332 = vrcp.pop %v5301
          %v5333 = vmul.f32 1.0, %v5332
          %5335 = vset.pattern.permute.xlu0 0
          %5336 = vperm.xlu0 %5335, %v5303
          %v5337 = vpop.permute.xlu0 %5336
          %5340 = vset.pattern.permute.xlu0 0
          %5341 = vperm.xlu0 %5340, %v5305
          %v5342 = vpop.permute.xlu0 %5341
          %5345 = vset.pattern.permute.xlu0 0
          %5346 = vperm.xlu0 %5345, %v5307
          %v5347 = vpop.permute.xlu0 %5346
          %5350 = vset.pattern.permute.xlu0 0
          %5351 = vperm.xlu0 %5350, %v5309
          %v5352 = vpop.permute.xlu0 %5351
          %5355 = vset.pattern.permute.xlu0 0
          %5356 = vperm.xlu0 %5355, %v5311
          %v5357 = vpop.permute.xlu0 %5356
          %5360 = vset.pattern.permute.xlu0 0
          %5361 = vperm.xlu0 %5360, %v5313
          %v5362 = vpop.permute.xlu0 %5361
          %5365 = vset.pattern.permute.xlu0 0
          %5366 = vperm.xlu0 %5365, %v5315
          %v5367 = vpop.permute.xlu0 %5366
          %5370 = vset.pattern.permute.xlu0 0
          %5371 = vperm.xlu0 %5370, %v5317
          %v5372 = vpop.permute.xlu0 %5371
          %5375 = vset.pattern.permute.xlu0 0
          %5376 = vperm.xlu0 %5375, %v5319
          %v5377 = vpop.permute.xlu0 %5376
          %5380 = vset.pattern.permute.xlu0 0
          %5381 = vperm.xlu0 %5380, %v5321
          %v5382 = vpop.permute.xlu0 %5381
          %5385 = vset.pattern.permute.xlu0 0
          %5386 = vperm.xlu0 %5385, %v5323
          %v5387 = vpop.permute.xlu0 %5386
          %5390 = vset.pattern.permute.xlu0 0
          %5391 = vperm.xlu0 %5390, %v5325
          %v5392 = vpop.permute.xlu0 %5391
          %5395 = vset.pattern.permute.xlu0 0
          %5396 = vperm.xlu0 %5395, %v5327
          %v5397 = vpop.permute.xlu0 %5396
          %5400 = vset.pattern.permute.xlu0 0
          %5401 = vperm.xlu0 %5400, %v5329
          %v5402 = vpop.permute.xlu0 %5401
          %5405 = vset.pattern.permute.xlu0 0
          %5406 = vperm.xlu0 %5405, %v5331
          %v5407 = vpop.permute.xlu0 %5406
          %5410 = vset.pattern.permute.xlu0 0
          %5411 = vperm.xlu0 %5410, %v5333
          %v5412 = vpop.permute.xlu0 %5411
          %v5414 = vmul.f32 %v5030, %v5337
          %v5415 = vmul.f32 %v5031, %v5342
          %v5416 = vmul.f32 %v5032, %v5347
          %v5417 = vmul.f32 %v5033, %v5352
          %v5418 = vmul.f32 %v5034, %v5357
          %v5419 = vmul.f32 %v5035, %v5362
          %v5420 = vmul.f32 %v5036, %v5367
          %v5421 = vmul.f32 %v5037, %v5372
          %v5422 = vmul.f32 %v5038, %v5377
          %v5423 = vmul.f32 %v5039, %v5382
          %v5424 = vmul.f32 %v5040, %v5387
          %v5425 = vmul.f32 %v5041, %v5392
          %v5426 = vmul.f32 %v5042, %v5397
          %v5427 = vmul.f32 %v5043, %v5402
          %v5428 = vmul.f32 %v5044, %v5407
          %v5429 = vmul.f32 %v5045, %v5412
          %v5430 = vld [vmem:[%s4447] sm:$0xff]
          %v5431 = vld [vmem:[%s4447 + $0x8] sm:$0xff]
          %v5432 = vld [vmem:[%s4447 + $0x10] sm:$0xff]
          %v5433 = vld [vmem:[%s4447 + $0x18] sm:$0xff]
          %v5434 = vld [vmem:[%s4447 + $0x20] sm:$0xff]
          %v5435 = vld [vmem:[%s4447 + $0x28] sm:$0xff]
          %v5436 = vld [vmem:[%s4447 + $0x30] sm:$0xff]
          %v5437 = vld [vmem:[%s4447 + $0x38] sm:$0xff]
          %v5438 = vld [vmem:[%s4447 + $0x40] sm:$0xff]
          %v5439 = vld [vmem:[%s4447 + $0x48] sm:$0xff]
          %v5440 = vld [vmem:[%s4447 + $0x50] sm:$0xff]
          %v5441 = vld [vmem:[%s4447 + $0x58] sm:$0xff]
          %v5442 = vld [vmem:[%s4447 + $0x60] sm:$0xff]
          %v5443 = vld [vmem:[%s4447 + $0x68] sm:$0xff]
          %v5444 = vld [vmem:[%s4447 + $0x70] sm:$0xff]
          %v5445 = vld [vmem:[%s4447 + $0x78] sm:$0xff]
          %v5446 = vrcp.pop %v5430
          %v5447 = vmul.f32 1.0, %v5446
          %v5448 = vrcp.pop %v5431
          %v5449 = vmul.f32 1.0, %v5448
          %v5450 = vrcp.pop %v5432
          %v5451 = vmul.f32 1.0, %v5450
          %v5452 = vrcp.pop %v5433
          %v5453 = vmul.f32 1.0, %v5452
          %v5454 = vrcp.pop %v5434
          %v5455 = vmul.f32 1.0, %v5454
          %v5456 = vrcp.pop %v5435
          %v5457 = vmul.f32 1.0, %v5456
          %v5458 = vrcp.pop %v5436
          %v5459 = vmul.f32 1.0, %v5458
          %v5460 = vrcp.pop %v5437
          %v5461 = vmul.f32 1.0, %v5460
          %v5462 = vrcp.pop %v5438
          %v5463 = vmul.f32 1.0, %v5462
          %v5464 = vrcp.pop %v5439
          %v5465 = vmul.f32 1.0, %v5464
          %v5466 = vrcp.pop %v5440
          %v5467 = vmul.f32 1.0, %v5466
          %v5468 = vrcp.pop %v5441
          %v5469 = vmul.f32 1.0, %v5468
          %v5470 = vrcp.pop %v5442
          %v5471 = vmul.f32 1.0, %v5470
          %v5472 = vrcp.pop %v5443
          %v5473 = vmul.f32 1.0, %v5472
          %v5474 = vrcp.pop %v5444
          %v5475 = vmul.f32 1.0, %v5474
          %v5476 = vrcp.pop %v5445
          %v5477 = vmul.f32 1.0, %v5476
          %5479 = vset.pattern.permute.xlu0 0
          %5480 = vperm.xlu0 %5479, %v5447
          %v5481 = vpop.permute.xlu0 %5480
          %5484 = vset.pattern.permute.xlu0 0
          %5485 = vperm.xlu0 %5484, %v5449
          %v5486 = vpop.permute.xlu0 %5485
          %5489 = vset.pattern.permute.xlu0 0
          %5490 = vperm.xlu0 %5489, %v5451
          %v5491 = vpop.permute.xlu0 %5490
          %5494 = vset.pattern.permute.xlu0 0
          %5495 = vperm.xlu0 %5494, %v5453
          %v5496 = vpop.permute.xlu0 %5495
          %5499 = vset.pattern.permute.xlu0 0
          %5500 = vperm.xlu0 %5499, %v5455
          %v5501 = vpop.permute.xlu0 %5500
          %5504 = vset.pattern.permute.xlu0 0
          %5505 = vperm.xlu0 %5504, %v5457
          %v5506 = vpop.permute.xlu0 %5505
          %5509 = vset.pattern.permute.xlu0 0
          %5510 = vperm.xlu0 %5509, %v5459
          %v5511 = vpop.permute.xlu0 %5510
          %5514 = vset.pattern.permute.xlu0 0
          %5515 = vperm.xlu0 %5514, %v5461
          %v5516 = vpop.permute.xlu0 %5515
          %5519 = vset.pattern.permute.xlu0 0
          %5520 = vperm.xlu0 %5519, %v5463
          %v5521 = vpop.permute.xlu0 %5520
          %5524 = vset.pattern.permute.xlu0 0
          %5525 = vperm.xlu0 %5524, %v5465
          %v5526 = vpop.permute.xlu0 %5525
          %5529 = vset.pattern.permute.xlu0 0
          %5530 = vperm.xlu0 %5529, %v5467
          %v5531 = vpop.permute.xlu0 %5530
          %5534 = vset.pattern.permute.xlu0 0
          %5535 = vperm.xlu0 %5534, %v5469
          %v5536 = vpop.permute.xlu0 %5535
          %5539 = vset.pattern.permute.xlu0 0
          %5540 = vperm.xlu0 %5539, %v5471
          %v5541 = vpop.permute.xlu0 %5540
          %5544 = vset.pattern.permute.xlu0 0
          %5545 = vperm.xlu0 %5544, %v5473
          %v5546 = vpop.permute.xlu0 %5545
          %5549 = vset.pattern.permute.xlu0 0
          %5550 = vperm.xlu0 %5549, %v5475
          %v5551 = vpop.permute.xlu0 %5550
          %5554 = vset.pattern.permute.xlu0 0
          %5555 = vperm.xlu0 %5554, %v5477
          %v5556 = vpop.permute.xlu0 %5555
          %v5558 = vmul.f32 %v5030, %v5481
          %v5559 = vmul.f32 %v5031, %v5486
          %v5560 = vmul.f32 %v5032, %v5491
          %v5561 = vmul.f32 %v5033, %v5496
          %v5562 = vmul.f32 %v5034, %v5501
          %v5563 = vmul.f32 %v5035, %v5506
          %v5564 = vmul.f32 %v5036, %v5511
          %v5565 = vmul.f32 %v5037, %v5516
          %v5566 = vmul.f32 %v5038, %v5521
          %v5567 = vmul.f32 %v5039, %v5526
          %v5568 = vmul.f32 %v5040, %v5531
          %v5569 = vmul.f32 %v5041, %v5536
          %v5570 = vmul.f32 %v5042, %v5541
          %v5571 = vmul.f32 %v5043, %v5546
          %v5572 = vmul.f32 %v5044, %v5551
          %v5573 = vmul.f32 %v5045, %v5556
          %v5574 = vsel %vm620, %v5126, %v5270
          %v5575 = vsel %vm620, %v5127, %v5271
          %v5576 = vsel %vm620, %v5128, %v5272
          %v5577 = vsel %vm620, %v5129, %v5273
          %v5578 = vsel %vm620, %v5130, %v5274
          %v5579 = vsel %vm620, %v5131, %v5275
          %v5580 = vsel %vm620, %v5132, %v5276
          %v5581 = vsel %vm620, %v5133, %v5277
          %v5582 = vsel %vm620, %v5134, %v5278
          %v5583 = vsel %vm620, %v5135, %v5279
          %v5584 = vsel %vm620, %v5136, %v5280
          %v5585 = vsel %vm620, %v5137, %v5281
          %v5586 = vsel %vm620, %v5138, %v5282
          %v5587 = vsel %vm620, %v5139, %v5283
          %v5588 = vsel %vm620, %v5140, %v5284
          %v5589 = vsel %vm620, %v5141, %v5285
          %vm5590 = vcmask 130048
          %v5591 = vsel %vm5590, %v5574, %v5414
          %v5592 = vsel %vm5590, %v5575, %v5415
          %v5593 = vsel %vm5590, %v5576, %v5416
          %v5594 = vsel %vm5590, %v5577, %v5417
          %v5595 = vsel %vm5590, %v5578, %v5418
          %v5596 = vsel %vm5590, %v5579, %v5419
          %v5597 = vsel %vm5590, %v5580, %v5420
          %v5598 = vsel %vm5590, %v5581, %v5421
          %v5599 = vsel %vm5590, %v5582, %v5422
          %v5600 = vsel %vm5590, %v5583, %v5423
          %v5601 = vsel %vm5590, %v5584, %v5424
          %v5602 = vsel %vm5590, %v5585, %v5425
          %v5603 = vsel %vm5590, %v5586, %v5426
          %v5604 = vsel %vm5590, %v5587, %v5427
          %v5605 = vsel %vm5590, %v5588, %v5428
          %v5606 = vsel %vm5590, %v5589, %v5429
          %vm5607 = vcmask 195584
          %v5608 = vsel %vm5607, %v5591, %v5558
          %v5609 = vsel %vm5607, %v5592, %v5559
          %v5610 = vsel %vm5607, %v5593, %v5560
          %v5611 = vsel %vm5607, %v5594, %v5561
          %v5612 = vsel %vm5607, %v5595, %v5562
          %v5613 = vsel %vm5607, %v5596, %v5563
          %v5614 = vsel %vm5607, %v5597, %v5564
          %v5615 = vsel %vm5607, %v5598, %v5565
          %v5616 = vsel %vm5607, %v5599, %v5566
          %v5617 = vsel %vm5607, %v5600, %v5567
          %v5618 = vsel %vm5607, %v5601, %v5568
          %v5619 = vsel %vm5607, %v5602, %v5569
          %v5620 = vsel %vm5607, %v5603, %v5570
          %v5621 = vsel %vm5607, %v5604, %v5571
          %v5622 = vsel %vm5607, %v5605, %v5572
          %v5623 = vsel %vm5607, %v5606, %v5573
          %vm5624 = vcmask 261120
          %5625 = vst.msk [vmem:[%s388] sm:$0xff] %vm5624, %v5608
          %5626 = vst.msk [vmem:[%s388 + $0x8] sm:$0xff] %vm5624, %v5609
          %5627 = vst.msk [vmem:[%s388 + $0x10] sm:$0xff] %vm5624, %v5610
          %5628 = vst.msk [vmem:[%s388 + $0x18] sm:$0xff] %vm5624, %v5611
          %5629 = vst.msk [vmem:[%s388 + $0x20] sm:$0xff] %vm5624, %v5612
          %5630 = vst.msk [vmem:[%s388 + $0x28] sm:$0xff] %vm5624, %v5613
          %5631 = vst.msk [vmem:[%s388 + $0x30] sm:$0xff] %vm5624, %v5614
          %5632 = vst.msk [vmem:[%s388 + $0x38] sm:$0xff] %vm5624, %v5615
          %5633 = vst.msk [vmem:[%s388 + $0x40] sm:$0xff] %vm5624, %v5616
          %5634 = vst.msk [vmem:[%s388 + $0x48] sm:$0xff] %vm5624, %v5617
          %5635 = vst.msk [vmem:[%s388 + $0x50] sm:$0xff] %vm5624, %v5618
          %5636 = vst.msk [vmem:[%s388 + $0x58] sm:$0xff] %vm5624, %v5619
          %5637 = vst.msk [vmem:[%s388 + $0x60] sm:$0xff] %vm5624, %v5620
          %5638 = vst.msk [vmem:[%s388 + $0x68] sm:$0xff] %vm5624, %v5621
          %5639 = vst.msk [vmem:[%s388 + $0x70] sm:$0xff] %vm5624, %v5622
          %5640 = vst.msk [vmem:[%s388 + $0x78] sm:$0xff] %vm5624, %v5623
        $region48: #{tpu_custom_call.1} parent=35 // pred_fallthru
          _
        %s5641 = smul.u32 16, %s24
        %p5642 = scmp.lt.s32.totalorder %s23, 1
        %s5643 = scalar_select %p5642, %s23, 1
        %p5644 = scmp.lt.s32.totalorder %s5641, 31
        %s5645 = scalar_select %p5644, %s5641, 31
        %s5646 = smul.addr %s5643, 32
        %s5647 = sadd.s32 %s5645, %s5646
        %s5648 = smul.addr %s5647, 8
        %s5649 = scalar_lea.vmem %s4, %s5648
        // Predicated region
        $region49: #{tpu_custom_call.1} parent=35 // pred_check
          %p5650 = pneg %p171
        $region50: #{tpu_custom_call.1} parent=35 // pred_check_branch
          %5652 = sbr.rel (%p5650) target = $region52
        $region51: #{tpu_custom_call.1} parent=35 // pred_region
          %s5653 = smul.u32 16, %s24
        $region52: #{tpu_custom_call.1} parent=35 // pred_fallthru
          _
      $region36: #{tpu_custom_call.1} parent=5 // pred_fallthru
        _
      %p5654 = scmp.le.s32.totalorder 2, %s13
      // Predicated region
      $region53: #{tpu_custom_call.1} parent=5 // pred_check
        %p5655 = pneg %p5654
      $region54: #{tpu_custom_call.1} parent=5 // pred_check_branch
        %5657 = sbr.rel (%p5655) target = $region56
      $region55: #{tpu_custom_call.1} parent=5 // pred_region
        %s5658 = ssub.s32 %s13, 2
        // Predicated region
        $region57: #{tpu_custom_call.1} parent=55 // pred_check
          %p5659 = pneg %p177
        $region58: #{tpu_custom_call.1} parent=55 // pred_check_branch
          %5661 = sbr.rel (%p5659) target = $region60
        $region59: #{tpu_custom_call.1} parent=55 // pred_region
          %s5662 = smul.u32 16, %s27
          %p5663 = scmp.lt.s32.totalorder %s26, 1
          %s5664 = scalar_select %p5663, %s26, 1
          %p5665 = scmp.lt.s32.totalorder %s5662, 31
          %s5666 = scalar_select %p5665, %s5662, 31
          %s5667 = smul.addr %s5664, 32
          %s5668 = sadd.s32 %s5666, %s5667
          %s5669 = smul.addr %s5668, 8
          %s5670 = scalar_lea.vmem %s4, %s5669
        $region60: #{tpu_custom_call.1} parent=55 // pred_fallthru
          _
      $region56: #{tpu_custom_call.1} parent=5 // pred_fallthru
        _
    $region6: #{tpu_custom_call.1} parent=1 // loop_footer
      %s17 = sadd.s32 1, %s13
    $region7: #{tpu_custom_call.1} parent=1 // loop_footer_branch
      %12 = sbr.rel target = $region3
    $region8: #{tpu_custom_call.1} parent=1 // loop_exit
      _
    %5671 = vsyncpa [#allocation6], 1
    %s5672 = scalar_lea.sflag [#allocation6], 1
    %5673 = vsyncpa %s5672, 1

</llo_original>
